<compile_context>
chip_gen: v7x
topology: tpu7x:2x2x1
jax: 0.10.0
libtpu: 0.0.40
codegen_flags: <defaults>
</compile_context>

<pallas_src>
import math
import functools

import jax
import jax.numpy as jnp
from jax.experimental import pallas as pl
from jax.experimental.pallas import tpu as pltpu


def _layernorm(v, w, b, eps=1e-5):
    mu = jnp.mean(v, axis=-1, keepdims=True)
    var = jnp.mean((v - mu) ** 2, axis=-1, keepdims=True)
    return (v - mu) * jax.lax.rsqrt(var + eps) * w + b


def _erf_approx(z):
    # Abramowitz & Stegun 7.1.26, max abs error ~1.5e-7.
    # Uses only exp / basic VALU ops (lax.erf may not lower in Mosaic).
    a1, a2, a3, a4, a5 = (0.254829592, -0.284496736, 1.421413741,
                          -1.453152027, 1.061405429)
    p = 0.3275911
    az = jnp.abs(z)
    t = 1.0 / (1.0 + p * az)
    poly = ((((a5 * t + a4) * t + a3) * t + a2) * t + a1) * t
    e = 1.0 - poly * jnp.exp(-az * az)
    return jnp.where(z < 0, -e, e)


def _gelu_exact(v):
    # Exact (erf-based) GELU, matching torch.nn.GELU() default semantics.
    # (Tanh-approx would use the EUP but changes numerics; keep exact.)
    return 0.5 * v * (1.0 + _erf_approx(v * (1.0 / math.sqrt(2.0))))


def fusion_block_kernel(num_heads,
                        x_ref,
                        ln1w_ref, ln1b_ref,
                        wqkv_ref, bqkv_ref,
                        wo_ref, bo_ref,
                        ln2w_ref, ln2b_ref,
                        w1_ref, b1_ref, w2_ref, b2_ref,
                        y_ref, aw_ref):
    bt, L, D = x_ref.shape
    hd = D // num_heads
    rows = bt * L
    bf16 = jnp.bfloat16

    x = x_ref[...].reshape(rows, D)                 # fold batch into the M dim

    # --- ln1 + fused QKV projection (one wide bf16 MXU pass).
    #     The 1/sqrt(hd) scale is pre-folded into the q columns of wqkv/bqkv.
    xn = _layernorm(x, ln1w_ref[0], ln1b_ref[0])
    qkv = jnp.dot(xn.astype(bf16), wqkv_ref[...],
                  preferred_element_type=jnp.float32) + bqkv_ref[0]
    q = qkv[:, 0:D].reshape(bt, L, D)
    k = qkv[:, D:2 * D].reshape(bt, L, D)
    v = qkv[:, 2 * D:3 * D].reshape(bt, L, D)

    # --- multi-head attention, batched over the bt block via dot_general
    #     batch dims; output projection folded into the head loop (no per-head
    #     slab stores, no concatenate).  Exact softmax divide so the returned
    #     attention weights rows sum to 1 (PyTorch parity).
    aw_sum = jnp.zeros((bt, L, L), jnp.float32)
    attn = jnp.zeros((rows, D), jnp.float32)
    for h in range(num_heads):                      # small head loop, unrolled
        c0 = h * hd
        qh = q[:, :, c0:c0 + hd].astype(bf16)
        kh = k[:, :, c0:c0 + hd].astype(bf16)
        vh = v[:, :, c0:c0 + hd].astype(bf16)
        s = jax.lax.dot_general(qh, kh, (((2,), (2,)), ((0,), (0,))),
                                preferred_element_type=jnp.float32)   # (bt,L,L)
        s = s - jnp.max(s, axis=-1, keepdims=True)
        e = jnp.exp(s)
        p = e / jnp.sum(e, axis=-1, keepdims=True)
        aw_sum = aw_sum + p
        oh = jax.lax.dot_general(p.astype(bf16), vh,
                                 (((2,), (1,)), ((0,), (0,))),
                                 preferred_element_type=jnp.float32)  # (bt,L,hd)
        attn = attn + jnp.dot(oh.reshape(rows, hd).astype(bf16),
                              wo_ref[c0:c0 + hd, :],
                              preferred_element_type=jnp.float32)
    aw_ref[...] = aw_sum * (1.0 / num_heads)        # head-averaged (torch default)
    attn = attn + bo_ref[0]

    # --- residual 1, ln2, feed-forward (D -> 4D -> D, exact GELU), residual 2 ---
    x1 = x + attn
    xn2 = _layernorm(x1, ln2w_ref[0], ln2b_ref[0])
    h1 = jnp.dot(xn2.astype(bf16), w1_ref[...],
                 preferred_element_type=jnp.float32) + b1_ref[0]
    h1 = _gelu_exact(h1)
    ff = jnp.dot(h1.astype(bf16), w2_ref[...],
                 preferred_element_type=jnp.float32) + b2_ref[0]

    y_ref[...] = (x1 + ff).reshape(bt, L, D)


PACKED_ORDER = ("ln1w", "ln1b", "wqkv", "bqkv", "wo", "bo",
                "ln2w", "ln2b", "w1", "b1", "w2", "b2")


def _pack_params(params, num_heads):
    d = params["wq"].shape[0]
    scale = 1.0 / math.sqrt(d // num_heads)
    bf16 = jnp.bfloat16
    p = dict(params)
    # Fold the query scale into the q columns; pack QKV into one (D, 3D) weight.
    p["wqkv"] = jnp.concatenate(
        [params["wq"] * scale, params["wk"], params["wv"]], axis=1).astype(bf16)
    p["bqkv"] = jnp.concatenate(
        [params["bq"] * scale, params["bk"], params["bv"]], axis=1).astype(jnp.float32)
    p["wo"] = params["wo"].astype(bf16)
    p["w1"] = params["w1"].astype(bf16)
    p["w2"] = params["w2"].astype(bf16)
    return [p[k] for k in PACKED_ORDER]


def _pick_block_batch(B, L, vmem_cap):
    # Bigger blocks on 128-MiB-VMEM parts (v5e/v6e), tighter on v7x (64 MiB).
    target_rows = 512 if vmem_cap >= (96 << 20) else 256
    bt = max(1, min(B, target_rows // max(L, 1)))
    if B >= 2:
        # Keep >= 2 grid steps so both v7x TensorCores get "parallel" work.
        bt = min(bt, (B + 1) // 2)
    # TODO(synk): at B == 1 the grid has a single step; a second "parallel"
    # axis (e.g. over L sub-blocks of attention) would be needed to feed the
    # second v7x TensorCore.
    return max(1, bt)


def fusion_block(x, params, num_heads, block_batch=None):
    B, L, D = x.shape
    assert D % num_heads == 0
    weights = _pack_params(params, num_heads)

    # Generation-aware VMEM capacity (conservative fallback fits every gen).
    try:
        cap = int(getattr(pltpu.get_tpu_info(), "vmem_capacity_bytes", 64 << 20))
    except Exception:
        cap = 64 << 20

    bt = block_batch if block_batch is not None else _pick_block_batch(B, L, cap)
    nb = -(-B // bt)                      # ceil(B / bt)
    Bp = nb * bt
    if Bp != B:
        x = jnp.pad(x, ((0, Bp - B), (0, 0), (0, 0)))   # padded rows discarded

    # VMEM budget: weights (x2 in case the single-buffer request is not
    # honored), double-buffered I/O blocks, plus in-kernel intermediates
    # (qkv, q/k/v, attn, h1, softmax temporaries, ...).
    rows = bt * L
    weight_bytes = sum(int(w.size) * w.dtype.itemsize for w in weights)
    io_bytes = 2 * 4 * (2 * bt * L * D + bt * L * L)          # x, y, aw blocks
    act_bytes = 4 * rows * 16 * D + 4 * 6 * bt * L * L        # activations + softmax tmps
    need = 2 * weight_bytes + io_bytes + act_bytes + (2 << 20)
    upper = min(cap - (8 << 20), 100 << 20)                   # ~56 MiB v7x, ~100 MiB v5e/v6e
    vmem_limit = int(min(max(need, 24 << 20), upper))

    kernel = functools.partial(fusion_block_kernel, num_heads)
    x_spec = pl.BlockSpec((bt, L, D), lambda i: (i, 0, 0))
    out_specs = (pl.BlockSpec((bt, L, D), lambda i: (i, 0, 0)),
                 pl.BlockSpec((bt, L, L), lambda i: (i, 0, 0)))
    out_shape = (jax.ShapeDtypeStruct((Bp, L, D), jnp.float32),
                 jax.ShapeDtypeStruct((Bp, L, L), jnp.float32))
    cparams = pltpu.CompilerParams(dimension_semantics=("parallel",),
                                   vmem_limit_bytes=vmem_limit)

    def run(single_buffer_weights):
        def wspec(a):
            nd = a.ndim
            idx = lambda i, _nd=nd: (0,) * _nd
            if single_buffer_weights:
                # Constant index_map => resident weights; one buffer is enough.
                return pl.BlockSpec(a.shape, idx, pipeline_mode=pl.Buffered(1))
            return pl.BlockSpec(a.shape, idx)

        out = pl.pallas_call(
            kernel,
            grid=(nb,),
            in_specs=[x_spec] + [wspec(w) for w in weights],
            out_specs=out_specs,
            out_shape=out_shape,
            compiler_params=cparams,
        )(x, *weights)
        return jax.block_until_ready(out)

    try:
        y, aw = run(True)
    except Exception:
        # pipeline_mode=pl.Buffered(1) not supported by this jax/libtpu:
        # fall back to default double-buffered weight specs (same math).
        y, aw = run(False)
    return y[:B], aw[:B]


def fusion_block_ref(x, params, num_heads):
    """Pure-JAX f32 reference with exact erf GELU (for verification)."""
    B, L, D = x.shape
    hd = D // num_heads
    p = params
    xn = _layernorm(x, p["ln1w"][0], p["ln1b"][0])
    q = xn @ p["wq"] + p["bq"][0]
    k = xn @ p["wk"] + p["bk"][0]
    v = xn @ p["wv"] + p["bv"][0]
    q = q.reshape(B, L, num_heads, hd).transpose(0, 2, 1, 3) / math.sqrt(hd)
    k = k.reshape(B, L, num_heads, hd).transpose(0, 2, 1, 3)
    v = v.reshape(B, L, num_heads, hd).transpose(0, 2, 1, 3)
    s = jnp.einsum("bhqd,bhkd->bhqk", q, k)
    pattn = jax.nn.softmax(s, axis=-1)
    o = jnp.einsum("bhqk,bhkd->bhqd", pattn, v)
    o = o.transpose(0, 2, 1, 3).reshape(B, L, D)
    attn = o @ p["wo"] + p["bo"][0]
    x1 = x + attn
    xn2 = _layernorm(x1, p["ln2w"][0], p["ln2b"][0])
    g = 0.5 * (xn2 @ p["w1"] + p["b1"][0])
    h = (xn2 @ p["w1"] + p["b1"][0])
    gelu = 0.5 * h * (1.0 + jax.lax.erf(h * (1.0 / math.sqrt(2.0))))
    ff = gelu @ p["w2"] + p["b2"][0]
    return x1 + ff, jnp.mean(pattn, axis=1)


def init_params(key, d):
    ks = jax.random.split(key, 10)
    s = 0.02
    f32 = jnp.float32
    return {
        "ln1w": jnp.ones((1, d), f32),
        "ln1b": jnp.zeros((1, d), f32),
        "wq": s * jax.random.normal(ks[0], (d, d), f32),
        "wk": s * jax.random.normal(ks[1], (d, d), f32),
        "wv": s * jax.random.normal(ks[2], (d, d), f32),
        "bq": s * jax.random.normal(ks[3], (1, d), f32),
        "bk": s * jax.random.normal(ks[4], (1, d), f32),
        "bv": s * jax.random.normal(ks[5], (1, d), f32),
        "wo": s * jax.random.normal(ks[6], (d, d), f32),
        "bo": jnp.zeros((1, d), f32),
        "ln2w": jnp.ones((1, d), f32),
        "ln2b": jnp.zeros((1, d), f32),
        "w1": s * jax.random.normal(ks[7], (d, 4 * d), f32),
        "b1": s * jax.random.normal(ks[8], (1, 4 * d), f32),
        "w2": s * jax.random.normal(ks[9], (4 * d, d), f32),
        "b2": jnp.zeros((1, d), f32),
    }


if __name__ == "__main__":
    B, L, D, H = 2, 8, 32, 4            # small shapes: d=32 divisible by h=4
    key = jax.random.PRNGKey(0)
    kx, kp = jax.random.split(key)
    x = jax.random.normal(kx, (B, L, D), jnp.float32)
    params = init_params(kp, D)

    y, aw = fusion_block(x, params, H)
    jax.block_until_ready((y, aw))

    y_ref, aw_ref = fusion_block_ref(x, params, H)
    assert y.shape == (B, L, D) and aw.shape == (B, L, L)
    # bf16 matmul operands (f32 accumulation) => slightly looser tolerance.
    assert jnp.allclose(y, y_ref, atol=2e-3, rtol=2e-3)
    assert jnp.allclose(aw, aw_ref, atol=2e-3, rtol=2e-3)
    # attention weights rows sum to ~1 (exact softmax divide in-kernel)
    assert jnp.allclose(jnp.sum(aw, axis=-1), jnp.ones((B, L)), atol=1e-3)

    print("KERNEL_OK")
</pallas_src>

<mosaic_0001>
module attributes {stable_mosaic.version = 11 : i64} {
  func.func @fusion_block_kernel(%arg0: i32, %arg1: memref<1x8x32xf32, #tpu.memory_space<vmem>>, %arg2: memref<1x32xf32, #tpu.memory_space<vmem>>, %arg3: memref<1x32xf32, #tpu.memory_space<vmem>>, %arg4: memref<32x96xbf16, #tpu.memory_space<vmem>>, %arg5: memref<1x96xf32, #tpu.memory_space<vmem>>, %arg6: memref<32x32xbf16, #tpu.memory_space<vmem>>, %arg7: memref<1x32xf32, #tpu.memory_space<vmem>>, %arg8: memref<1x32xf32, #tpu.memory_space<vmem>>, %arg9: memref<1x32xf32, #tpu.memory_space<vmem>>, %arg10: memref<32x128xbf16, #tpu.memory_space<vmem>>, %arg11: memref<1x128xf32, #tpu.memory_space<vmem>>, %arg12: memref<128x32xbf16, #tpu.memory_space<vmem>>, %arg13: memref<1x32xf32, #tpu.memory_space<vmem>>, %arg14: memref<1x8x32xf32, #tpu.memory_space<vmem>>, %arg15: memref<1x8x8xf32, #tpu.memory_space<vmem>>) attributes {dimension_semantics = [#tpu.dimension_semantics<parallel>], iteration_bounds = array<i64: 2>, scalar_prefetch = 0 : i64, scratch_operands = 0 : i64, tpu.core_type = #tpu.core_type<tc>, window_params = [{transform_indices = @transform_0, window_bounds = array<i64: 1, 8, 32>}, {pipeline_mode = #tpu.pipeline_mode<synchronous>, transform_indices = @transform_1, window_bounds = array<i64: 1, 32>}, {pipeline_mode = #tpu.pipeline_mode<synchronous>, transform_indices = @transform_2, window_bounds = array<i64: 1, 32>}, {pipeline_mode = #tpu.pipeline_mode<synchronous>, transform_indices = @transform_3, window_bounds = array<i64: 32, 96>}, {pipeline_mode = #tpu.pipeline_mode<synchronous>, transform_indices = @transform_4, window_bounds = array<i64: 1, 96>}, {pipeline_mode = #tpu.pipeline_mode<synchronous>, transform_indices = @transform_5, window_bounds = array<i64: 32, 32>}, {pipeline_mode = #tpu.pipeline_mode<synchronous>, transform_indices = @transform_6, window_bounds = array<i64: 1, 32>}, {pipeline_mode = #tpu.pipeline_mode<synchronous>, transform_indices = @transform_7, window_bounds = array<i64: 1, 32>}, {pipeline_mode = #tpu.pipeline_mode<synchronous>, transform_indices = @transform_8, window_bounds = array<i64: 1, 32>}, {pipeline_mode = #tpu.pipeline_mode<synchronous>, transform_indices = @transform_9, window_bounds = array<i64: 32, 128>}, {pipeline_mode = #tpu.pipeline_mode<synchronous>, transform_indices = @transform_10, window_bounds = array<i64: 1, 128>}, {pipeline_mode = #tpu.pipeline_mode<synchronous>, transform_indices = @transform_11, window_bounds = array<i64: 128, 32>}, {pipeline_mode = #tpu.pipeline_mode<synchronous>, transform_indices = @transform_12, window_bounds = array<i64: 1, 32>}, {transform_indices = @transform_13, window_bounds = array<i64: 1, 8, 32>}, {transform_indices = @transform_14, window_bounds = array<i64: 1, 8, 8>}]} {
    %c0 = arith.constant 0 : index
    %c0_0 = arith.constant 0 : index
    %c0_1 = arith.constant 0 : index
    %0 = vector.load %arg1[%c0, %c0_0, %c0_1] : memref<1x8x32xf32, #tpu.memory_space<vmem>>, vector<1x8x32xf32>
    %1 = vector.shape_cast %0 : vector<1x8x32xf32> to vector<8x32xf32>
    %c0_2 = arith.constant 0 : index
    %c0_3 = arith.constant 0 : index
    %2 = vector.load %arg2[%c0_2, %c0_3] : memref<1x32xf32, #tpu.memory_space<vmem>>, vector<1x32xf32>
    %3 = vector.shape_cast %2 : vector<1x32xf32> to vector<32xf32>
    %c0_4 = arith.constant 0 : index
    %c0_5 = arith.constant 0 : index
    %4 = vector.load %arg3[%c0_4, %c0_5] : memref<1x32xf32, #tpu.memory_space<vmem>>, vector<1x32xf32>
    %5 = vector.shape_cast %4 : vector<1x32xf32> to vector<32xf32>
    %cst = arith.constant dense<0.000000e+00> : vector<8xf32>
    %6 = vector.multi_reduction <add>, %1, %cst [1] : vector<8x32xf32> to vector<8xf32>
    %7 = vector.shape_cast %6 : vector<8xf32> to vector<8x1xf32>
    %cst_6 = arith.constant 3.200000e+01 : f32
    %8 = vector.broadcast %cst_6 : f32 to vector<8x1xf32>
    %9 = arith.divf %7, %8 : vector<8x1xf32>
    %10 = vector.broadcast %9 : vector<8x1xf32> to vector<8x32xf32>
    %11 = arith.subf %1, %10 : vector<8x32xf32>
    %12 = arith.mulf %11, %11 : vector<8x32xf32>
    %cst_7 = arith.constant dense<0.000000e+00> : vector<8xf32>
    %13 = vector.multi_reduction <add>, %12, %cst_7 [1] : vector<8x32xf32> to vector<8xf32>
    %14 = vector.shape_cast %13 : vector<8xf32> to vector<8x1xf32>
    %cst_8 = arith.constant 3.200000e+01 : f32
    %15 = vector.broadcast %cst_8 : f32 to vector<8x1xf32>
    %16 = arith.divf %14, %15 : vector<8x1xf32>
    %17 = vector.broadcast %9 : vector<8x1xf32> to vector<8x32xf32>
    %18 = arith.subf %1, %17 : vector<8x32xf32>
    %cst_9 = arith.constant 9.99999974E-6 : f32
    %19 = vector.broadcast %cst_9 : f32 to vector<8x1xf32>
    %20 = arith.addf %16, %19 : vector<8x1xf32>
    %21 = math.rsqrt %20 : vector<8x1xf32>
    %22 = vector.broadcast %21 : vector<8x1xf32> to vector<8x32xf32>
    %23 = arith.mulf %18, %22 : vector<8x32xf32>
    %24 = vector.shape_cast %3 : vector<32xf32> to vector<1x32xf32>
    %25 = vector.broadcast %24 : vector<1x32xf32> to vector<8x32xf32>
    %26 = arith.mulf %23, %25 : vector<8x32xf32>
    %27 = vector.shape_cast %5 : vector<32xf32> to vector<1x32xf32>
    %28 = vector.broadcast %27 : vector<1x32xf32> to vector<8x32xf32>
    %29 = arith.addf %26, %28 : vector<8x32xf32>
    %30 = arith.truncf %29 : vector<8x32xf32> to vector<8x32xbf16>
    %c0_10 = arith.constant 0 : index
    %c0_11 = arith.constant 0 : index
    %31 = vector.load %arg4[%c0_10, %c0_11] : memref<32x96xbf16, #tpu.memory_space<vmem>>, vector<32x96xbf16>
    %cst_12 = arith.constant dense<0.000000e+00> : vector<8x96xf32>
    %32 = tpu.matmul %30, %31, %cst_12 {dimension_numbers = #tpu.dot_dimension_numbers<[1], [0], [0], [1], [0, 0, 1, 1], [], []>} : vector<8x32xbf16>, vector<32x96xbf16>, vector<8x96xf32> -> vector<8x96xf32>
    %c0_13 = arith.constant 0 : index
    %c0_14 = arith.constant 0 : index
    %33 = vector.load %arg5[%c0_13, %c0_14] : memref<1x96xf32, #tpu.memory_space<vmem>>, vector<1x96xf32>
    %34 = vector.shape_cast %33 : vector<1x96xf32> to vector<96xf32>
    %35 = vector.shape_cast %34 : vector<96xf32> to vector<1x96xf32>
    %36 = vector.broadcast %35 : vector<1x96xf32> to vector<8x96xf32>
    %37 = arith.addf %32, %36 : vector<8x96xf32>
    %38 = vector.extract_strided_slice %37 {offsets = [0, 0], sizes = [8, 32], strides = [1, 1]} : vector<8x96xf32> to vector<8x32xf32>
    %39 = vector.shape_cast %38 : vector<8x32xf32> to vector<1x8x32xf32>
    %40 = vector.extract_strided_slice %37 {offsets = [0, 32], sizes = [8, 32], strides = [1, 1]} : vector<8x96xf32> to vector<8x32xf32>
    %41 = vector.shape_cast %40 : vector<8x32xf32> to vector<1x8x32xf32>
    %42 = vector.extract_strided_slice %37 {offsets = [0, 64], sizes = [8, 32], strides = [1, 1]} : vector<8x96xf32> to vector<8x32xf32>
    %43 = vector.shape_cast %42 : vector<8x32xf32> to vector<1x8x32xf32>
    %cst_15 = arith.constant 0.000000e+00 : f32
    %44 = vector.broadcast %cst_15 : f32 to vector<1x8x8xf32>
    %cst_16 = arith.constant 0.000000e+00 : f32
    %45 = vector.broadcast %cst_16 : f32 to vector<8x32xf32>
    %46 = vector.extract_strided_slice %39 {offsets = [0, 0, 0], sizes = [1, 8, 8], strides = [1, 1, 1]} : vector<1x8x32xf32> to vector<1x8x8xf32>
    %47 = arith.truncf %46 : vector<1x8x8xf32> to vector<1x8x8xbf16>
    %48 = vector.extract_strided_slice %41 {offsets = [0, 0, 0], sizes = [1, 8, 8], strides = [1, 1, 1]} : vector<1x8x32xf32> to vector<1x8x8xf32>
    %49 = arith.truncf %48 : vector<1x8x8xf32> to vector<1x8x8xbf16>
    %50 = vector.extract_strided_slice %43 {offsets = [0, 0, 0], sizes = [1, 8, 8], strides = [1, 1, 1]} : vector<1x8x32xf32> to vector<1x8x8xf32>
    %51 = arith.truncf %50 : vector<1x8x8xf32> to vector<1x8x8xbf16>
    %cst_17 = arith.constant dense<0.000000e+00> : vector<1x8x8xf32>
    %52 = tpu.matmul %47, %49, %cst_17 {dimension_numbers = #tpu.dot_dimension_numbers<[2], [2], [1], [1], [0, 0, 0, 1, 1, 1], [0], [0]>} : vector<1x8x8xbf16>, vector<1x8x8xbf16>, vector<1x8x8xf32> -> vector<1x8x8xf32>
    %cst_18 = arith.constant dense<0xFF800000> : vector<1x8xf32>
    %53 = vector.multi_reduction <maximumf>, %52, %cst_18 [2] : vector<1x8x8xf32> to vector<1x8xf32>
    %54 = vector.shape_cast %53 : vector<1x8xf32> to vector<1x8x1xf32>
    %55 = vector.broadcast %54 : vector<1x8x1xf32> to vector<1x8x8xf32>
    %56 = arith.subf %52, %55 : vector<1x8x8xf32>
    %57 = math.exp %56 : vector<1x8x8xf32>
    %cst_19 = arith.constant dense<0.000000e+00> : vector<1x8xf32>
    %58 = vector.multi_reduction <add>, %57, %cst_19 [2] : vector<1x8x8xf32> to vector<1x8xf32>
    %59 = vector.shape_cast %58 : vector<1x8xf32> to vector<1x8x1xf32>
    %60 = vector.broadcast %59 : vector<1x8x1xf32> to vector<1x8x8xf32>
    %61 = arith.divf %57, %60 : vector<1x8x8xf32>
    %62 = arith.addf %44, %61 : vector<1x8x8xf32>
    %63 = arith.truncf %61 : vector<1x8x8xf32> to vector<1x8x8xbf16>
    %cst_20 = arith.constant dense<0.000000e+00> : vector<1x8x8xf32>
    %64 = tpu.matmul %63, %51, %cst_20 {dimension_numbers = #tpu.dot_dimension_numbers<[2], [1], [1], [2], [0, 0, 0, 1, 1, 2], [0], [0]>} : vector<1x8x8xbf16>, vector<1x8x8xbf16>, vector<1x8x8xf32> -> vector<1x8x8xf32>
    %65 = vector.shape_cast %64 : vector<1x8x8xf32> to vector<8x8xf32>
    %66 = arith.truncf %65 : vector<8x8xf32> to vector<8x8xbf16>
    %c0_21 = arith.constant 0 : index
    %c0_22 = arith.constant 0 : index
    %67 = vector.load %arg6[%c0_21, %c0_22] : memref<32x32xbf16, #tpu.memory_space<vmem>>, vector<8x32xbf16>
    %cst_23 = arith.constant dense<0.000000e+00> : vector<8x32xf32>
    %68 = tpu.matmul %66, %67, %cst_23 {dimension_numbers = #tpu.dot_dimension_numbers<[1], [0], [0], [1], [0, 0, 1, 1], [], []>} : vector<8x8xbf16>, vector<8x32xbf16>, vector<8x32xf32> -> vector<8x32xf32>
    %69 = arith.addf %45, %68 : vector<8x32xf32>
    %70 = vector.extract_strided_slice %39 {offsets = [0, 0, 8], sizes = [1, 8, 8], strides = [1, 1, 1]} : vector<1x8x32xf32> to vector<1x8x8xf32>
    %71 = arith.truncf %70 : vector<1x8x8xf32> to vector<1x8x8xbf16>
    %72 = vector.extract_strided_slice %41 {offsets = [0, 0, 8], sizes = [1, 8, 8], strides = [1, 1, 1]} : vector<1x8x32xf32> to vector<1x8x8xf32>
    %73 = arith.truncf %72 : vector<1x8x8xf32> to vector<1x8x8xbf16>
    %74 = vector.extract_strided_slice %43 {offsets = [0, 0, 8], sizes = [1, 8, 8], strides = [1, 1, 1]} : vector<1x8x32xf32> to vector<1x8x8xf32>
    %75 = arith.truncf %74 : vector<1x8x8xf32> to vector<1x8x8xbf16>
    %cst_24 = arith.constant dense<0.000000e+00> : vector<1x8x8xf32>
    %76 = tpu.matmul %71, %73, %cst_24 {dimension_numbers = #tpu.dot_dimension_numbers<[2], [2], [1], [1], [0, 0, 0, 1, 1, 1], [0], [0]>} : vector<1x8x8xbf16>, vector<1x8x8xbf16>, vector<1x8x8xf32> -> vector<1x8x8xf32>
    %cst_25 = arith.constant dense<0xFF800000> : vector<1x8xf32>
    %77 = vector.multi_reduction <maximumf>, %76, %cst_25 [2] : vector<1x8x8xf32> to vector<1x8xf32>
    %78 = vector.shape_cast %77 : vector<1x8xf32> to vector<1x8x1xf32>
    %79 = vector.broadcast %78 : vector<1x8x1xf32> to vector<1x8x8xf32>
    %80 = arith.subf %76, %79 : vector<1x8x8xf32>
    %81 = math.exp %80 : vector<1x8x8xf32>
    %cst_26 = arith.constant dense<0.000000e+00> : vector<1x8xf32>
    %82 = vector.multi_reduction <add>, %81, %cst_26 [2] : vector<1x8x8xf32> to vector<1x8xf32>
    %83 = vector.shape_cast %82 : vector<1x8xf32> to vector<1x8x1xf32>
    %84 = vector.broadcast %83 : vector<1x8x1xf32> to vector<1x8x8xf32>
    %85 = arith.divf %81, %84 : vector<1x8x8xf32>
    %86 = arith.addf %62, %85 : vector<1x8x8xf32>
    %87 = arith.truncf %85 : vector<1x8x8xf32> to vector<1x8x8xbf16>
    %cst_27 = arith.constant dense<0.000000e+00> : vector<1x8x8xf32>
    %88 = tpu.matmul %87, %75, %cst_27 {dimension_numbers = #tpu.dot_dimension_numbers<[2], [1], [1], [2], [0, 0, 0, 1, 1, 2], [0], [0]>} : vector<1x8x8xbf16>, vector<1x8x8xbf16>, vector<1x8x8xf32> -> vector<1x8x8xf32>
    %89 = vector.shape_cast %88 : vector<1x8x8xf32> to vector<8x8xf32>
    %90 = arith.truncf %89 : vector<8x8xf32> to vector<8x8xbf16>
    %c8 = arith.constant 8 : index
    %c0_28 = arith.constant 0 : index
    %91 = vector.load %arg6[%c8, %c0_28] : memref<32x32xbf16, #tpu.memory_space<vmem>>, vector<8x32xbf16>
    %cst_29 = arith.constant dense<0.000000e+00> : vector<8x32xf32>
    %92 = tpu.matmul %90, %91, %cst_29 {dimension_numbers = #tpu.dot_dimension_numbers<[1], [0], [0], [1], [0, 0, 1, 1], [], []>} : vector<8x8xbf16>, vector<8x32xbf16>, vector<8x32xf32> -> vector<8x32xf32>
    %93 = arith.addf %69, %92 : vector<8x32xf32>
    %94 = vector.extract_strided_slice %39 {offsets = [0, 0, 16], sizes = [1, 8, 8], strides = [1, 1, 1]} : vector<1x8x32xf32> to vector<1x8x8xf32>
    %95 = arith.truncf %94 : vector<1x8x8xf32> to vector<1x8x8xbf16>
    %96 = vector.extract_strided_slice %41 {offsets = [0, 0, 16], sizes = [1, 8, 8], strides = [1, 1, 1]} : vector<1x8x32xf32> to vector<1x8x8xf32>
    %97 = arith.truncf %96 : vector<1x8x8xf32> to vector<1x8x8xbf16>
    %98 = vector.extract_strided_slice %43 {offsets = [0, 0, 16], sizes = [1, 8, 8], strides = [1, 1, 1]} : vector<1x8x32xf32> to vector<1x8x8xf32>
    %99 = arith.truncf %98 : vector<1x8x8xf32> to vector<1x8x8xbf16>
    %cst_30 = arith.constant dense<0.000000e+00> : vector<1x8x8xf32>
    %100 = tpu.matmul %95, %97, %cst_30 {dimension_numbers = #tpu.dot_dimension_numbers<[2], [2], [1], [1], [0, 0, 0, 1, 1, 1], [0], [0]>} : vector<1x8x8xbf16>, vector<1x8x8xbf16>, vector<1x8x8xf32> -> vector<1x8x8xf32>
    %cst_31 = arith.constant dense<0xFF800000> : vector<1x8xf32>
    %101 = vector.multi_reduction <maximumf>, %100, %cst_31 [2] : vector<1x8x8xf32> to vector<1x8xf32>
    %102 = vector.shape_cast %101 : vector<1x8xf32> to vector<1x8x1xf32>
    %103 = vector.broadcast %102 : vector<1x8x1xf32> to vector<1x8x8xf32>
    %104 = arith.subf %100, %103 : vector<1x8x8xf32>
    %105 = math.exp %104 : vector<1x8x8xf32>
    %cst_32 = arith.constant dense<0.000000e+00> : vector<1x8xf32>
    %106 = vector.multi_reduction <add>, %105, %cst_32 [2] : vector<1x8x8xf32> to vector<1x8xf32>
    %107 = vector.shape_cast %106 : vector<1x8xf32> to vector<1x8x1xf32>
    %108 = vector.broadcast %107 : vector<1x8x1xf32> to vector<1x8x8xf32>
    %109 = arith.divf %105, %108 : vector<1x8x8xf32>
    %110 = arith.addf %86, %109 : vector<1x8x8xf32>
    %111 = arith.truncf %109 : vector<1x8x8xf32> to vector<1x8x8xbf16>
    %cst_33 = arith.constant dense<0.000000e+00> : vector<1x8x8xf32>
    %112 = tpu.matmul %111, %99, %cst_33 {dimension_numbers = #tpu.dot_dimension_numbers<[2], [1], [1], [2], [0, 0, 0, 1, 1, 2], [0], [0]>} : vector<1x8x8xbf16>, vector<1x8x8xbf16>, vector<1x8x8xf32> -> vector<1x8x8xf32>
    %113 = vector.shape_cast %112 : vector<1x8x8xf32> to vector<8x8xf32>
    %114 = arith.truncf %113 : vector<8x8xf32> to vector<8x8xbf16>
    %c16 = arith.constant 16 : index
    %c0_34 = arith.constant 0 : index
    %115 = vector.load %arg6[%c16, %c0_34] : memref<32x32xbf16, #tpu.memory_space<vmem>>, vector<8x32xbf16>
    %cst_35 = arith.constant dense<0.000000e+00> : vector<8x32xf32>
    %116 = tpu.matmul %114, %115, %cst_35 {dimension_numbers = #tpu.dot_dimension_numbers<[1], [0], [0], [1], [0, 0, 1, 1], [], []>} : vector<8x8xbf16>, vector<8x32xbf16>, vector<8x32xf32> -> vector<8x32xf32>
    %117 = arith.addf %93, %116 : vector<8x32xf32>
    %118 = vector.extract_strided_slice %39 {offsets = [0, 0, 24], sizes = [1, 8, 8], strides = [1, 1, 1]} : vector<1x8x32xf32> to vector<1x8x8xf32>
    %119 = arith.truncf %118 : vector<1x8x8xf32> to vector<1x8x8xbf16>
    %120 = vector.extract_strided_slice %41 {offsets = [0, 0, 24], sizes = [1, 8, 8], strides = [1, 1, 1]} : vector<1x8x32xf32> to vector<1x8x8xf32>
    %121 = arith.truncf %120 : vector<1x8x8xf32> to vector<1x8x8xbf16>
    %122 = vector.extract_strided_slice %43 {offsets = [0, 0, 24], sizes = [1, 8, 8], strides = [1, 1, 1]} : vector<1x8x32xf32> to vector<1x8x8xf32>
    %123 = arith.truncf %122 : vector<1x8x8xf32> to vector<1x8x8xbf16>
    %cst_36 = arith.constant dense<0.000000e+00> : vector<1x8x8xf32>
    %124 = tpu.matmul %119, %121, %cst_36 {dimension_numbers = #tpu.dot_dimension_numbers<[2], [2], [1], [1], [0, 0, 0, 1, 1, 1], [0], [0]>} : vector<1x8x8xbf16>, vector<1x8x8xbf16>, vector<1x8x8xf32> -> vector<1x8x8xf32>
    %cst_37 = arith.constant dense<0xFF800000> : vector<1x8xf32>
    %125 = vector.multi_reduction <maximumf>, %124, %cst_37 [2] : vector<1x8x8xf32> to vector<1x8xf32>
    %126 = vector.shape_cast %125 : vector<1x8xf32> to vector<1x8x1xf32>
    %127 = vector.broadcast %126 : vector<1x8x1xf32> to vector<1x8x8xf32>
    %128 = arith.subf %124, %127 : vector<1x8x8xf32>
    %129 = math.exp %128 : vector<1x8x8xf32>
    %cst_38 = arith.constant dense<0.000000e+00> : vector<1x8xf32>
    %130 = vector.multi_reduction <add>, %129, %cst_38 [2] : vector<1x8x8xf32> to vector<1x8xf32>
    %131 = vector.shape_cast %130 : vector<1x8xf32> to vector<1x8x1xf32>
    %132 = vector.broadcast %131 : vector<1x8x1xf32> to vector<1x8x8xf32>
    %133 = arith.divf %129, %132 : vector<1x8x8xf32>
    %134 = arith.addf %110, %133 : vector<1x8x8xf32>
    %135 = arith.truncf %133 : vector<1x8x8xf32> to vector<1x8x8xbf16>
    %cst_39 = arith.constant dense<0.000000e+00> : vector<1x8x8xf32>
    %136 = tpu.matmul %135, %123, %cst_39 {dimension_numbers = #tpu.dot_dimension_numbers<[2], [1], [1], [2], [0, 0, 0, 1, 1, 2], [0], [0]>} : vector<1x8x8xbf16>, vector<1x8x8xbf16>, vector<1x8x8xf32> -> vector<1x8x8xf32>
    %137 = vector.shape_cast %136 : vector<1x8x8xf32> to vector<8x8xf32>
    %138 = arith.truncf %137 : vector<8x8xf32> to vector<8x8xbf16>
    %c24 = arith.constant 24 : index
    %c0_40 = arith.constant 0 : index
    %139 = vector.load %arg6[%c24, %c0_40] : memref<32x32xbf16, #tpu.memory_space<vmem>>, vector<8x32xbf16>
    %cst_41 = arith.constant dense<0.000000e+00> : vector<8x32xf32>
    %140 = tpu.matmul %138, %139, %cst_41 {dimension_numbers = #tpu.dot_dimension_numbers<[1], [0], [0], [1], [0, 0, 1, 1], [], []>} : vector<8x8xbf16>, vector<8x32xbf16>, vector<8x32xf32> -> vector<8x32xf32>
    %141 = arith.addf %117, %140 : vector<8x32xf32>
    %cst_42 = arith.constant 2.500000e-01 : f32
    %142 = vector.broadcast %cst_42 : f32 to vector<1x8x8xf32>
    %143 = arith.mulf %134, %142 : vector<1x8x8xf32>
    %c0_43 = arith.constant 0 : index
    %c0_44 = arith.constant 0 : index
    %c0_45 = arith.constant 0 : index
    %144 = vector.load %arg15[%c0_43, %c0_44, %c0_45] : memref<1x8x8xf32, #tpu.memory_space<vmem>>, vector<1x8x8xf32>
    tpu.vector_store %arg15[%c0_43, %c0_44, %c0_45], %143 {strides = array<i32>} : memref<1x8x8xf32, #tpu.memory_space<vmem>>, vector<1x8x8xf32>,
    %c0_46 = arith.constant 0 : index
    %c0_47 = arith.constant 0 : index
    %145 = vector.load %arg7[%c0_46, %c0_47] : memref<1x32xf32, #tpu.memory_space<vmem>>, vector<1x32xf32>
    %146 = vector.shape_cast %145 : vector<1x32xf32> to vector<32xf32>
    %147 = vector.shape_cast %146 : vector<32xf32> to vector<1x32xf32>
    %148 = vector.broadcast %147 : vector<1x32xf32> to vector<8x32xf32>
    %149 = arith.addf %141, %148 : vector<8x32xf32>
    %150 = arith.addf %1, %149 : vector<8x32xf32>
    %c0_48 = arith.constant 0 : index
    %c0_49 = arith.constant 0 : index
    %151 = vector.load %arg8[%c0_48, %c0_49] : memref<1x32xf32, #tpu.memory_space<vmem>>, vector<1x32xf32>
    %152 = vector.shape_cast %151 : vector<1x32xf32> to vector<32xf32>
    %c0_50 = arith.constant 0 : index
    %c0_51 = arith.constant 0 : index
    %153 = vector.load %arg9[%c0_50, %c0_51] : memref<1x32xf32, #tpu.memory_space<vmem>>, vector<1x32xf32>
    %154 = vector.shape_cast %153 : vector<1x32xf32> to vector<32xf32>
    %cst_52 = arith.constant dense<0.000000e+00> : vector<8xf32>
    %155 = vector.multi_reduction <add>, %150, %cst_52 [1] : vector<8x32xf32> to vector<8xf32>
    %156 = vector.shape_cast %155 : vector<8xf32> to vector<8x1xf32>
    %cst_53 = arith.constant 3.200000e+01 : f32
    %157 = vector.broadcast %cst_53 : f32 to vector<8x1xf32>
    %158 = arith.divf %156, %157 : vector<8x1xf32>
    %159 = vector.broadcast %158 : vector<8x1xf32> to vector<8x32xf32>
    %160 = arith.subf %150, %159 : vector<8x32xf32>
    %161 = arith.mulf %160, %160 : vector<8x32xf32>
    %cst_54 = arith.constant dense<0.000000e+00> : vector<8xf32>
    %162 = vector.multi_reduction <add>, %161, %cst_54 [1] : vector<8x32xf32> to vector<8xf32>
    %163 = vector.shape_cast %162 : vector<8xf32> to vector<8x1xf32>
    %cst_55 = arith.constant 3.200000e+01 : f32
    %164 = vector.broadcast %cst_55 : f32 to vector<8x1xf32>
    %165 = arith.divf %163, %164 : vector<8x1xf32>
    %166 = vector.broadcast %158 : vector<8x1xf32> to vector<8x32xf32>
    %167 = arith.subf %150, %166 : vector<8x32xf32>
    %cst_56 = arith.constant 9.99999974E-6 : f32
    %168 = vector.broadcast %cst_56 : f32 to vector<8x1xf32>
    %169 = arith.addf %165, %168 : vector<8x1xf32>
    %170 = math.rsqrt %169 : vector<8x1xf32>
    %171 = vector.broadcast %170 : vector<8x1xf32> to vector<8x32xf32>
    %172 = arith.mulf %167, %171 : vector<8x32xf32>
    %173 = vector.shape_cast %152 : vector<32xf32> to vector<1x32xf32>
    %174 = vector.broadcast %173 : vector<1x32xf32> to vector<8x32xf32>
    %175 = arith.mulf %172, %174 : vector<8x32xf32>
    %176 = vector.shape_cast %154 : vector<32xf32> to vector<1x32xf32>
    %177 = vector.broadcast %176 : vector<1x32xf32> to vector<8x32xf32>
    %178 = arith.addf %175, %177 : vector<8x32xf32>
    %179 = arith.truncf %178 : vector<8x32xf32> to vector<8x32xbf16>
    %c0_57 = arith.constant 0 : index
    %c0_58 = arith.constant 0 : index
    %180 = vector.load %arg10[%c0_57, %c0_58] : memref<32x128xbf16, #tpu.memory_space<vmem>>, vector<32x128xbf16>
    %cst_59 = arith.constant dense<0.000000e+00> : vector<8x128xf32>
    %181 = tpu.matmul %179, %180, %cst_59 {dimension_numbers = #tpu.dot_dimension_numbers<[1], [0], [0], [1], [0, 0, 1, 1], [], []>} : vector<8x32xbf16>, vector<32x128xbf16>, vector<8x128xf32> -> vector<8x128xf32>
    %c0_60 = arith.constant 0 : index
    %c0_61 = arith.constant 0 : index
    %182 = vector.load %arg11[%c0_60, %c0_61] : memref<1x128xf32, #tpu.memory_space<vmem>>, vector<1x128xf32>
    %183 = vector.shape_cast %182 : vector<1x128xf32> to vector<128xf32>
    %184 = vector.shape_cast %183 : vector<128xf32> to vector<1x128xf32>
    %185 = vector.broadcast %184 : vector<1x128xf32> to vector<8x128xf32>
    %186 = arith.addf %181, %185 : vector<8x128xf32>
    %cst_62 = arith.constant 5.000000e-01 : f32
    %187 = vector.broadcast %cst_62 : f32 to vector<8x128xf32>
    %188 = arith.mulf %187, %186 : vector<8x128xf32>
    %cst_63 = arith.constant 0.707106769 : f32
    %189 = vector.broadcast %cst_63 : f32 to vector<8x128xf32>
    %190 = arith.mulf %186, %189 : vector<8x128xf32>
    %191 = math.absf %190 : vector<8x128xf32>
    %cst_64 = arith.constant 0.327591091 : f32
    %192 = vector.broadcast %cst_64 : f32 to vector<8x128xf32>
    %193 = arith.mulf %192, %191 : vector<8x128xf32>
    %cst_65 = arith.constant 1.000000e+00 : f32
    %194 = vector.broadcast %cst_65 : f32 to vector<8x128xf32>
    %195 = arith.addf %194, %193 : vector<8x128xf32>
    %cst_66 = arith.constant 1.000000e+00 : f32
    %196 = vector.broadcast %cst_66 : f32 to vector<8x128xf32>
    %197 = arith.divf %196, %195 : vector<8x128xf32>
    %cst_67 = arith.constant 1.06140542 : f32
    %198 = vector.broadcast %cst_67 : f32 to vector<8x128xf32>
    %199 = arith.mulf %198, %197 : vector<8x128xf32>
    %cst_68 = arith.constant -1.45315206 : f32
    %200 = vector.broadcast %cst_68 : f32 to vector<8x128xf32>
    %201 = arith.addf %199, %200 : vector<8x128xf32>
    %202 = arith.mulf %201, %197 : vector<8x128xf32>
    %cst_69 = arith.constant 1.42141378 : f32
    %203 = vector.broadcast %cst_69 : f32 to vector<8x128xf32>
    %204 = arith.addf %202, %203 : vector<8x128xf32>
    %205 = arith.mulf %204, %197 : vector<8x128xf32>
    %cst_70 = arith.constant -0.284496725 : f32
    %206 = vector.broadcast %cst_70 : f32 to vector<8x128xf32>
    %207 = arith.addf %205, %206 : vector<8x128xf32>
    %208 = arith.mulf %207, %197 : vector<8x128xf32>
    %cst_71 = arith.constant 0.254829586 : f32
    %209 = vector.broadcast %cst_71 : f32 to vector<8x128xf32>
    %210 = arith.addf %208, %209 : vector<8x128xf32>
    %211 = arith.mulf %210, %197 : vector<8x128xf32>
    %cst_72 = arith.constant 0.000000e+00 : f32
    %212 = vector.broadcast %cst_72 : f32 to vector<8x128xf32>
    %213 = arith.subf %212, %191 : vector<8x128xf32>
    %214 = arith.mulf %213, %191 : vector<8x128xf32>
    %215 = math.exp %214 : vector<8x128xf32>
    %216 = arith.mulf %211, %215 : vector<8x128xf32>
    %cst_73 = arith.constant 1.000000e+00 : f32
    %217 = vector.broadcast %cst_73 : f32 to vector<8x128xf32>
    %218 = arith.subf %217, %216 : vector<8x128xf32>
    %cst_74 = arith.constant 0.000000e+00 : f32
    %219 = vector.broadcast %cst_74 : f32 to vector<8x128xf32>
    %220 = arith.cmpf olt, %190, %219 : vector<8x128xf32>
    %cst_75 = arith.constant 0.000000e+00 : f32
    %221 = vector.broadcast %cst_75 : f32 to vector<8x128xf32>
    %222 = arith.subf %221, %218 : vector<8x128xf32>
    %223 = arith.select %220, %222, %218 : vector<8x128xi1>, vector<8x128xf32>
    %cst_76 = arith.constant 1.000000e+00 : f32
    %224 = vector.broadcast %cst_76 : f32 to vector<8x128xf32>
    %225 = arith.addf %224, %223 : vector<8x128xf32>
    %226 = arith.mulf %188, %225 : vector<8x128xf32>
    %227 = arith.truncf %226 : vector<8x128xf32> to vector<8x128xbf16>
    %c0_77 = arith.constant 0 : index
    %c0_78 = arith.constant 0 : index
    %228 = vector.load %arg12[%c0_77, %c0_78] : memref<128x32xbf16, #tpu.memory_space<vmem>>, vector<128x32xbf16>
    %cst_79 = arith.constant dense<0.000000e+00> : vector<8x32xf32>
    %229 = tpu.matmul %227, %228, %cst_79 {dimension_numbers = #tpu.dot_dimension_numbers<[1], [0], [0], [1], [0, 0, 1, 1], [], []>} : vector<8x128xbf16>, vector<128x32xbf16>, vector<8x32xf32> -> vector<8x32xf32>
    %c0_80 = arith.constant 0 : index
    %c0_81 = arith.constant 0 : index
    %230 = vector.load %arg13[%c0_80, %c0_81] : memref<1x32xf32, #tpu.memory_space<vmem>>, vector<1x32xf32>
    %231 = vector.shape_cast %230 : vector<1x32xf32> to vector<32xf32>
    %232 = vector.shape_cast %231 : vector<32xf32> to vector<1x32xf32>
    %233 = vector.broadcast %232 : vector<1x32xf32> to vector<8x32xf32>
    %234 = arith.addf %229, %233 : vector<8x32xf32>
    %235 = arith.addf %150, %234 : vector<8x32xf32>
    %236 = vector.shape_cast %235 : vector<8x32xf32> to vector<1x8x32xf32>
    %c0_82 = arith.constant 0 : index
    %c0_83 = arith.constant 0 : index
    %c0_84 = arith.constant 0 : index
    %237 = vector.load %arg14[%c0_82, %c0_83, %c0_84] : memref<1x8x32xf32, #tpu.memory_space<vmem>>, vector<1x8x32xf32>
    tpu.vector_store %arg14[%c0_82, %c0_83, %c0_84], %236 {strides = array<i32>} : memref<1x8x32xf32, #tpu.memory_space<vmem>>, vector<1x8x32xf32>,
    return
  }
  func.func @transform_0(%arg0: i32) -> (i32, i32, i32) {
    %c0_i32 = arith.constant 0 : i32
    %c0_i32_0 = arith.constant 0 : i32
    %c0_i32_1 = arith.constant 0 : i32
    return %arg0, %c0_i32, %c0_i32_0 : i32, i32, i32
  }
  func.func @transform_1(%arg0: i32) -> (i32, i32) {
    %c0_i32 = arith.constant 0 : i32
    %c0_i32_0 = arith.constant 0 : i32
    %c0_i32_1 = arith.constant 0 : i32
    return %c0_i32, %c0_i32_0 : i32, i32
  }
  func.func @transform_2(%arg0: i32) -> (i32, i32) {
    %c0_i32 = arith.constant 0 : i32
    %c0_i32_0 = arith.constant 0 : i32
    %c0_i32_1 = arith.constant 0 : i32
    return %c0_i32, %c0_i32_0 : i32, i32
  }
  func.func @transform_3(%arg0: i32) -> (i32, i32) {
    %c0_i32 = arith.constant 0 : i32
    %c0_i32_0 = arith.constant 0 : i32
    %c0_i32_1 = arith.constant 0 : i32
    return %c0_i32, %c0_i32_0 : i32, i32
  }
  func.func @transform_4(%arg0: i32) -> (i32, i32) {
    %c0_i32 = arith.constant 0 : i32
    %c0_i32_0 = arith.constant 0 : i32
    %c0_i32_1 = arith.constant 0 : i32
    return %c0_i32, %c0_i32_0 : i32, i32
  }
  func.func @transform_5(%arg0: i32) -> (i32, i32) {
    %c0_i32 = arith.constant 0 : i32
    %c0_i32_0 = arith.constant 0 : i32
    %c0_i32_1 = arith.constant 0 : i32
    return %c0_i32, %c0_i32_0 : i32, i32
  }
  func.func @transform_6(%arg0: i32) -> (i32, i32) {
    %c0_i32 = arith.constant 0 : i32
    %c0_i32_0 = arith.constant 0 : i32
    %c0_i32_1 = arith.constant 0 : i32
    return %c0_i32, %c0_i32_0 : i32, i32
  }
  func.func @transform_7(%arg0: i32) -> (i32, i32) {
    %c0_i32 = arith.constant 0 : i32
    %c0_i32_0 = arith.constant 0 : i32
    %c0_i32_1 = arith.constant 0 : i32
    return %c0_i32, %c0_i32_0 : i32, i32
  }
  func.func @transform_8(%arg0: i32) -> (i32, i32) {
    %c0_i32 = arith.constant 0 : i32
    %c0_i32_0 = arith.constant 0 : i32
    %c0_i32_1 = arith.constant 0 : i32
    return %c0_i32, %c0_i32_0 : i32, i32
  }
  func.func @transform_9(%arg0: i32) -> (i32, i32) {
    %c0_i32 = arith.constant 0 : i32
    %c0_i32_0 = arith.constant 0 : i32
    %c0_i32_1 = arith.constant 0 : i32
    return %c0_i32, %c0_i32_0 : i32, i32
  }
  func.func @transform_10(%arg0: i32) -> (i32, i32) {
    %c0_i32 = arith.constant 0 : i32
    %c0_i32_0 = arith.constant 0 : i32
    %c0_i32_1 = arith.constant 0 : i32
    return %c0_i32, %c0_i32_0 : i32, i32
  }
  func.func @transform_11(%arg0: i32) -> (i32, i32) {
    %c0_i32 = arith.constant 0 : i32
    %c0_i32_0 = arith.constant 0 : i32
    %c0_i32_1 = arith.constant 0 : i32
    return %c0_i32, %c0_i32_0 : i32, i32
  }
  func.func @transform_12(%arg0: i32) -> (i32, i32) {
    %c0_i32 = arith.constant 0 : i32
    %c0_i32_0 = arith.constant 0 : i32
    %c0_i32_1 = arith.constant 0 : i32
    return %c0_i32, %c0_i32_0 : i32, i32
  }
  func.func @transform_13(%arg0: i32) -> (i32, i32, i32) {
    %c0_i32 = arith.constant 0 : i32
    %c0_i32_0 = arith.constant 0 : i32
    %c0_i32_1 = arith.constant 0 : i32
    return %arg0, %c0_i32, %c0_i32_0 : i32, i32, i32
  }
  func.func @transform_14(%arg0: i32) -> (i32, i32, i32) {
    %c0_i32 = arith.constant 0 : i32
    %c0_i32_0 = arith.constant 0 : i32
    %c0_i32_1 = arith.constant 0 : i32
    return %arg0, %c0_i32, %c0_i32_0 : i32, i32, i32
  }
}

module attributes {stable_mosaic.version = 11 : i64} {
  func.func @fusion_block_kernel(%arg0: i32, %arg1: memref<1x8x32xf32, #tpu.memory_space<vmem>>, %arg2: memref<1x32xf32, #tpu.memory_space<vmem>>, %arg3: memref<1x32xf32, #tpu.memory_space<vmem>>, %arg4: memref<32x96xbf16, #tpu.memory_space<vmem>>, %arg5: memref<1x96xf32, #tpu.memory_space<vmem>>, %arg6: memref<32x32xbf16, #tpu.memory_space<vmem>>, %arg7: memref<1x32xf32, #tpu.memory_space<vmem>>, %arg8: memref<1x32xf32, #tpu.memory_space<vmem>>, %arg9: memref<1x32xf32, #tpu.memory_space<vmem>>, %arg10: memref<32x128xbf16, #tpu.memory_space<vmem>>, %arg11: memref<1x128xf32, #tpu.memory_space<vmem>>, %arg12: memref<128x32xbf16, #tpu.memory_space<vmem>>, %arg13: memref<1x32xf32, #tpu.memory_space<vmem>>, %arg14: memref<1x8x32xf32, #tpu.memory_space<vmem>>, %arg15: memref<1x8x8xf32, #tpu.memory_space<vmem>>) attributes {dimension_semantics = [#tpu.dimension_semantics<parallel>], iteration_bounds = array<i64: 2>, scalar_prefetch = 0 : i64, scratch_operands = 0 : i64, tpu.core_type = #tpu.core_type<tc>, window_params = [{transform_indices = @transform_0, window_bounds = array<i64: 1, 8, 32>}, {pipeline_mode = #tpu.pipeline_mode<synchronous>, transform_indices = @transform_1, window_bounds = array<i64: 1, 32>}, {pipeline_mode = #tpu.pipeline_mode<synchronous>, transform_indices = @transform_2, window_bounds = array<i64: 1, 32>}, {pipeline_mode = #tpu.pipeline_mode<synchronous>, transform_indices = @transform_3, window_bounds = array<i64: 32, 96>}, {pipeline_mode = #tpu.pipeline_mode<synchronous>, transform_indices = @transform_4, window_bounds = array<i64: 1, 96>}, {pipeline_mode = #tpu.pipeline_mode<synchronous>, transform_indices = @transform_5, window_bounds = array<i64: 32, 32>}, {pipeline_mode = #tpu.pipeline_mode<synchronous>, transform_indices = @transform_6, window_bounds = array<i64: 1, 32>}, {pipeline_mode = #tpu.pipeline_mode<synchronous>, transform_indices = @transform_7, window_bounds = array<i64: 1, 32>}, {pipeline_mode = #tpu.pipeline_mode<synchronous>, transform_indices = @transform_8, window_bounds = array<i64: 1, 32>}, {pipeline_mode = #tpu.pipeline_mode<synchronous>, transform_indices = @transform_9, window_bounds = array<i64: 32, 128>}, {pipeline_mode = #tpu.pipeline_mode<synchronous>, transform_indices = @transform_10, window_bounds = array<i64: 1, 128>}, {pipeline_mode = #tpu.pipeline_mode<synchronous>, transform_indices = @transform_11, window_bounds = array<i64: 128, 32>}, {pipeline_mode = #tpu.pipeline_mode<synchronous>, transform_indices = @transform_12, window_bounds = array<i64: 1, 32>}, {transform_indices = @transform_13, window_bounds = array<i64: 1, 8, 32>}, {transform_indices = @transform_14, window_bounds = array<i64: 1, 8, 8>}]} {
    %c0 = arith.constant 0 : index
    %c0_0 = arith.constant 0 : index
    %c0_1 = arith.constant 0 : index
    %0 = vector.load %arg1[%c0, %c0_0, %c0_1] : memref<1x8x32xf32, #tpu.memory_space<vmem>>, vector<1x8x32xf32>
    %1 = vector.shape_cast %0 : vector<1x8x32xf32> to vector<8x32xf32>
    %c0_2 = arith.constant 0 : index
    %c0_3 = arith.constant 0 : index
    %2 = vector.load %arg2[%c0_2, %c0_3] : memref<1x32xf32, #tpu.memory_space<vmem>>, vector<1x32xf32>
    %3 = vector.shape_cast %2 : vector<1x32xf32> to vector<32xf32>
    %c0_4 = arith.constant 0 : index
    %c0_5 = arith.constant 0 : index
    %4 = vector.load %arg3[%c0_4, %c0_5] : memref<1x32xf32, #tpu.memory_space<vmem>>, vector<1x32xf32>
    %5 = vector.shape_cast %4 : vector<1x32xf32> to vector<32xf32>
    %cst = arith.constant dense<0.000000e+00> : vector<8xf32>
    %6 = vector.multi_reduction <add>, %1, %cst [1] : vector<8x32xf32> to vector<8xf32>
    %7 = vector.shape_cast %6 : vector<8xf32> to vector<8x1xf32>
    %cst_6 = arith.constant 3.200000e+01 : f32
    %8 = vector.broadcast %cst_6 : f32 to vector<8x1xf32>
    %9 = arith.divf %7, %8 : vector<8x1xf32>
    %10 = vector.broadcast %9 : vector<8x1xf32> to vector<8x32xf32>
    %11 = arith.subf %1, %10 : vector<8x32xf32>
    %12 = arith.mulf %11, %11 : vector<8x32xf32>
    %cst_7 = arith.constant dense<0.000000e+00> : vector<8xf32>
    %13 = vector.multi_reduction <add>, %12, %cst_7 [1] : vector<8x32xf32> to vector<8xf32>
    %14 = vector.shape_cast %13 : vector<8xf32> to vector<8x1xf32>
    %cst_8 = arith.constant 3.200000e+01 : f32
    %15 = vector.broadcast %cst_8 : f32 to vector<8x1xf32>
    %16 = arith.divf %14, %15 : vector<8x1xf32>
    %17 = vector.broadcast %9 : vector<8x1xf32> to vector<8x32xf32>
    %18 = arith.subf %1, %17 : vector<8x32xf32>
    %cst_9 = arith.constant 9.99999974E-6 : f32
    %19 = vector.broadcast %cst_9 : f32 to vector<8x1xf32>
    %20 = arith.addf %16, %19 : vector<8x1xf32>
    %21 = math.rsqrt %20 : vector<8x1xf32>
    %22 = vector.broadcast %21 : vector<8x1xf32> to vector<8x32xf32>
    %23 = arith.mulf %18, %22 : vector<8x32xf32>
    %24 = vector.shape_cast %3 : vector<32xf32> to vector<1x32xf32>
    %25 = vector.broadcast %24 : vector<1x32xf32> to vector<8x32xf32>
    %26 = arith.mulf %23, %25 : vector<8x32xf32>
    %27 = vector.shape_cast %5 : vector<32xf32> to vector<1x32xf32>
    %28 = vector.broadcast %27 : vector<1x32xf32> to vector<8x32xf32>
    %29 = arith.addf %26, %28 : vector<8x32xf32>
    %30 = arith.truncf %29 : vector<8x32xf32> to vector<8x32xbf16>
    %c0_10 = arith.constant 0 : index
    %c0_11 = arith.constant 0 : index
    %31 = vector.load %arg4[%c0_10, %c0_11] : memref<32x96xbf16, #tpu.memory_space<vmem>>, vector<32x96xbf16>
    %cst_12 = arith.constant dense<0.000000e+00> : vector<8x96xf32>
    %32 = tpu.matmul %30, %31, %cst_12 {dimension_numbers = #tpu.dot_dimension_numbers<[1], [0], [0], [1], [0, 0, 1, 1], [], []>} : vector<8x32xbf16>, vector<32x96xbf16>, vector<8x96xf32> -> vector<8x96xf32>
    %c0_13 = arith.constant 0 : index
    %c0_14 = arith.constant 0 : index
    %33 = vector.load %arg5[%c0_13, %c0_14] : memref<1x96xf32, #tpu.memory_space<vmem>>, vector<1x96xf32>
    %34 = vector.shape_cast %33 : vector<1x96xf32> to vector<96xf32>
    %35 = vector.shape_cast %34 : vector<96xf32> to vector<1x96xf32>
    %36 = vector.broadcast %35 : vector<1x96xf32> to vector<8x96xf32>
    %37 = arith.addf %32, %36 : vector<8x96xf32>
    %38 = vector.extract_strided_slice %37 {offsets = [0, 0], sizes = [8, 32], strides = [1, 1]} : vector<8x96xf32> to vector<8x32xf32>
    %39 = vector.shape_cast %38 : vector<8x32xf32> to vector<1x8x32xf32>
    %40 = vector.extract_strided_slice %37 {offsets = [0, 32], sizes = [8, 32], strides = [1, 1]} : vector<8x96xf32> to vector<8x32xf32>
    %41 = vector.shape_cast %40 : vector<8x32xf32> to vector<1x8x32xf32>
    %42 = vector.extract_strided_slice %37 {offsets = [0, 64], sizes = [8, 32], strides = [1, 1]} : vector<8x96xf32> to vector<8x32xf32>
    %43 = vector.shape_cast %42 : vector<8x32xf32> to vector<1x8x32xf32>
    %cst_15 = arith.constant 0.000000e+00 : f32
    %44 = vector.broadcast %cst_15 : f32 to vector<1x8x8xf32>
    %cst_16 = arith.constant 0.000000e+00 : f32
    %45 = vector.broadcast %cst_16 : f32 to vector<8x32xf32>
    %46 = vector.extract_strided_slice %39 {offsets = [0, 0, 0], sizes = [1, 8, 8], strides = [1, 1, 1]} : vector<1x8x32xf32> to vector<1x8x8xf32>
    %47 = arith.truncf %46 : vector<1x8x8xf32> to vector<1x8x8xbf16>
    %48 = vector.extract_strided_slice %41 {offsets = [0, 0, 0], sizes = [1, 8, 8], strides = [1, 1, 1]} : vector<1x8x32xf32> to vector<1x8x8xf32>
    %49 = arith.truncf %48 : vector<1x8x8xf32> to vector<1x8x8xbf16>
    %50 = vector.extract_strided_slice %43 {offsets = [0, 0, 0], sizes = [1, 8, 8], strides = [1, 1, 1]} : vector<1x8x32xf32> to vector<1x8x8xf32>
    %51 = arith.truncf %50 : vector<1x8x8xf32> to vector<1x8x8xbf16>
    %cst_17 = arith.constant dense<0.000000e+00> : vector<1x8x8xf32>
    %52 = tpu.matmul %47, %49, %cst_17 {dimension_numbers = #tpu.dot_dimension_numbers<[2], [2], [1], [1], [0, 0, 0, 1, 1, 1], [0], [0]>} : vector<1x8x8xbf16>, vector<1x8x8xbf16>, vector<1x8x8xf32> -> vector<1x8x8xf32>
    %cst_18 = arith.constant dense<0xFF800000> : vector<1x8xf32>
    %53 = vector.multi_reduction <maximumf>, %52, %cst_18 [2] : vector<1x8x8xf32> to vector<1x8xf32>
    %54 = vector.shape_cast %53 : vector<1x8xf32> to vector<1x8x1xf32>
    %55 = vector.broadcast %54 : vector<1x8x1xf32> to vector<1x8x8xf32>
    %56 = arith.subf %52, %55 : vector<1x8x8xf32>
    %57 = math.exp %56 : vector<1x8x8xf32>
    %cst_19 = arith.constant dense<0.000000e+00> : vector<1x8xf32>
    %58 = vector.multi_reduction <add>, %57, %cst_19 [2] : vector<1x8x8xf32> to vector<1x8xf32>
    %59 = vector.shape_cast %58 : vector<1x8xf32> to vector<1x8x1xf32>
    %60 = vector.broadcast %59 : vector<1x8x1xf32> to vector<1x8x8xf32>
    %61 = arith.divf %57, %60 : vector<1x8x8xf32>
    %62 = arith.addf %44, %61 : vector<1x8x8xf32>
    %63 = arith.truncf %61 : vector<1x8x8xf32> to vector<1x8x8xbf16>
    %cst_20 = arith.constant dense<0.000000e+00> : vector<1x8x8xf32>
    %64 = tpu.matmul %63, %51, %cst_20 {dimension_numbers = #tpu.dot_dimension_numbers<[2], [1], [1], [2], [0, 0, 0, 1, 1, 2], [0], [0]>} : vector<1x8x8xbf16>, vector<1x8x8xbf16>, vector<1x8x8xf32> -> vector<1x8x8xf32>
    %65 = vector.shape_cast %64 : vector<1x8x8xf32> to vector<8x8xf32>
    %66 = arith.truncf %65 : vector<8x8xf32> to vector<8x8xbf16>
    %c0_21 = arith.constant 0 : index
    %c0_22 = arith.constant 0 : index
    %67 = vector.load %arg6[%c0_21, %c0_22] : memref<32x32xbf16, #tpu.memory_space<vmem>>, vector<8x32xbf16>
    %cst_23 = arith.constant dense<0.000000e+00> : vector<8x32xf32>
    %68 = tpu.matmul %66, %67, %cst_23 {dimension_numbers = #tpu.dot_dimension_numbers<[1], [0], [0], [1], [0, 0, 1, 1], [], []>} : vector<8x8xbf16>, vector<8x32xbf16>, vector<8x32xf32> -> vector<8x32xf32>
    %69 = arith.addf %45, %68 : vector<8x32xf32>
    %70 = vector.extract_strided_slice %39 {offsets = [0, 0, 8], sizes = [1, 8, 8], strides = [1, 1, 1]} : vector<1x8x32xf32> to vector<1x8x8xf32>
    %71 = arith.truncf %70 : vector<1x8x8xf32> to vector<1x8x8xbf16>
    %72 = vector.extract_strided_slice %41 {offsets = [0, 0, 8], sizes = [1, 8, 8], strides = [1, 1, 1]} : vector<1x8x32xf32> to vector<1x8x8xf32>
    %73 = arith.truncf %72 : vector<1x8x8xf32> to vector<1x8x8xbf16>
    %74 = vector.extract_strided_slice %43 {offsets = [0, 0, 8], sizes = [1, 8, 8], strides = [1, 1, 1]} : vector<1x8x32xf32> to vector<1x8x8xf32>
    %75 = arith.truncf %74 : vector<1x8x8xf32> to vector<1x8x8xbf16>
    %cst_24 = arith.constant dense<0.000000e+00> : vector<1x8x8xf32>
    %76 = tpu.matmul %71, %73, %cst_24 {dimension_numbers = #tpu.dot_dimension_numbers<[2], [2], [1], [1], [0, 0, 0, 1, 1, 1], [0], [0]>} : vector<1x8x8xbf16>, vector<1x8x8xbf16>, vector<1x8x8xf32> -> vector<1x8x8xf32>
    %cst_25 = arith.constant dense<0xFF800000> : vector<1x8xf32>
    %77 = vector.multi_reduction <maximumf>, %76, %cst_25 [2] : vector<1x8x8xf32> to vector<1x8xf32>
    %78 = vector.shape_cast %77 : vector<1x8xf32> to vector<1x8x1xf32>
    %79 = vector.broadcast %78 : vector<1x8x1xf32> to vector<1x8x8xf32>
    %80 = arith.subf %76, %79 : vector<1x8x8xf32>
    %81 = math.exp %80 : vector<1x8x8xf32>
    %cst_26 = arith.constant dense<0.000000e+00> : vector<1x8xf32>
    %82 = vector.multi_reduction <add>, %81, %cst_26 [2] : vector<1x8x8xf32> to vector<1x8xf32>
    %83 = vector.shape_cast %82 : vector<1x8xf32> to vector<1x8x1xf32>
    %84 = vector.broadcast %83 : vector<1x8x1xf32> to vector<1x8x8xf32>
    %85 = arith.divf %81, %84 : vector<1x8x8xf32>
    %86 = arith.addf %62, %85 : vector<1x8x8xf32>
    %87 = arith.truncf %85 : vector<1x8x8xf32> to vector<1x8x8xbf16>
    %cst_27 = arith.constant dense<0.000000e+00> : vector<1x8x8xf32>
    %88 = tpu.matmul %87, %75, %cst_27 {dimension_numbers = #tpu.dot_dimension_numbers<[2], [1], [1], [2], [0, 0, 0, 1, 1, 2], [0], [0]>} : vector<1x8x8xbf16>, vector<1x8x8xbf16>, vector<1x8x8xf32> -> vector<1x8x8xf32>
    %89 = vector.shape_cast %88 : vector<1x8x8xf32> to vector<8x8xf32>
    %90 = arith.truncf %89 : vector<8x8xf32> to vector<8x8xbf16>
    %c8 = arith.constant 8 : index
    %c0_28 = arith.constant 0 : index
    %91 = vector.load %arg6[%c8, %c0_28] : memref<32x32xbf16, #tpu.memory_space<vmem>>, vector<8x32xbf16>
    %cst_29 = arith.constant dense<0.000000e+00> : vector<8x32xf32>
    %92 = tpu.matmul %90, %91, %cst_29 {dimension_numbers = #tpu.dot_dimension_numbers<[1], [0], [0], [1], [0, 0, 1, 1], [], []>} : vector<8x8xbf16>, vector<8x32xbf16>, vector<8x32xf32> -> vector<8x32xf32>
    %93 = arith.addf %69, %92 : vector<8x32xf32>
    %94 = vector.extract_strided_slice %39 {offsets = [0, 0, 16], sizes = [1, 8, 8], strides = [1, 1, 1]} : vector<1x8x32xf32> to vector<1x8x8xf32>
    %95 = arith.truncf %94 : vector<1x8x8xf32> to vector<1x8x8xbf16>
    %96 = vector.extract_strided_slice %41 {offsets = [0, 0, 16], sizes = [1, 8, 8], strides = [1, 1, 1]} : vector<1x8x32xf32> to vector<1x8x8xf32>
    %97 = arith.truncf %96 : vector<1x8x8xf32> to vector<1x8x8xbf16>
    %98 = vector.extract_strided_slice %43 {offsets = [0, 0, 16], sizes = [1, 8, 8], strides = [1, 1, 1]} : vector<1x8x32xf32> to vector<1x8x8xf32>
    %99 = arith.truncf %98 : vector<1x8x8xf32> to vector<1x8x8xbf16>
    %cst_30 = arith.constant dense<0.000000e+00> : vector<1x8x8xf32>
    %100 = tpu.matmul %95, %97, %cst_30 {dimension_numbers = #tpu.dot_dimension_numbers<[2], [2], [1], [1], [0, 0, 0, 1, 1, 1], [0], [0]>} : vector<1x8x8xbf16>, vector<1x8x8xbf16>, vector<1x8x8xf32> -> vector<1x8x8xf32>
    %cst_31 = arith.constant dense<0xFF800000> : vector<1x8xf32>
    %101 = vector.multi_reduction <maximumf>, %100, %cst_31 [2] : vector<1x8x8xf32> to vector<1x8xf32>
    %102 = vector.shape_cast %101 : vector<1x8xf32> to vector<1x8x1xf32>
    %103 = vector.broadcast %102 : vector<1x8x1xf32> to vector<1x8x8xf32>
    %104 = arith.subf %100, %103 : vector<1x8x8xf32>
    %105 = math.exp %104 : vector<1x8x8xf32>
    %cst_32 = arith.constant dense<0.000000e+00> : vector<1x8xf32>
    %106 = vector.multi_reduction <add>, %105, %cst_32 [2] : vector<1x8x8xf32> to vector<1x8xf32>
    %107 = vector.shape_cast %106 : vector<1x8xf32> to vector<1x8x1xf32>
    %108 = vector.broadcast %107 : vector<1x8x1xf32> to vector<1x8x8xf32>
    %109 = arith.divf %105, %108 : vector<1x8x8xf32>
    %110 = arith.addf %86, %109 : vector<1x8x8xf32>
    %111 = arith.truncf %109 : vector<1x8x8xf32> to vector<1x8x8xbf16>
    %cst_33 = arith.constant dense<0.000000e+00> : vector<1x8x8xf32>
    %112 = tpu.matmul %111, %99, %cst_33 {dimension_numbers = #tpu.dot_dimension_numbers<[2], [1], [1], [2], [0, 0, 0, 1, 1, 2], [0], [0]>} : vector<1x8x8xbf16>, vector<1x8x8xbf16>, vector<1x8x8xf32> -> vector<1x8x8xf32>
    %113 = vector.shape_cast %112 : vector<1x8x8xf32> to vector<8x8xf32>
    %114 = arith.truncf %113 : vector<8x8xf32> to vector<8x8xbf16>
    %c16 = arith.constant 16 : index
    %c0_34 = arith.constant 0 : index
    %115 = vector.load %arg6[%c16, %c0_34] : memref<32x32xbf16, #tpu.memory_space<vmem>>, vector<8x32xbf16>
    %cst_35 = arith.constant dense<0.000000e+00> : vector<8x32xf32>
    %116 = tpu.matmul %114, %115, %cst_35 {dimension_numbers = #tpu.dot_dimension_numbers<[1], [0], [0], [1], [0, 0, 1, 1], [], []>} : vector<8x8xbf16>, vector<8x32xbf16>, vector<8x32xf32> -> vector<8x32xf32>
    %117 = arith.addf %93, %116 : vector<8x32xf32>
    %118 = vector.extract_strided_slice %39 {offsets = [0, 0, 24], sizes = [1, 8, 8], strides = [1, 1, 1]} : vector<1x8x32xf32> to vector<1x8x8xf32>
    %119 = arith.truncf %118 : vector<1x8x8xf32> to vector<1x8x8xbf16>
    %120 = vector.extract_strided_slice %41 {offsets = [0, 0, 24], sizes = [1, 8, 8], strides = [1, 1, 1]} : vector<1x8x32xf32> to vector<1x8x8xf32>
    %121 = arith.truncf %120 : vector<1x8x8xf32> to vector<1x8x8xbf16>
    %122 = vector.extract_strided_slice %43 {offsets = [0, 0, 24], sizes = [1, 8, 8], strides = [1, 1, 1]} : vector<1x8x32xf32> to vector<1x8x8xf32>
    %123 = arith.truncf %122 : vector<1x8x8xf32> to vector<1x8x8xbf16>
    %cst_36 = arith.constant dense<0.000000e+00> : vector<1x8x8xf32>
    %124 = tpu.matmul %119, %121, %cst_36 {dimension_numbers = #tpu.dot_dimension_numbers<[2], [2], [1], [1], [0, 0, 0, 1, 1, 1], [0], [0]>} : vector<1x8x8xbf16>, vector<1x8x8xbf16>, vector<1x8x8xf32> -> vector<1x8x8xf32>
    %cst_37 = arith.constant dense<0xFF800000> : vector<1x8xf32>
    %125 = vector.multi_reduction <maximumf>, %124, %cst_37 [2] : vector<1x8x8xf32> to vector<1x8xf32>
    %126 = vector.shape_cast %125 : vector<1x8xf32> to vector<1x8x1xf32>
    %127 = vector.broadcast %126 : vector<1x8x1xf32> to vector<1x8x8xf32>
    %128 = arith.subf %124, %127 : vector<1x8x8xf32>
    %129 = math.exp %128 : vector<1x8x8xf32>
    %cst_38 = arith.constant dense<0.000000e+00> : vector<1x8xf32>
    %130 = vector.multi_reduction <add>, %129, %cst_38 [2] : vector<1x8x8xf32> to vector<1x8xf32>
    %131 = vector.shape_cast %130 : vector<1x8xf32> to vector<1x8x1xf32>
    %132 = vector.broadcast %131 : vector<1x8x1xf32> to vector<1x8x8xf32>
    %133 = arith.divf %129, %132 : vector<1x8x8xf32>
    %134 = arith.addf %110, %133 : vector<1x8x8xf32>
    %135 = arith.truncf %133 : vector<1x8x8xf32> to vector<1x8x8xbf16>
    %cst_39 = arith.constant dense<0.000000e+00> : vector<1x8x8xf32>
    %136 = tpu.matmul %135, %123, %cst_39 {dimension_numbers = #tpu.dot_dimension_numbers<[2], [1], [1], [2], [0, 0, 0, 1, 1, 2], [0], [0]>} : vector<1x8x8xbf16>, vector<1x8x8xbf16>, vector<1x8x8xf32> -> vector<1x8x8xf32>
    %137 = vector.shape_cast %136 : vector<1x8x8xf32> to vector<8x8xf32>
    %138 = arith.truncf %137 : vector<8x8xf32> to vector<8x8xbf16>
    %c24 = arith.constant 24 : index
    %c0_40 = arith.constant 0 : index
    %139 = vector.load %arg6[%c24, %c0_40] : memref<32x32xbf16, #tpu.memory_space<vmem>>, vector<8x32xbf16>
    %cst_41 = arith.constant dense<0.000000e+00> : vector<8x32xf32>
    %140 = tpu.matmul %138, %139, %cst_41 {dimension_numbers = #tpu.dot_dimension_numbers<[1], [0], [0], [1], [0, 0, 1, 1], [], []>} : vector<8x8xbf16>, vector<8x32xbf16>, vector<8x32xf32> -> vector<8x32xf32>
    %141 = arith.addf %117, %140 : vector<8x32xf32>
    %cst_42 = arith.constant 2.500000e-01 : f32
    %142 = vector.broadcast %cst_42 : f32 to vector<1x8x8xf32>
    %143 = arith.mulf %134, %142 : vector<1x8x8xf32>
    %c0_43 = arith.constant 0 : index
    %c0_44 = arith.constant 0 : index
    %c0_45 = arith.constant 0 : index
    %144 = vector.load %arg15[%c0_43, %c0_44, %c0_45] : memref<1x8x8xf32, #tpu.memory_space<vmem>>, vector<1x8x8xf32>
    tpu.vector_store %arg15[%c0_43, %c0_44, %c0_45], %143 {strides = array<i32>} : memref<1x8x8xf32, #tpu.memory_space<vmem>>, vector<1x8x8xf32>,
    %c0_46 = arith.constant 0 : index
    %c0_47 = arith.constant 0 : index
    %145 = vector.load %arg7[%c0_46, %c0_47] : memref<1x32xf32, #tpu.memory_space<vmem>>, vector<1x32xf32>
    %146 = vector.shape_cast %145 : vector<1x32xf32> to vector<32xf32>
    %147 = vector.shape_cast %146 : vector<32xf32> to vector<1x32xf32>
    %148 = vector.broadcast %147 : vector<1x32xf32> to vector<8x32xf32>
    %149 = arith.addf %141, %148 : vector<8x32xf32>
    %150 = arith.addf %1, %149 : vector<8x32xf32>
    %c0_48 = arith.constant 0 : index
    %c0_49 = arith.constant 0 : index
    %151 = vector.load %arg8[%c0_48, %c0_49] : memref<1x32xf32, #tpu.memory_space<vmem>>, vector<1x32xf32>
    %152 = vector.shape_cast %151 : vector<1x32xf32> to vector<32xf32>
    %c0_50 = arith.constant 0 : index
    %c0_51 = arith.constant 0 : index
    %153 = vector.load %arg9[%c0_50, %c0_51] : memref<1x32xf32, #tpu.memory_space<vmem>>, vector<1x32xf32>
    %154 = vector.shape_cast %153 : vector<1x32xf32> to vector<32xf32>
    %cst_52 = arith.constant dense<0.000000e+00> : vector<8xf32>
    %155 = vector.multi_reduction <add>, %150, %cst_52 [1] : vector<8x32xf32> to vector<8xf32>
    %156 = vector.shape_cast %155 : vector<8xf32> to vector<8x1xf32>
    %cst_53 = arith.constant 3.200000e+01 : f32
    %157 = vector.broadcast %cst_53 : f32 to vector<8x1xf32>
    %158 = arith.divf %156, %157 : vector<8x1xf32>
    %159 = vector.broadcast %158 : vector<8x1xf32> to vector<8x32xf32>
    %160 = arith.subf %150, %159 : vector<8x32xf32>
    %161 = arith.mulf %160, %160 : vector<8x32xf32>
    %cst_54 = arith.constant dense<0.000000e+00> : vector<8xf32>
    %162 = vector.multi_reduction <add>, %161, %cst_54 [1] : vector<8x32xf32> to vector<8xf32>
    %163 = vector.shape_cast %162 : vector<8xf32> to vector<8x1xf32>
    %cst_55 = arith.constant 3.200000e+01 : f32
    %164 = vector.broadcast %cst_55 : f32 to vector<8x1xf32>
    %165 = arith.divf %163, %164 : vector<8x1xf32>
    %166 = vector.broadcast %158 : vector<8x1xf32> to vector<8x32xf32>
    %167 = arith.subf %150, %166 : vector<8x32xf32>
    %cst_56 = arith.constant 9.99999974E-6 : f32
    %168 = vector.broadcast %cst_56 : f32 to vector<8x1xf32>
    %169 = arith.addf %165, %168 : vector<8x1xf32>
    %170 = math.rsqrt %169 : vector<8x1xf32>
    %171 = vector.broadcast %170 : vector<8x1xf32> to vector<8x32xf32>
    %172 = arith.mulf %167, %171 : vector<8x32xf32>
    %173 = vector.shape_cast %152 : vector<32xf32> to vector<1x32xf32>
    %174 = vector.broadcast %173 : vector<1x32xf32> to vector<8x32xf32>
    %175 = arith.mulf %172, %174 : vector<8x32xf32>
    %176 = vector.shape_cast %154 : vector<32xf32> to vector<1x32xf32>
    %177 = vector.broadcast %176 : vector<1x32xf32> to vector<8x32xf32>
    %178 = arith.addf %175, %177 : vector<8x32xf32>
    %179 = arith.truncf %178 : vector<8x32xf32> to vector<8x32xbf16>
    %c0_57 = arith.constant 0 : index
    %c0_58 = arith.constant 0 : index
    %180 = vector.load %arg10[%c0_57, %c0_58] : memref<32x128xbf16, #tpu.memory_space<vmem>>, vector<32x128xbf16>
    %cst_59 = arith.constant dense<0.000000e+00> : vector<8x128xf32>
    %181 = tpu.matmul %179, %180, %cst_59 {dimension_numbers = #tpu.dot_dimension_numbers<[1], [0], [0], [1], [0, 0, 1, 1], [], []>} : vector<8x32xbf16>, vector<32x128xbf16>, vector<8x128xf32> -> vector<8x128xf32>
    %c0_60 = arith.constant 0 : index
    %c0_61 = arith.constant 0 : index
    %182 = vector.load %arg11[%c0_60, %c0_61] : memref<1x128xf32, #tpu.memory_space<vmem>>, vector<1x128xf32>
    %183 = vector.shape_cast %182 : vector<1x128xf32> to vector<128xf32>
    %184 = vector.shape_cast %183 : vector<128xf32> to vector<1x128xf32>
    %185 = vector.broadcast %184 : vector<1x128xf32> to vector<8x128xf32>
    %186 = arith.addf %181, %185 : vector<8x128xf32>
    %cst_62 = arith.constant 5.000000e-01 : f32
    %187 = vector.broadcast %cst_62 : f32 to vector<8x128xf32>
    %188 = arith.mulf %187, %186 : vector<8x128xf32>
    %cst_63 = arith.constant 0.707106769 : f32
    %189 = vector.broadcast %cst_63 : f32 to vector<8x128xf32>
    %190 = arith.mulf %186, %189 : vector<8x128xf32>
    %191 = math.absf %190 : vector<8x128xf32>
    %cst_64 = arith.constant 0.327591091 : f32
    %192 = vector.broadcast %cst_64 : f32 to vector<8x128xf32>
    %193 = arith.mulf %192, %191 : vector<8x128xf32>
    %cst_65 = arith.constant 1.000000e+00 : f32
    %194 = vector.broadcast %cst_65 : f32 to vector<8x128xf32>
    %195 = arith.addf %194, %193 : vector<8x128xf32>
    %cst_66 = arith.constant 1.000000e+00 : f32
    %196 = vector.broadcast %cst_66 : f32 to vector<8x128xf32>
    %197 = arith.divf %196, %195 : vector<8x128xf32>
    %cst_67 = arith.constant 1.06140542 : f32
    %198 = vector.broadcast %cst_67 : f32 to vector<8x128xf32>
    %199 = arith.mulf %198, %197 : vector<8x128xf32>
    %cst_68 = arith.constant -1.45315206 : f32
    %200 = vector.broadcast %cst_68 : f32 to vector<8x128xf32>
    %201 = arith.addf %199, %200 : vector<8x128xf32>
    %202 = arith.mulf %201, %197 : vector<8x128xf32>
    %cst_69 = arith.constant 1.42141378 : f32
    %203 = vector.broadcast %cst_69 : f32 to vector<8x128xf32>
    %204 = arith.addf %202, %203 : vector<8x128xf32>
    %205 = arith.mulf %204, %197 : vector<8x128xf32>
    %cst_70 = arith.constant -0.284496725 : f32
    %206 = vector.broadcast %cst_70 : f32 to vector<8x128xf32>
    %207 = arith.addf %205, %206 : vector<8x128xf32>
    %208 = arith.mulf %207, %197 : vector<8x128xf32>
    %cst_71 = arith.constant 0.254829586 : f32
    %209 = vector.broadcast %cst_71 : f32 to vector<8x128xf32>
    %210 = arith.addf %208, %209 : vector<8x128xf32>
    %211 = arith.mulf %210, %197 : vector<8x128xf32>
    %cst_72 = arith.constant 0.000000e+00 : f32
    %212 = vector.broadcast %cst_72 : f32 to vector<8x128xf32>
    %213 = arith.subf %212, %191 : vector<8x128xf32>
    %214 = arith.mulf %213, %191 : vector<8x128xf32>
    %215 = math.exp %214 : vector<8x128xf32>
    %216 = arith.mulf %211, %215 : vector<8x128xf32>
    %cst_73 = arith.constant 1.000000e+00 : f32
    %217 = vector.broadcast %cst_73 : f32 to vector<8x128xf32>
    %218 = arith.subf %217, %216 : vector<8x128xf32>
    %cst_74 = arith.constant 0.000000e+00 : f32
    %219 = vector.broadcast %cst_74 : f32 to vector<8x128xf32>
    %220 = arith.cmpf olt, %190, %219 : vector<8x128xf32>
    %cst_75 = arith.constant 0.000000e+00 : f32
    %221 = vector.broadcast %cst_75 : f32 to vector<8x128xf32>
    %222 = arith.subf %221, %218 : vector<8x128xf32>
    %223 = arith.select %220, %222, %218 : vector<8x128xi1>, vector<8x128xf32>
    %cst_76 = arith.constant 1.000000e+00 : f32
    %224 = vector.broadcast %cst_76 : f32 to vector<8x128xf32>
    %225 = arith.addf %224, %223 : vector<8x128xf32>
    %226 = arith.mulf %188, %225 : vector<8x128xf32>
    %227 = arith.truncf %226 : vector<8x128xf32> to vector<8x128xbf16>
    %c0_77 = arith.constant 0 : index
    %c0_78 = arith.constant 0 : index
    %228 = vector.load %arg12[%c0_77, %c0_78] : memref<128x32xbf16, #tpu.memory_space<vmem>>, vector<128x32xbf16>
    %cst_79 = arith.constant dense<0.000000e+00> : vector<8x32xf32>
    %229 = tpu.matmul %227, %228, %cst_79 {dimension_numbers = #tpu.dot_dimension_numbers<[1], [0], [0], [1], [0, 0, 1, 1], [], []>} : vector<8x128xbf16>, vector<128x32xbf16>, vector<8x32xf32> -> vector<8x32xf32>
    %c0_80 = arith.constant 0 : index
    %c0_81 = arith.constant 0 : index
    %230 = vector.load %arg13[%c0_80, %c0_81] : memref<1x32xf32, #tpu.memory_space<vmem>>, vector<1x32xf32>
    %231 = vector.shape_cast %230 : vector<1x32xf32> to vector<32xf32>
    %232 = vector.shape_cast %231 : vector<32xf32> to vector<1x32xf32>
    %233 = vector.broadcast %232 : vector<1x32xf32> to vector<8x32xf32>
    %234 = arith.addf %229, %233 : vector<8x32xf32>
    %235 = arith.addf %150, %234 : vector<8x32xf32>
    %236 = vector.shape_cast %235 : vector<8x32xf32> to vector<1x8x32xf32>
    %c0_82 = arith.constant 0 : index
    %c0_83 = arith.constant 0 : index
    %c0_84 = arith.constant 0 : index
    %237 = vector.load %arg14[%c0_82, %c0_83, %c0_84] : memref<1x8x32xf32, #tpu.memory_space<vmem>>, vector<1x8x32xf32>
    tpu.vector_store %arg14[%c0_82, %c0_83, %c0_84], %236 {strides = array<i32>} : memref<1x8x32xf32, #tpu.memory_space<vmem>>, vector<1x8x32xf32>,
    return
  }
  func.func @transform_0(%arg0: i32) -> (i32, i32, i32) {
    %c0_i32 = arith.constant 0 : i32
    %c0_i32_0 = arith.constant 0 : i32
    %c0_i32_1 = arith.constant 0 : i32
    return %arg0, %c0_i32, %c0_i32_0 : i32, i32, i32
  }
  func.func @transform_1(%arg0: i32) -> (i32, i32) {
    %c0_i32 = arith.constant 0 : i32
    %c0_i32_0 = arith.constant 0 : i32
    %c0_i32_1 = arith.constant 0 : i32
    return %c0_i32, %c0_i32_0 : i32, i32
  }
  func.func @transform_2(%arg0: i32) -> (i32, i32) {
    %c0_i32 = arith.constant 0 : i32
    %c0_i32_0 = arith.constant 0 : i32
    %c0_i32_1 = arith.constant 0 : i32
    return %c0_i32, %c0_i32_0 : i32, i32
  }
  func.func @transform_3(%arg0: i32) -> (i32, i32) {
    %c0_i32 = arith.constant 0 : i32
    %c0_i32_0 = arith.constant 0 : i32
    %c0_i32_1 = arith.constant 0 : i32
    return %c0_i32, %c0_i32_0 : i32, i32
  }
  func.func @transform_4(%arg0: i32) -> (i32, i32) {
    %c0_i32 = arith.constant 0 : i32
    %c0_i32_0 = arith.constant 0 : i32
    %c0_i32_1 = arith.constant 0 : i32
    return %c0_i32, %c0_i32_0 : i32, i32
  }
  func.func @transform_5(%arg0: i32) -> (i32, i32) {
    %c0_i32 = arith.constant 0 : i32
    %c0_i32_0 = arith.constant 0 : i32
    %c0_i32_1 = arith.constant 0 : i32
    return %c0_i32, %c0_i32_0 : i32, i32
  }
  func.func @transform_6(%arg0: i32) -> (i32, i32) {
    %c0_i32 = arith.constant 0 : i32
    %c0_i32_0 = arith.constant 0 : i32
    %c0_i32_1 = arith.constant 0 : i32
    return %c0_i32, %c0_i32_0 : i32, i32
  }
  func.func @transform_7(%arg0: i32) -> (i32, i32) {
    %c0_i32 = arith.constant 0 : i32
    %c0_i32_0 = arith.constant 0 : i32
    %c0_i32_1 = arith.constant 0 : i32
    return %c0_i32, %c0_i32_0 : i32, i32
  }
  func.func @transform_8(%arg0: i32) -> (i32, i32) {
    %c0_i32 = arith.constant 0 : i32
    %c0_i32_0 = arith.constant 0 : i32
    %c0_i32_1 = arith.constant 0 : i32
    return %c0_i32, %c0_i32_0 : i32, i32
  }
  func.func @transform_9(%arg0: i32) -> (i32, i32) {
    %c0_i32 = arith.constant 0 : i32
    %c0_i32_0 = arith.constant 0 : i32
    %c0_i32_1 = arith.constant 0 : i32
    return %c0_i32, %c0_i32_0 : i32, i32
  }
  func.func @transform_10(%arg0: i32) -> (i32, i32) {
    %c0_i32 = arith.constant 0 : i32
    %c0_i32_0 = arith.constant 0 : i32
    %c0_i32_1 = arith.constant 0 : i32
    return %c0_i32, %c0_i32_0 : i32, i32
  }
  func.func @transform_11(%arg0: i32) -> (i32, i32) {
    %c0_i32 = arith.constant 0 : i32
    %c0_i32_0 = arith.constant 0 : i32
    %c0_i32_1 = arith.constant 0 : i32
    return %c0_i32, %c0_i32_0 : i32, i32
  }
  func.func @transform_12(%arg0: i32) -> (i32, i32) {
    %c0_i32 = arith.constant 0 : i32
    %c0_i32_0 = arith.constant 0 : i32
    %c0_i32_1 = arith.constant 0 : i32
    return %c0_i32, %c0_i32_0 : i32, i32
  }
  func.func @transform_13(%arg0: i32) -> (i32, i32, i32) {
    %c0_i32 = arith.constant 0 : i32
    %c0_i32_0 = arith.constant 0 : i32
    %c0_i32_1 = arith.constant 0 : i32
    return %arg0, %c0_i32, %c0_i32_0 : i32, i32, i32
  }
  func.func @transform_14(%arg0: i32) -> (i32, i32, i32) {
    %c0_i32 = arith.constant 0 : i32
    %c0_i32_0 = arith.constant 0 : i32
    %c0_i32_1 = arith.constant 0 : i32
    return %arg0, %c0_i32, %c0_i32_0 : i32, i32, i32
  }
}

</mosaic_0001>

<llo_original>
// kernel: tpu_custom_call.1
$region0: #{tpu_custom_call.1}
  #allocation0 [shape = 'u32[]', space=smem, size = 0x4, offset = 0x4, fixed_abs, tag = 'smem constant byte address 0x4 - core index']
  #allocation1 [shape = 'u32[144,128]{1,0:T(1,128)}', space=vmem, size = 0x12000, scoped, tag = 'internal scratch']
  %s0 = inlined_call_operand.vmem [shape: f32[2,8,32], index: 0, kind: input, shape index: {}]
  %s1 = inlined_call_operand.vmem [shape: f32[1,32], index: 1, kind: input, shape index: {}]
  %s2 = inlined_call_operand.vmem [shape: f32[1,32], index: 2, kind: input, shape index: {}]
  %s3 = inlined_call_operand.vmem [shape: bf16[32,96], index: 3, kind: input, shape index: {}]
  %s4 = inlined_call_operand.vmem [shape: f32[1,96], index: 4, kind: input, shape index: {}]
  %s5 = inlined_call_operand.vmem [shape: bf16[32,32], index: 5, kind: input, shape index: {}]
  %s6 = inlined_call_operand.vmem [shape: f32[1,32], index: 6, kind: input, shape index: {}]
  %s7 = inlined_call_operand.vmem [shape: f32[1,32], index: 7, kind: input, shape index: {}]
  %s8 = inlined_call_operand.vmem [shape: f32[1,32], index: 8, kind: input, shape index: {}]
  %s9 = inlined_call_operand.vmem [shape: bf16[32,128], index: 9, kind: input, shape index: {}]
  %s10 = inlined_call_operand.vmem [shape: f32[1,128], index: 10, kind: input, shape index: {}]
  %s11 = inlined_call_operand.vmem [shape: bf16[128,32], index: 11, kind: input, shape index: {}]
  %s12 = inlined_call_operand.vmem [shape: f32[1,32], index: 12, kind: input, shape index: {}]
  %s13 = inlined_call_operand.hbm [shape: f32[2,8,32], index: 13, kind: output, shape index: {0}]
  %s14 = inlined_call_operand.hbm [shape: f32[2,8,8], index: 14, kind: output, shape index: {1}]
  %15 = xla_tuple %s13, %s14
  %s16 = sld [smem:[#allocation0]]
  $region93: #{tpu_custom_call.1} parent=0
    _
  %s18 = ssub.s32 1, %s16
  %s19 = scalar_select 0, %s18, %s16
  $region1: #{tpu_custom_call.1} parent=0
    #allocation2 [shape = 'u8[8192]{0}', space=vmem, size = 0x2000, scoped, tag = 'output window, operand 0']
    #allocation3 [shape = 's32[2]{0}', space=sflag, size = 0x8, scoped, tag = 'scoped memory for tpu_custom_call.1']
    #allocation4 [shape = 'u8[8192]{0}', space=vmem, size = 0x2000, scoped, tag = 'output window, operand 1']
    #allocation5 [shape = 's32[2]{0}', space=sflag, size = 0x8, scoped, tag = 'scoped memory for tpu_custom_call.1']
    %20 = vsyncpa [#allocation3], 0
    %s21 = scalar_lea.sflag [#allocation3], 1
    %22 = vsyncpa %s21, 0
    %23 = vsyncpa [#allocation5], 0
    %s24 = scalar_lea.sflag [#allocation5], 1
    %25 = vsyncpa %s24, 0
    loop: start=0, step=1, limit=4
    $region2: #{tpu_custom_call.1} parent=1 // loop_pre_header
      _
    $region3: #{tpu_custom_call.1} parent=1 // loop_header
      %s27 = sphi 0, %s31
      %p28 = scmp.ge.s32.totalorder %s27, 4
      %s37 = sphi 0, %s39
      %s40 = sphi 0, %s37
      %s41 = sphi 0, %s40
      %s57 = sphi 0, %s41
      %s61 = sphi 0, %s61
      %s63 = sphi 0, %s61
      %s64 = sphi 0, %s63
      %s78 = sphi 0, %s64
      %s82 = sphi 0, %s82
      %s84 = sphi 0, %s82
      %s85 = sphi 0, %s84
      %s99 = sphi 0, %s85
      %s103 = sphi 0, %s103
      %s105 = sphi 0, %s103
      %s106 = sphi 0, %s105
      %s120 = sphi 0, %s106
      %s124 = sphi 0, %s124
      %s126 = sphi 0, %s124
      %s127 = sphi 0, %s126
      %s141 = sphi 0, %s127
      %s145 = sphi 0, %s145
      %s147 = sphi 0, %s145
      %s148 = sphi 0, %s147
      %s162 = sphi 0, %s148
      %s166 = sphi 0, %s166
      %s168 = sphi 0, %s166
      %s169 = sphi 0, %s168
      %s183 = sphi 0, %s169
      %s187 = sphi 0, %s187
      %s189 = sphi 0, %s187
      %s190 = sphi 0, %s189
      %s204 = sphi 0, %s190
      %s208 = sphi 0, %s208
      %s210 = sphi 0, %s208
      %s211 = sphi 0, %s210
      %s225 = sphi 0, %s211
      %s229 = sphi 0, %s229
      %s231 = sphi 0, %s229
      %s232 = sphi 0, %s231
      %s246 = sphi 0, %s232
      %s250 = sphi 0, %s250
      %s252 = sphi 0, %s250
      %s253 = sphi 0, %s252
      %s267 = sphi 0, %s253
      %s271 = sphi 0, %s271
      %s273 = sphi 0, %s271
      %s274 = sphi 0, %s273
      %s288 = sphi 0, %s274
      %s292 = sphi 0, %s292
      %s294 = sphi 0, %s292
      %s295 = sphi 0, %s294
      %s309 = sphi 0, %s295
      %s315 = sphi 0, %s317
      %s318 = sphi 0, %s315
      %s319 = sphi 0, %s318
      %s335 = sphi 0, %s319
      %s341 = sphi 0, %s343
      %s344 = sphi 0, %s341
      %s345 = sphi 0, %s344
      %s361 = sphi 0, %s345
    $region4: #{tpu_custom_call.1} parent=1 // loop_header_branch
      %30 = sbr.rel (%p28) target = $region8
    $region5: #{tpu_custom_call.1} parent=1 // loop_body
      %s32 = ssub.s32 %s27, 1
      %s33 = ssub.s32 %s27, 2
      %s34 = sadd.s32 %s27, 1
      %s35 = ssub.s32 %s27, %s34
      %p36 = scmp.eq.s32.totalorder %s35, 0
      %s38 = sadd.s32 %s37, 1
      %s39 = scalar_select %p36, %s37, %s38
      %p42 = pneg %p36
      %p43 = scmp.eq.s32.totalorder %s27, 1
      %p44 = por %p42, %p43
      %p45 = scmp.ne.s32.totalorder %s37, %s40
      %p46 = scmp.eq.s32.totalorder %s27, 0
      %p47 = por %p45, %p46
      %p48 = scmp.ne.s32.totalorder %s37, %s40
      %p49 = scmp.eq.s32.totalorder %s32, 1
      %p50 = por %p48, %p49
      %p51 = scmp.ne.s32.totalorder %s40, %s41
      %p52 = scmp.eq.s32.totalorder %s32, 0
      %p53 = por %p51, %p52
      %p54 = scmp.ne.s32.totalorder %s40, %s41
      %p55 = scmp.eq.s32.totalorder %s33, 1
      %p56 = por %p54, %p55
      %p58 = scmp.ne.s32.totalorder %s41, %s57
      %p59 = scmp.eq.s32.totalorder %s33, 0
      %p60 = por %p58, %p59
      %s62 = sadd.s32 %s61, 1
      %p65 = scmp.eq.s32.totalorder %s27, 1
      %p66 = scmp.ne.s32.totalorder %s61, %s63
      %p67 = scmp.eq.s32.totalorder %s27, 0
      %p68 = por %p66, %p67
      %p69 = scmp.ne.s32.totalorder %s61, %s63
      %p70 = scmp.eq.s32.totalorder %s32, 1
      %p71 = por %p69, %p70
      %p72 = scmp.ne.s32.totalorder %s63, %s64
      %p73 = scmp.eq.s32.totalorder %s32, 0
      %p74 = por %p72, %p73
      %p75 = scmp.ne.s32.totalorder %s63, %s64
      %p76 = scmp.eq.s32.totalorder %s33, 1
      %p77 = por %p75, %p76
      %p79 = scmp.ne.s32.totalorder %s64, %s78
      %p80 = scmp.eq.s32.totalorder %s33, 0
      %p81 = por %p79, %p80
      %s83 = sadd.s32 %s82, 1
      %p86 = scmp.eq.s32.totalorder %s27, 1
      %p87 = scmp.ne.s32.totalorder %s82, %s84
      %p88 = scmp.eq.s32.totalorder %s27, 0
      %p89 = por %p87, %p88
      %p90 = scmp.ne.s32.totalorder %s82, %s84
      %p91 = scmp.eq.s32.totalorder %s32, 1
      %p92 = por %p90, %p91
      %p93 = scmp.ne.s32.totalorder %s84, %s85
      %p94 = scmp.eq.s32.totalorder %s32, 0
      %p95 = por %p93, %p94
      %p96 = scmp.ne.s32.totalorder %s84, %s85
      %p97 = scmp.eq.s32.totalorder %s33, 1
      %p98 = por %p96, %p97
      %p100 = scmp.ne.s32.totalorder %s85, %s99
      %p101 = scmp.eq.s32.totalorder %s33, 0
      %p102 = por %p100, %p101
      %s104 = sadd.s32 %s103, 1
      %p107 = scmp.eq.s32.totalorder %s27, 1
      %p108 = scmp.ne.s32.totalorder %s103, %s105
      %p109 = scmp.eq.s32.totalorder %s27, 0
      %p110 = por %p108, %p109
      %p111 = scmp.ne.s32.totalorder %s103, %s105
      %p112 = scmp.eq.s32.totalorder %s32, 1
      %p113 = por %p111, %p112
      %p114 = scmp.ne.s32.totalorder %s105, %s106
      %p115 = scmp.eq.s32.totalorder %s32, 0
      %p116 = por %p114, %p115
      %p117 = scmp.ne.s32.totalorder %s105, %s106
      %p118 = scmp.eq.s32.totalorder %s33, 1
      %p119 = por %p117, %p118
      %p121 = scmp.ne.s32.totalorder %s106, %s120
      %p122 = scmp.eq.s32.totalorder %s33, 0
      %p123 = por %p121, %p122
      %s125 = sadd.s32 %s124, 1
      %p128 = scmp.eq.s32.totalorder %s27, 1
      %p129 = scmp.ne.s32.totalorder %s124, %s126
      %p130 = scmp.eq.s32.totalorder %s27, 0
      %p131 = por %p129, %p130
      %p132 = scmp.ne.s32.totalorder %s124, %s126
      %p133 = scmp.eq.s32.totalorder %s32, 1
      %p134 = por %p132, %p133
      %p135 = scmp.ne.s32.totalorder %s126, %s127
      %p136 = scmp.eq.s32.totalorder %s32, 0
      %p137 = por %p135, %p136
      %p138 = scmp.ne.s32.totalorder %s126, %s127
      %p139 = scmp.eq.s32.totalorder %s33, 1
      %p140 = por %p138, %p139
      %p142 = scmp.ne.s32.totalorder %s127, %s141
      %p143 = scmp.eq.s32.totalorder %s33, 0
      %p144 = por %p142, %p143
      %s146 = sadd.s32 %s145, 1
      %p149 = scmp.eq.s32.totalorder %s27, 1
      %p150 = scmp.ne.s32.totalorder %s145, %s147
      %p151 = scmp.eq.s32.totalorder %s27, 0
      %p152 = por %p150, %p151
      %p153 = scmp.ne.s32.totalorder %s145, %s147
      %p154 = scmp.eq.s32.totalorder %s32, 1
      %p155 = por %p153, %p154
      %p156 = scmp.ne.s32.totalorder %s147, %s148
      %p157 = scmp.eq.s32.totalorder %s32, 0
      %p158 = por %p156, %p157
      %p159 = scmp.ne.s32.totalorder %s147, %s148
      %p160 = scmp.eq.s32.totalorder %s33, 1
      %p161 = por %p159, %p160
      %p163 = scmp.ne.s32.totalorder %s148, %s162
      %p164 = scmp.eq.s32.totalorder %s33, 0
      %p165 = por %p163, %p164
      %s167 = sadd.s32 %s166, 1
      %p170 = scmp.eq.s32.totalorder %s27, 1
      %p171 = scmp.ne.s32.totalorder %s166, %s168
      %p172 = scmp.eq.s32.totalorder %s27, 0
      %p173 = por %p171, %p172
      %p174 = scmp.ne.s32.totalorder %s166, %s168
      %p175 = scmp.eq.s32.totalorder %s32, 1
      %p176 = por %p174, %p175
      %p177 = scmp.ne.s32.totalorder %s168, %s169
      %p178 = scmp.eq.s32.totalorder %s32, 0
      %p179 = por %p177, %p178
      %p180 = scmp.ne.s32.totalorder %s168, %s169
      %p181 = scmp.eq.s32.totalorder %s33, 1
      %p182 = por %p180, %p181
      %p184 = scmp.ne.s32.totalorder %s169, %s183
      %p185 = scmp.eq.s32.totalorder %s33, 0
      %p186 = por %p184, %p185
      %s188 = sadd.s32 %s187, 1
      %p191 = scmp.eq.s32.totalorder %s27, 1
      %p192 = scmp.ne.s32.totalorder %s187, %s189
      %p193 = scmp.eq.s32.totalorder %s27, 0
      %p194 = por %p192, %p193
      %p195 = scmp.ne.s32.totalorder %s187, %s189
      %p196 = scmp.eq.s32.totalorder %s32, 1
      %p197 = por %p195, %p196
      %p198 = scmp.ne.s32.totalorder %s189, %s190
      %p199 = scmp.eq.s32.totalorder %s32, 0
      %p200 = por %p198, %p199
      %p201 = scmp.ne.s32.totalorder %s189, %s190
      %p202 = scmp.eq.s32.totalorder %s33, 1
      %p203 = por %p201, %p202
      %p205 = scmp.ne.s32.totalorder %s190, %s204
      %p206 = scmp.eq.s32.totalorder %s33, 0
      %p207 = por %p205, %p206
      %s209 = sadd.s32 %s208, 1
      %p212 = scmp.eq.s32.totalorder %s27, 1
      %p213 = scmp.ne.s32.totalorder %s208, %s210
      %p214 = scmp.eq.s32.totalorder %s27, 0
      %p215 = por %p213, %p214
      %p216 = scmp.ne.s32.totalorder %s208, %s210
      %p217 = scmp.eq.s32.totalorder %s32, 1
      %p218 = por %p216, %p217
      %p219 = scmp.ne.s32.totalorder %s210, %s211
      %p220 = scmp.eq.s32.totalorder %s32, 0
      %p221 = por %p219, %p220
      %p222 = scmp.ne.s32.totalorder %s210, %s211
      %p223 = scmp.eq.s32.totalorder %s33, 1
      %p224 = por %p222, %p223
      %p226 = scmp.ne.s32.totalorder %s211, %s225
      %p227 = scmp.eq.s32.totalorder %s33, 0
      %p228 = por %p226, %p227
      %s230 = sadd.s32 %s229, 1
      %p233 = scmp.eq.s32.totalorder %s27, 1
      %p234 = scmp.ne.s32.totalorder %s229, %s231
      %p235 = scmp.eq.s32.totalorder %s27, 0
      %p236 = por %p234, %p235
      %p237 = scmp.ne.s32.totalorder %s229, %s231
      %p238 = scmp.eq.s32.totalorder %s32, 1
      %p239 = por %p237, %p238
      %p240 = scmp.ne.s32.totalorder %s231, %s232
      %p241 = scmp.eq.s32.totalorder %s32, 0
      %p242 = por %p240, %p241
      %p243 = scmp.ne.s32.totalorder %s231, %s232
      %p244 = scmp.eq.s32.totalorder %s33, 1
      %p245 = por %p243, %p244
      %p247 = scmp.ne.s32.totalorder %s232, %s246
      %p248 = scmp.eq.s32.totalorder %s33, 0
      %p249 = por %p247, %p248
      %s251 = sadd.s32 %s250, 1
      %p254 = scmp.eq.s32.totalorder %s27, 1
      %p255 = scmp.ne.s32.totalorder %s250, %s252
      %p256 = scmp.eq.s32.totalorder %s27, 0
      %p257 = por %p255, %p256
      %p258 = scmp.ne.s32.totalorder %s250, %s252
      %p259 = scmp.eq.s32.totalorder %s32, 1
      %p260 = por %p258, %p259
      %p261 = scmp.ne.s32.totalorder %s252, %s253
      %p262 = scmp.eq.s32.totalorder %s32, 0
      %p263 = por %p261, %p262
      %p264 = scmp.ne.s32.totalorder %s252, %s253
      %p265 = scmp.eq.s32.totalorder %s33, 1
      %p266 = por %p264, %p265
      %p268 = scmp.ne.s32.totalorder %s253, %s267
      %p269 = scmp.eq.s32.totalorder %s33, 0
      %p270 = por %p268, %p269
      %s272 = sadd.s32 %s271, 1
      %p275 = scmp.eq.s32.totalorder %s27, 1
      %p276 = scmp.ne.s32.totalorder %s271, %s273
      %p277 = scmp.eq.s32.totalorder %s27, 0
      %p278 = por %p276, %p277
      %p279 = scmp.ne.s32.totalorder %s271, %s273
      %p280 = scmp.eq.s32.totalorder %s32, 1
      %p281 = por %p279, %p280
      %p282 = scmp.ne.s32.totalorder %s273, %s274
      %p283 = scmp.eq.s32.totalorder %s32, 0
      %p284 = por %p282, %p283
      %p285 = scmp.ne.s32.totalorder %s273, %s274
      %p286 = scmp.eq.s32.totalorder %s33, 1
      %p287 = por %p285, %p286
      %p289 = scmp.ne.s32.totalorder %s274, %s288
      %p290 = scmp.eq.s32.totalorder %s33, 0
      %p291 = por %p289, %p290
      %s293 = sadd.s32 %s292, 1
      %p296 = scmp.eq.s32.totalorder %s27, 1
      %p297 = scmp.ne.s32.totalorder %s292, %s294
      %p298 = scmp.eq.s32.totalorder %s27, 0
      %p299 = por %p297, %p298
      %p300 = scmp.ne.s32.totalorder %s292, %s294
      %p301 = scmp.eq.s32.totalorder %s32, 1
      %p302 = por %p300, %p301
      %p303 = scmp.ne.s32.totalorder %s294, %s295
      %p304 = scmp.eq.s32.totalorder %s32, 0
      %p305 = por %p303, %p304
      %p306 = scmp.ne.s32.totalorder %s294, %s295
      %p307 = scmp.eq.s32.totalorder %s33, 1
      %p308 = por %p306, %p307
      %p310 = scmp.ne.s32.totalorder %s295, %s309
      %p311 = scmp.eq.s32.totalorder %s33, 0
      %p312 = por %p310, %p311
      %s313 = ssub.s32 %s27, %s34
      %p314 = scmp.eq.s32.totalorder %s313, 0
      %s316 = sadd.s32 %s315, 1
      %s317 = scalar_select %p314, %s315, %s316
      %p320 = pneg %p314
      %p321 = scmp.eq.s32.totalorder %s27, 1
      %p322 = por %p320, %p321
      %p323 = scmp.ne.s32.totalorder %s315, %s318
      %p324 = scmp.eq.s32.totalorder %s27, 0
      %p325 = por %p323, %p324
      %p326 = scmp.ne.s32.totalorder %s315, %s318
      %p327 = scmp.eq.s32.totalorder %s32, 1
      %p328 = por %p326, %p327
      %p329 = scmp.ne.s32.totalorder %s318, %s319
      %p330 = scmp.eq.s32.totalorder %s32, 0
      %p331 = por %p329, %p330
      %p332 = scmp.ne.s32.totalorder %s318, %s319
      %p333 = scmp.eq.s32.totalorder %s33, 1
      %p334 = por %p332, %p333
      %p336 = scmp.ne.s32.totalorder %s319, %s335
      %p337 = scmp.eq.s32.totalorder %s33, 0
      %p338 = por %p336, %p337
      %s339 = ssub.s32 %s27, %s34
      %p340 = scmp.eq.s32.totalorder %s339, 0
      %s342 = sadd.s32 %s341, 1
      %s343 = scalar_select %p340, %s341, %s342
      %p346 = pneg %p340
      %p347 = scmp.eq.s32.totalorder %s27, 1
      %p348 = por %p346, %p347
      %p349 = scmp.ne.s32.totalorder %s341, %s344
      %p350 = scmp.eq.s32.totalorder %s27, 0
      %p351 = por %p349, %p350
      %p352 = scmp.ne.s32.totalorder %s341, %s344
      %p353 = scmp.eq.s32.totalorder %s32, 1
      %p354 = por %p352, %p353
      %p355 = scmp.ne.s32.totalorder %s344, %s345
      %p356 = scmp.eq.s32.totalorder %s32, 0
      %p357 = por %p355, %p356
      %p358 = scmp.ne.s32.totalorder %s344, %s345
      %p359 = scmp.eq.s32.totalorder %s33, 1
      %p360 = por %p358, %p359
      %p362 = scmp.ne.s32.totalorder %s345, %s361
      %p363 = scmp.eq.s32.totalorder %s33, 0
      %p364 = por %p362, %p363
      %p365 = scmp.le.s32.totalorder 1, %s27
      %p366 = scmp.lt.s32.totalorder %s27, 3
      %p367 = pnand %p365, %p366
      %p368 = pneg %p367
      // Predicated region
      $region9: #{tpu_custom_call.1} parent=5 // pred_check
        _
      $region10: #{tpu_custom_call.1} parent=5 // pred_check_branch
        %370 = sbr.rel (%p367) target = $region12
      $region11: #{tpu_custom_call.1} parent=5 // pred_region
        %s371 = ssub.s32 %s27, 1
        // Predicated region
        $region13: #{tpu_custom_call.1} parent=11 // pred_check
          %p372 = pneg %p74
        $region14: #{tpu_custom_call.1} parent=11 // pred_check_branch
          %374 = sbr.rel (%p372) target = $region16
        $region15: #{tpu_custom_call.1} parent=11 // pred_region
          _
        $region16: #{tpu_custom_call.1} parent=11 // pred_fallthru
          _
        // Predicated region
        $region17: #{tpu_custom_call.1} parent=11 // pred_check
          %p375 = pneg %p95
        $region18: #{tpu_custom_call.1} parent=11 // pred_check_branch
          %377 = sbr.rel (%p375) target = $region20
        $region19: #{tpu_custom_call.1} parent=11 // pred_region
          _
        $region20: #{tpu_custom_call.1} parent=11 // pred_fallthru
          _
        // Predicated region
        $region21: #{tpu_custom_call.1} parent=11 // pred_check
          %p378 = pneg %p116
        $region22: #{tpu_custom_call.1} parent=11 // pred_check_branch
          %380 = sbr.rel (%p378) target = $region24
        $region23: #{tpu_custom_call.1} parent=11 // pred_region
          _
        $region24: #{tpu_custom_call.1} parent=11 // pred_fallthru
          _
        // Predicated region
        $region25: #{tpu_custom_call.1} parent=11 // pred_check
          %p381 = pneg %p137
        $region26: #{tpu_custom_call.1} parent=11 // pred_check_branch
          %383 = sbr.rel (%p381) target = $region28
        $region27: #{tpu_custom_call.1} parent=11 // pred_region
          _
        $region28: #{tpu_custom_call.1} parent=11 // pred_fallthru
          _
        // Predicated region
        $region29: #{tpu_custom_call.1} parent=11 // pred_check
          %p384 = pneg %p158
        $region30: #{tpu_custom_call.1} parent=11 // pred_check_branch
          %386 = sbr.rel (%p384) target = $region32
        $region31: #{tpu_custom_call.1} parent=11 // pred_region
          _
        $region32: #{tpu_custom_call.1} parent=11 // pred_fallthru
          _
        // Predicated region
        $region33: #{tpu_custom_call.1} parent=11 // pred_check
          %p387 = pneg %p179
        $region34: #{tpu_custom_call.1} parent=11 // pred_check_branch
          %389 = sbr.rel (%p387) target = $region36
        $region35: #{tpu_custom_call.1} parent=11 // pred_region
          _
        $region36: #{tpu_custom_call.1} parent=11 // pred_fallthru
          _
        // Predicated region
        $region37: #{tpu_custom_call.1} parent=11 // pred_check
          %p390 = pneg %p200
        $region38: #{tpu_custom_call.1} parent=11 // pred_check_branch
          %392 = sbr.rel (%p390) target = $region40
        $region39: #{tpu_custom_call.1} parent=11 // pred_region
          _
        $region40: #{tpu_custom_call.1} parent=11 // pred_fallthru
          _
        // Predicated region
        $region41: #{tpu_custom_call.1} parent=11 // pred_check
          %p393 = pneg %p221
        $region42: #{tpu_custom_call.1} parent=11 // pred_check_branch
          %395 = sbr.rel (%p393) target = $region44
        $region43: #{tpu_custom_call.1} parent=11 // pred_region
          _
        $region44: #{tpu_custom_call.1} parent=11 // pred_fallthru
          _
        // Predicated region
        $region45: #{tpu_custom_call.1} parent=11 // pred_check
          %p396 = pneg %p242
        $region46: #{tpu_custom_call.1} parent=11 // pred_check_branch
          %398 = sbr.rel (%p396) target = $region48
        $region47: #{tpu_custom_call.1} parent=11 // pred_region
          _
        $region48: #{tpu_custom_call.1} parent=11 // pred_fallthru
          _
        // Predicated region
        $region49: #{tpu_custom_call.1} parent=11 // pred_check
          %p399 = pneg %p263
        $region50: #{tpu_custom_call.1} parent=11 // pred_check_branch
          %401 = sbr.rel (%p399) target = $region52
        $region51: #{tpu_custom_call.1} parent=11 // pred_region
          _
        $region52: #{tpu_custom_call.1} parent=11 // pred_fallthru
          _
        // Predicated region
        $region53: #{tpu_custom_call.1} parent=11 // pred_check
          %p402 = pneg %p284
        $region54: #{tpu_custom_call.1} parent=11 // pred_check_branch
          %404 = sbr.rel (%p402) target = $region56
        $region55: #{tpu_custom_call.1} parent=11 // pred_region
          _
        $region56: #{tpu_custom_call.1} parent=11 // pred_fallthru
          _
        // Predicated region
        $region57: #{tpu_custom_call.1} parent=11 // pred_check
          %p405 = pneg %p305
        $region58: #{tpu_custom_call.1} parent=11 // pred_check_branch
          %407 = sbr.rel (%p405) target = $region60
        $region59: #{tpu_custom_call.1} parent=11 // pred_region
          _
        $region60: #{tpu_custom_call.1} parent=11 // pred_fallthru
          _
      $region12: #{tpu_custom_call.1} parent=5 // pred_fallthru
        _
      %p408 = scmp.lt.s32.totalorder %s27, 2
      // Predicated region
      $region61: #{tpu_custom_call.1} parent=5 // pred_check
        %p409 = pneg %p408
      $region62: #{tpu_custom_call.1} parent=5 // pred_check_branch
        %411 = sbr.rel (%p409) target = $region64
      $region63: #{tpu_custom_call.1} parent=5 // pred_region
        // Predicated region
        $region65: #{tpu_custom_call.1} parent=63 // pred_check
          %p412 = pneg %p47
        $region66: #{tpu_custom_call.1} parent=63 // pred_check_branch
          %414 = sbr.rel (%p412) target = $region68
        $region67: #{tpu_custom_call.1} parent=63 // pred_region
          %p415 = scmp.lt.s32.totalorder %s27, 1
          %s416 = scalar_select %p415, %s27, 1
          %s417 = smul.addr %s416, 8
          %s418 = scalar_lea.vmem %s0, %s417
        $region68: #{tpu_custom_call.1} parent=63 // pred_fallthru
          _
      $region64: #{tpu_custom_call.1} parent=5 // pred_fallthru
        _
      %p419 = scmp.le.s32.totalorder 1, %s27
      %p420 = scmp.lt.s32.totalorder %s27, 3
      %p421 = pnand %p419, %p420
      %p422 = pneg %p421
      // Predicated region
      $region69: #{tpu_custom_call.1} parent=5 // pred_check
        _
      $region70: #{tpu_custom_call.1} parent=5 // pred_check_branch
        %424 = sbr.rel (%p421) target = $region72
      $region71: #{tpu_custom_call.1} parent=5 // pred_region
        %s425 = ssub.s32 %s27, 1
        %p426 = scmp.lt.s32.totalorder %s32, 1
        %s427 = scalar_select %p426, %s32, 1
        %s428 = smul.addr %s427, 8
        %s429 = scalar_lea.vmem %s0, %s428
        %p430 = pneg %p53
        %p431 = pneg %p50
        %p432 = pneg %p74
        %p433 = pneg %p71
        %p434 = pneg %p95
        %p435 = pneg %p92
        %p436 = pneg %p116
        %p437 = pneg %p113
        %p438 = pneg %p137
        %p439 = pneg %p134
        %p440 = pneg %p158
        %p441 = pneg %p155
        %p442 = pneg %p179
        %p443 = pneg %p176
        %p444 = pneg %p200
        %p445 = pneg %p197
        %p446 = pneg %p221
        %p447 = pneg %p218
        %p448 = pneg %p242
        %p449 = pneg %p239
        %p450 = pneg %p263
        %p451 = pneg %p260
        %p452 = pneg %p284
        %p453 = pneg %p281
        %p454 = pneg %p305
        %p455 = pneg %p302
        %p456 = pneg %p331
        %p457 = pneg %p328
        %s458 = sand.u32 %s318, 1
        %s459 = scalar_lea.sflag [#allocation3], %s458
        %s460 = sand.u32 %s318, 1
        %s461 = smul.addr %s460, 8
        %s462 = scalar_lea.vmem [#allocation2], %s461
        %p463 = pneg %p357
        %p464 = pneg %p354
        %s465 = sand.u32 %s344, 1
        %s466 = scalar_lea.sflag [#allocation5], %s465
        %s467 = sand.u32 %s344, 1
        %s468 = smul.addr %s467, 8
        %s469 = scalar_lea.vmem [#allocation4], %s468
        %p470 = scmp.lt.s32.totalorder %s32, 1
        %s471 = scalar_select %p470, %s32, 1
        %s472 = smul.addr %s471, 8
        %s473 = scalar_lea.vmem %s0, %s472
        %v475 = vld [vmem:[%s473] sm:$0xff]
        %v476 = vld [vmem:[%s1] sm:$0x1]
        %v477 = vld [vmem:[%s2] sm:$0x1]
        %vm478 = vcmask 261120
        %v479 = vsel %vm478, %v475, 0.0
        %480 = vadd.xlane.f32.xlu0 %v479
        %v481 = vpop.xlane.xlu0 %480
        %v482 = vrcp.pop 32.0
        %v483 = vmul.f32 %v481, %v482
        %v484 = vsub.f32 %v475, %v483
        %v485 = vmul.f32 %v484, %v484
        %v486 = vsel %vm478, %v485, 0.0
        %487 = vadd.xlane.f32.xlu0 %v486
        %v488 = vpop.xlane.xlu0 %487
        %v489 = vmul.f32 %v488, %v482
        %v490 = vadd.f32 %v489, 1e-05
        %v491 = vrsqrt.pop %v490
        %v492 = vmul.f32 %v484, %v491
        %v494 = vlaneseq
        %v495 = vshrl.u32 %v494, 7
        %v496 = vsub.s32 0, %v495
        %v497 = vrot.slane %v476, %v496
        %v499 = vmul.f32 %v492, %v497
        %v501 = vlaneseq
        %v502 = vshrl.u32 %v501, 7
        %v503 = vsub.s32 0, %v502
        %v504 = vrot.slane %v477, %v503
        %v506 = vadd.f32 %v499, %v504
        %v507 = vpack.c.bf16 %v506, %v506
        %v508 = vld [vmem:[%s3] sm:$0xf]
        %v509 = vld [vmem:[%s3 + $0x4] sm:$0xf]
        %v510 = vld [vmem:[%s3 + $0x8] sm:$0xf]
        %v511 = vld [vmem:[%s3 + $0xc] sm:$0xf]
        %v512 = vld [vmem:[%s4] sm:$0x1]
        %v514 = vlaneseq
        %v515 = vshrl.u32 %v514, 7
        %v516 = vsub.s32 0, %v515
        %v517 = vrot.slane %v512, %v516
        %v523 = vunpack.c.l.b16 %v508
        %v524 = vunpack.c.l.b16 %v509
        %v525 = vunpack.c.l.b16 %v510
        %v526 = vunpack.c.l.b16 %v511
        %v527 = vpack.c.b16 %v524, %v523
        %v528 = vpack.c.b16 %v526, %v525
        %v532 = vsel %vm478, %v507, 0
        %534 = vmatprep.subr.bf16.mxu0 0
        %535 = vmatpush1.bf16.msra.mxu0 %v527
        %536 = vmatprep.subr.bf16.mxu0 0
        %537 = vmatpush1.bf16.msra.mxu0 %v528
        %538 = vmatprep.subr.bf16.mxu0 0
        %539 = vmatpush1.bf16.msra.mxu0 0
        %540 = vmatprep.subr.bf16.mxu0 0
        %541 = vmatpush1.bf16.msra.mxu0 0
        %542 = vmatprep.subr.bf16.mxu0 0
        %543 = vmatpush1.bf16.msra.mxu0 0
        %544 = vmatprep.subr.bf16.mxu0 0
        %545 = vmatpush1.bf16.msra.mxu0 0
        %546 = vmatprep.subr.bf16.mxu0 0
        %547 = vmatpush1.bf16.msra.mxu0 0
        %548 = vmatprep.subr.bf16.mxu0 0
        %549 = vmatpush1.bf16.msra.mxu0 0
        %550 = vmatprep.subr.bf16.mxu0 0
        %551 = vmatpush1.bf16.msra.mxu0 0
        %552 = vmatprep.subr.bf16.mxu0 0
        %553 = vmatpush1.bf16.msra.mxu0 0
        %554 = vmatprep.subr.bf16.mxu0 0
        %555 = vmatpush1.bf16.msra.mxu0 0
        %556 = vmatprep.subr.bf16.mxu0 0
        %557 = vmatpush1.bf16.msra.mxu0 0
        %558 = vmatprep.subr.bf16.mxu0 0
        %559 = vmatpush1.bf16.msra.mxu0 0
        %560 = vmatprep.subr.bf16.mxu0 0
        %561 = vmatpush1.bf16.msra.mxu0 0
        %562 = vmatprep.subr.bf16.mxu0 0
        %563 = vmatpush1.bf16.msra.mxu0 0
        %564 = vmatprep.subr.bf16.mxu0 0
        %565 = vmatpush1.bf16.msra.mxu0 0
        %566 = vmatprep.mubr.bf16.mxu0 0
        %567 = vmatmul.mubr.bf16.gmra.mrb[0].mxu0 %v532
        %v568 = vpop.f32.mrb[0].mxu0
        %v569 = vadd.f32 %v517, %v568
        %v570 = vpop.f32.mrb[0].mxu0
        %v571 = vpop.f32.mrb[0].mxu0
        %v572 = vpop.f32.mrb[0].mxu0
        %573 = vdwg.mxu0
        %v574 = vpack.c.bf16 %v569, %v569
        %576 = vrot.lane.b32.xlu0 %v574, 96
        %v577 = vpop.permute.xlu0 %576
        %vm578 = vcmask 64512
        %v580 = vsel %vm578, %v574, 0
        %v583 = vsel %vm578, %v577, 0
        %585 = vmatprep.subr.bf16.mxu0 0
        %586 = vmatpush1.bf16.xpose.msra.mxu0 %v583
        %587 = vmatprep.subr.bf16.mxu0 0
        %588 = vmatpush1.bf16.xpose.msra.mxu0 0
        %589 = vmatprep.subr.bf16.mxu0 0
        %590 = vmatpush1.bf16.xpose.msra.mxu0 0
        %591 = vmatprep.subr.bf16.mxu0 0
        %592 = vmatpush1.bf16.xpose.msra.mxu0 0
        %593 = vmatprep.subr.bf16.mxu0 0
        %594 = vmatpush1.bf16.xpose.msra.mxu0 0
        %595 = vmatprep.subr.bf16.mxu0 0
        %596 = vmatpush1.bf16.xpose.msra.mxu0 0
        %597 = vmatprep.subr.bf16.mxu0 0
        %598 = vmatpush1.bf16.xpose.msra.mxu0 0
        %599 = vmatprep.subr.bf16.mxu0 0
        %600 = vmatpush1.bf16.xpose.msra.mxu0 0
        %601 = vmatprep.subr.bf16.mxu0 0
        %602 = vmatpush1.bf16.xpose.msra.mxu0 0
        %603 = vmatprep.subr.bf16.mxu0 0
        %604 = vmatpush1.bf16.xpose.msra.mxu0 0
        %605 = vmatprep.subr.bf16.mxu0 0
        %606 = vmatpush1.bf16.xpose.msra.mxu0 0
        %607 = vmatprep.subr.bf16.mxu0 0
        %608 = vmatpush1.bf16.xpose.msra.mxu0 0
        %609 = vmatprep.subr.bf16.mxu0 0
        %610 = vmatpush1.bf16.xpose.msra.mxu0 0
        %611 = vmatprep.subr.bf16.mxu0 0
        %612 = vmatpush1.bf16.xpose.msra.mxu0 0
        %613 = vmatprep.subr.bf16.mxu0 0
        %614 = vmatpush1.bf16.xpose.msra.mxu0 0
        %615 = vmatprep.subr.bf16.mxu0 0
        %616 = vmatpush1.bf16.xpose.msra.mxu0 0
        %617 = vmatprep.mubr.bf16.mxu0 0
        %618 = vmatmul.mubr.bf16.gmra.mrb[0].mxu0 %v580
        %v619 = vpop.f32.mrb[0].mxu0
        %v620 = vadd.f32 0.0, %v619
        %v621 = vpop.f32.mrb[0].mxu0
        %v622 = vpop.f32.mrb[0].mxu0
        %v623 = vpop.f32.mrb[0].mxu0
        %624 = vdwg.mxu0
        %v625 = vsel %vm578, %v620, -inf
        %626 = vmax.xlane.f32.xlu0 %v625
        %v627 = vpop.xlane.xlu0 %626
        %v628 = vsub.f32 %v620, %v627
        %v629 = vmul.f32 %v628, 1.442695
        %v630 = vpow.pop %v629
        %v631 = vsel %vm578, %v630, 0.0
        %632 = vadd.xlane.f32.xlu0 %v631
        %v633 = vpop.xlane.xlu0 %632
        %v634 = vrcp.pop %v633
        %v635 = vmul.f32 %v630, %v634
        %v636 = vadd.f32 %v635, 0.0
        %v637 = vpack.c.bf16 %v635, %v635
        %638 = vrot.lane.b32.xlu0 %v574, 64
        %v639 = vpop.permute.xlu0 %638
        %v641 = vsel %vm578, %v637, 0
        %vm643 = vcmask 1043456
        %v645 = vsel %vm643, %v639, 0
        %647 = vmatprep.subr.bf16.mxu0 0
        %648 = vmatpush1.bf16.msra.mxu0 %v645
        %649 = vmatprep.subr.bf16.mxu0 0
        %650 = vmatpush1.bf16.msra.mxu0 0
        %651 = vmatprep.subr.bf16.mxu0 0
        %652 = vmatpush1.bf16.msra.mxu0 0
        %653 = vmatprep.subr.bf16.mxu0 0
        %654 = vmatpush1.bf16.msra.mxu0 0
        %655 = vmatprep.subr.bf16.mxu0 0
        %656 = vmatpush1.bf16.msra.mxu0 0
        %657 = vmatprep.subr.bf16.mxu0 0
        %658 = vmatpush1.bf16.msra.mxu0 0
        %659 = vmatprep.subr.bf16.mxu0 0
        %660 = vmatpush1.bf16.msra.mxu0 0
        %661 = vmatprep.subr.bf16.mxu0 0
        %662 = vmatpush1.bf16.msra.mxu0 0
        %663 = vmatprep.subr.bf16.mxu0 0
        %664 = vmatpush1.bf16.msra.mxu0 0
        %665 = vmatprep.subr.bf16.mxu0 0
        %666 = vmatpush1.bf16.msra.mxu0 0
        %667 = vmatprep.subr.bf16.mxu0 0
        %668 = vmatpush1.bf16.msra.mxu0 0
        %669 = vmatprep.subr.bf16.mxu0 0
        %670 = vmatpush1.bf16.msra.mxu0 0
        %671 = vmatprep.subr.bf16.mxu0 0
        %672 = vmatpush1.bf16.msra.mxu0 0
        %673 = vmatprep.subr.bf16.mxu0 0
        %674 = vmatpush1.bf16.msra.mxu0 0
        %675 = vmatprep.subr.bf16.mxu0 0
        %676 = vmatpush1.bf16.msra.mxu0 0
        %677 = vmatprep.subr.bf16.mxu0 0
        %678 = vmatpush1.bf16.msra.mxu0 0
        %679 = vmatprep.mubr.bf16.mxu0 0
        %680 = vmatmul.mubr.bf16.gmra.mrb[0].mxu0 %v641
        %v681 = vpop.f32.mrb[0].mxu0
        %v682 = vadd.f32 0.0, %v681
        %v683 = vpop.f32.mrb[0].mxu0
        %v684 = vpop.f32.mrb[0].mxu0
        %v685 = vpop.f32.mrb[0].mxu0
        %686 = vdwg.mxu0
        %v687 = vpack.c.bf16 %v682, %v682
        %v688 = vld [vmem:[%s5] sm:$0xf]
        %689 = vrot.lane.b32.xlu0 %v574, 120
        %v690 = vpop.permute.xlu0 %689
        %691 = vrot.lane.b32.xlu0 %v574, 88
        %v692 = vpop.permute.xlu0 %691
        %v694 = vsel %vm578, %v690, 0
        %v697 = vsel %vm578, %v692, 0
        %699 = vmatprep.subr.bf16.mxu0 0
        %700 = vmatpush1.bf16.xpose.msra.mxu0 %v697
        %701 = vmatprep.subr.bf16.mxu0 0
        %702 = vmatpush1.bf16.xpose.msra.mxu0 0
        %703 = vmatprep.subr.bf16.mxu0 0
        %704 = vmatpush1.bf16.xpose.msra.mxu0 0
        %705 = vmatprep.subr.bf16.mxu0 0
        %706 = vmatpush1.bf16.xpose.msra.mxu0 0
        %707 = vmatprep.subr.bf16.mxu0 0
        %708 = vmatpush1.bf16.xpose.msra.mxu0 0
        %709 = vmatprep.subr.bf16.mxu0 0
        %710 = vmatpush1.bf16.xpose.msra.mxu0 0
        %711 = vmatprep.subr.bf16.mxu0 0
        %712 = vmatpush1.bf16.xpose.msra.mxu0 0
        %713 = vmatprep.subr.bf16.mxu0 0
        %714 = vmatpush1.bf16.xpose.msra.mxu0 0
        %715 = vmatprep.subr.bf16.mxu0 0
        %716 = vmatpush1.bf16.xpose.msra.mxu0 0
        %717 = vmatprep.subr.bf16.mxu0 0
        %718 = vmatpush1.bf16.xpose.msra.mxu0 0
        %719 = vmatprep.subr.bf16.mxu0 0
        %720 = vmatpush1.bf16.xpose.msra.mxu0 0
        %721 = vmatprep.subr.bf16.mxu0 0
        %722 = vmatpush1.bf16.xpose.msra.mxu0 0
        %723 = vmatprep.subr.bf16.mxu0 0
        %724 = vmatpush1.bf16.xpose.msra.mxu0 0
        %725 = vmatprep.subr.bf16.mxu0 0
        %726 = vmatpush1.bf16.xpose.msra.mxu0 0
        %727 = vmatprep.subr.bf16.mxu0 0
        %728 = vmatpush1.bf16.xpose.msra.mxu0 0
        %729 = vmatprep.subr.bf16.mxu0 0
        %730 = vmatpush1.bf16.xpose.msra.mxu0 0
        %731 = vmatprep.mubr.bf16.mxu0 0
        %732 = vmatmul.mubr.bf16.gmra.mrb[0].mxu0 %v694
        %v733 = vpop.f32.mrb[0].mxu0
        %v734 = vadd.f32 0.0, %v733
        %v735 = vpop.f32.mrb[0].mxu0
        %v736 = vpop.f32.mrb[0].mxu0
        %v737 = vpop.f32.mrb[0].mxu0
        %738 = vdwg.mxu0
        %v739 = vsel %vm578, %v734, -inf
        %740 = vmax.xlane.f32.xlu0 %v739
        %v741 = vpop.xlane.xlu0 %740
        %v742 = vsub.f32 %v734, %v741
        %v743 = vmul.f32 %v742, 1.442695
        %v744 = vpow.pop %v743
        %v745 = vsel %vm578, %v744, 0.0
        %746 = vadd.xlane.f32.xlu0 %v745
        %v747 = vpop.xlane.xlu0 %746
        %v748 = vrcp.pop %v747
        %v749 = vmul.f32 %v744, %v748
        %v750 = vadd.f32 %v636, %v749
        %v751 = vpack.c.bf16 %v749, %v749
        %752 = vrot.lane.b32.xlu0 %v574, 56
        %v753 = vpop.permute.xlu0 %752
        %v755 = vsel %vm578, %v751, 0
        %v758 = vsel %vm643, %v753, 0
        %760 = vmatprep.subr.bf16.mxu0 0
        %761 = vmatpush1.bf16.msra.mxu0 %v758
        %762 = vmatprep.subr.bf16.mxu0 0
        %763 = vmatpush1.bf16.msra.mxu0 0
        %764 = vmatprep.subr.bf16.mxu0 0
        %765 = vmatpush1.bf16.msra.mxu0 0
        %766 = vmatprep.subr.bf16.mxu0 0
        %767 = vmatpush1.bf16.msra.mxu0 0
        %768 = vmatprep.subr.bf16.mxu0 0
        %769 = vmatpush1.bf16.msra.mxu0 0
        %770 = vmatprep.subr.bf16.mxu0 0
        %771 = vmatpush1.bf16.msra.mxu0 0
        %772 = vmatprep.subr.bf16.mxu0 0
        %773 = vmatpush1.bf16.msra.mxu0 0
        %774 = vmatprep.subr.bf16.mxu0 0
        %775 = vmatpush1.bf16.msra.mxu0 0
        %776 = vmatprep.subr.bf16.mxu0 0
        %777 = vmatpush1.bf16.msra.mxu0 0
        %778 = vmatprep.subr.bf16.mxu0 0
        %779 = vmatpush1.bf16.msra.mxu0 0
        %780 = vmatprep.subr.bf16.mxu0 0
        %781 = vmatpush1.bf16.msra.mxu0 0
        %782 = vmatprep.subr.bf16.mxu0 0
        %783 = vmatpush1.bf16.msra.mxu0 0
        %784 = vmatprep.subr.bf16.mxu0 0
        %785 = vmatpush1.bf16.msra.mxu0 0
        %786 = vmatprep.subr.bf16.mxu0 0
        %787 = vmatpush1.bf16.msra.mxu0 0
        %788 = vmatprep.subr.bf16.mxu0 0
        %789 = vmatpush1.bf16.msra.mxu0 0
        %790 = vmatprep.subr.bf16.mxu0 0
        %791 = vmatpush1.bf16.msra.mxu0 0
        %792 = vmatprep.mubr.bf16.mxu0 0
        %793 = vmatmul.mubr.bf16.gmra.mrb[0].mxu0 %v755
        %v794 = vpop.f32.mrb[0].mxu0
        %v795 = vadd.f32 0.0, %v794
        %v796 = vpop.f32.mrb[0].mxu0
        %v797 = vpop.f32.mrb[0].mxu0
        %v798 = vpop.f32.mrb[0].mxu0
        %799 = vdwg.mxu0
        %v800 = vpack.c.bf16 %v795, %v795
        %v801 = vld [vmem:[%s5 + $0x4] sm:$0xf]
        %v803 = vsel %vm578, %v800, 0
        %v806 = vsel %vm643, %v801, 0
        %808 = vmatprep.subr.bf16.mxu0 0
        %809 = vmatpush1.bf16.msra.mxu0 %v806
        %810 = vmatprep.subr.bf16.mxu0 0
        %811 = vmatpush1.bf16.msra.mxu0 0
        %812 = vmatprep.subr.bf16.mxu0 0
        %813 = vmatpush1.bf16.msra.mxu0 0
        %814 = vmatprep.subr.bf16.mxu0 0
        %815 = vmatpush1.bf16.msra.mxu0 0
        %816 = vmatprep.subr.bf16.mxu0 0
        %817 = vmatpush1.bf16.msra.mxu0 0
        %818 = vmatprep.subr.bf16.mxu0 0
        %819 = vmatpush1.bf16.msra.mxu0 0
        %820 = vmatprep.subr.bf16.mxu0 0
        %821 = vmatpush1.bf16.msra.mxu0 0
        %822 = vmatprep.subr.bf16.mxu0 0
        %823 = vmatpush1.bf16.msra.mxu0 0
        %824 = vmatprep.subr.bf16.mxu0 0
        %825 = vmatpush1.bf16.msra.mxu0 0
        %826 = vmatprep.subr.bf16.mxu0 0
        %827 = vmatpush1.bf16.msra.mxu0 0
        %828 = vmatprep.subr.bf16.mxu0 0
        %829 = vmatpush1.bf16.msra.mxu0 0
        %830 = vmatprep.subr.bf16.mxu0 0
        %831 = vmatpush1.bf16.msra.mxu0 0
        %832 = vmatprep.subr.bf16.mxu0 0
        %833 = vmatpush1.bf16.msra.mxu0 0
        %834 = vmatprep.subr.bf16.mxu0 0
        %835 = vmatpush1.bf16.msra.mxu0 0
        %836 = vmatprep.subr.bf16.mxu0 0
        %837 = vmatpush1.bf16.msra.mxu0 0
        %838 = vmatprep.subr.bf16.mxu0 0
        %839 = vmatpush1.bf16.msra.mxu0 0
        %840 = vmatprep.mubr.bf16.mxu0 0
        %841 = vmatmul.mubr.bf16.gmra.mrb[0].mxu0 %v803
        %v842 = vpop.f32.mrb[0].mxu0
        %v843 = vadd.f32 0.0, %v842
        %v844 = vpop.f32.mrb[0].mxu0
        %v845 = vpop.f32.mrb[0].mxu0
        %v846 = vpop.f32.mrb[0].mxu0
        %847 = vdwg.mxu0
        %v849 = vsel %vm578, %v687, 0
        %v852 = vsel %vm643, %v688, 0
        %854 = vmatprep.subr.bf16.mxu0 0
        %855 = vmatpush1.bf16.msra.mxu0 %v852
        %856 = vmatprep.subr.bf16.mxu0 0
        %857 = vmatpush1.bf16.msra.mxu0 0
        %858 = vmatprep.subr.bf16.mxu0 0
        %859 = vmatpush1.bf16.msra.mxu0 0
        %860 = vmatprep.subr.bf16.mxu0 0
        %861 = vmatpush1.bf16.msra.mxu0 0
        %862 = vmatprep.subr.bf16.mxu0 0
        %863 = vmatpush1.bf16.msra.mxu0 0
        %864 = vmatprep.subr.bf16.mxu0 0
        %865 = vmatpush1.bf16.msra.mxu0 0
        %866 = vmatprep.subr.bf16.mxu0 0
        %867 = vmatpush1.bf16.msra.mxu0 0
        %868 = vmatprep.subr.bf16.mxu0 0
        %869 = vmatpush1.bf16.msra.mxu0 0
        %870 = vmatprep.subr.bf16.mxu0 0
        %871 = vmatpush1.bf16.msra.mxu0 0
        %872 = vmatprep.subr.bf16.mxu0 0
        %873 = vmatpush1.bf16.msra.mxu0 0
        %874 = vmatprep.subr.bf16.mxu0 0
        %875 = vmatpush1.bf16.msra.mxu0 0
        %876 = vmatprep.subr.bf16.mxu0 0
        %877 = vmatpush1.bf16.msra.mxu0 0
        %878 = vmatprep.subr.bf16.mxu0 0
        %879 = vmatpush1.bf16.msra.mxu0 0
        %880 = vmatprep.subr.bf16.mxu0 0
        %881 = vmatpush1.bf16.msra.mxu0 0
        %882 = vmatprep.subr.bf16.mxu0 0
        %883 = vmatpush1.bf16.msra.mxu0 0
        %884 = vmatprep.subr.bf16.mxu0 0
        %885 = vmatpush1.bf16.msra.mxu0 0
        %886 = vmatprep.mubr.bf16.mxu0 0
        %887 = vmatmul.mubr.bf16.gmra.mrb[0].mxu0 %v849
        %v888 = vpop.f32.mrb[0].mxu0
        %v889 = vadd.f32 %v843, %v888
        %v890 = vpop.f32.mrb[0].mxu0
        %v891 = vpop.f32.mrb[0].mxu0
        %v892 = vpop.f32.mrb[0].mxu0
        %893 = vdwg.mxu0
        %894 = vrot.lane.b32.xlu0 %v574, 112
        %v895 = vpop.permute.xlu0 %894
        %896 = vrot.lane.b32.xlu0 %v574, 80
        %v897 = vpop.permute.xlu0 %896
        %v899 = vsel %vm578, %v895, 0
        %v902 = vsel %vm578, %v897, 0
        %904 = vmatprep.subr.bf16.mxu0 0
        %905 = vmatpush1.bf16.xpose.msra.mxu0 %v902
        %906 = vmatprep.subr.bf16.mxu0 0
        %907 = vmatpush1.bf16.xpose.msra.mxu0 0
        %908 = vmatprep.subr.bf16.mxu0 0
        %909 = vmatpush1.bf16.xpose.msra.mxu0 0
        %910 = vmatprep.subr.bf16.mxu0 0
        %911 = vmatpush1.bf16.xpose.msra.mxu0 0
        %912 = vmatprep.subr.bf16.mxu0 0
        %913 = vmatpush1.bf16.xpose.msra.mxu0 0
        %914 = vmatprep.subr.bf16.mxu0 0
        %915 = vmatpush1.bf16.xpose.msra.mxu0 0
        %916 = vmatprep.subr.bf16.mxu0 0
        %917 = vmatpush1.bf16.xpose.msra.mxu0 0
        %918 = vmatprep.subr.bf16.mxu0 0
        %919 = vmatpush1.bf16.xpose.msra.mxu0 0
        %920 = vmatprep.subr.bf16.mxu0 0
        %921 = vmatpush1.bf16.xpose.msra.mxu0 0
        %922 = vmatprep.subr.bf16.mxu0 0
        %923 = vmatpush1.bf16.xpose.msra.mxu0 0
        %924 = vmatprep.subr.bf16.mxu0 0
        %925 = vmatpush1.bf16.xpose.msra.mxu0 0
        %926 = vmatprep.subr.bf16.mxu0 0
        %927 = vmatpush1.bf16.xpose.msra.mxu0 0
        %928 = vmatprep.subr.bf16.mxu0 0
        %929 = vmatpush1.bf16.xpose.msra.mxu0 0
        %930 = vmatprep.subr.bf16.mxu0 0
        %931 = vmatpush1.bf16.xpose.msra.mxu0 0
        %932 = vmatprep.subr.bf16.mxu0 0
        %933 = vmatpush1.bf16.xpose.msra.mxu0 0
        %934 = vmatprep.subr.bf16.mxu0 0
        %935 = vmatpush1.bf16.xpose.msra.mxu0 0
        %936 = vmatprep.mubr.bf16.mxu0 0
        %937 = vmatmul.mubr.bf16.gmra.mrb[0].mxu0 %v899
        %v938 = vpop.f32.mrb[0].mxu0
        %v939 = vadd.f32 0.0, %v938
        %v940 = vpop.f32.mrb[0].mxu0
        %v941 = vpop.f32.mrb[0].mxu0
        %v942 = vpop.f32.mrb[0].mxu0
        %943 = vdwg.mxu0
        %v944 = vsel %vm578, %v939, -inf
        %945 = vmax.xlane.f32.xlu0 %v944
        %v946 = vpop.xlane.xlu0 %945
        %v947 = vsub.f32 %v939, %v946
        %v948 = vmul.f32 %v947, 1.442695
        %v949 = vpow.pop %v948
        %v950 = vsel %vm578, %v949, 0.0
        %951 = vadd.xlane.f32.xlu0 %v950
        %v952 = vpop.xlane.xlu0 %951
        %v953 = vrcp.pop %v952
        %v954 = vmul.f32 %v949, %v953
        %v955 = vadd.f32 %v750, %v954
        %v956 = vpack.c.bf16 %v954, %v954
        %957 = vrot.lane.b32.xlu0 %v574, 48
        %v958 = vpop.permute.xlu0 %957
        %v960 = vsel %vm578, %v956, 0
        %v963 = vsel %vm643, %v958, 0
        %965 = vmatprep.subr.bf16.mxu0 0
        %966 = vmatpush1.bf16.msra.mxu0 %v963
        %967 = vmatprep.subr.bf16.mxu0 0
        %968 = vmatpush1.bf16.msra.mxu0 0
        %969 = vmatprep.subr.bf16.mxu0 0
        %970 = vmatpush1.bf16.msra.mxu0 0
        %971 = vmatprep.subr.bf16.mxu0 0
        %972 = vmatpush1.bf16.msra.mxu0 0
        %973 = vmatprep.subr.bf16.mxu0 0
        %974 = vmatpush1.bf16.msra.mxu0 0
        %975 = vmatprep.subr.bf16.mxu0 0
        %976 = vmatpush1.bf16.msra.mxu0 0
        %977 = vmatprep.subr.bf16.mxu0 0
        %978 = vmatpush1.bf16.msra.mxu0 0
        %979 = vmatprep.subr.bf16.mxu0 0
        %980 = vmatpush1.bf16.msra.mxu0 0
        %981 = vmatprep.subr.bf16.mxu0 0
        %982 = vmatpush1.bf16.msra.mxu0 0
        %983 = vmatprep.subr.bf16.mxu0 0
        %984 = vmatpush1.bf16.msra.mxu0 0
        %985 = vmatprep.subr.bf16.mxu0 0
        %986 = vmatpush1.bf16.msra.mxu0 0
        %987 = vmatprep.subr.bf16.mxu0 0
        %988 = vmatpush1.bf16.msra.mxu0 0
        %989 = vmatprep.subr.bf16.mxu0 0
        %990 = vmatpush1.bf16.msra.mxu0 0
        %991 = vmatprep.subr.bf16.mxu0 0
        %992 = vmatpush1.bf16.msra.mxu0 0
        %993 = vmatprep.subr.bf16.mxu0 0
        %994 = vmatpush1.bf16.msra.mxu0 0
        %995 = vmatprep.subr.bf16.mxu0 0
        %996 = vmatpush1.bf16.msra.mxu0 0
        %997 = vmatprep.mubr.bf16.mxu0 0
        %998 = vmatmul.mubr.bf16.gmra.mrb[0].mxu0 %v960
        %v999 = vpop.f32.mrb[0].mxu0
        %v1000 = vadd.f32 0.0, %v999
        %v1001 = vpop.f32.mrb[0].mxu0
        %v1002 = vpop.f32.mrb[0].mxu0
        %v1003 = vpop.f32.mrb[0].mxu0
        %1004 = vdwg.mxu0
        %v1005 = vpack.c.bf16 %v1000, %v1000
        %v1006 = vld [vmem:[%s5 + $0x8] sm:$0xf]
        %v1008 = vsel %vm578, %v1005, 0
        %v1011 = vsel %vm643, %v1006, 0
        %1013 = vmatprep.subr.bf16.mxu0 0
        %1014 = vmatpush1.bf16.msra.mxu0 %v1011
        %1015 = vmatprep.subr.bf16.mxu0 0
        %1016 = vmatpush1.bf16.msra.mxu0 0
        %1017 = vmatprep.subr.bf16.mxu0 0
        %1018 = vmatpush1.bf16.msra.mxu0 0
        %1019 = vmatprep.subr.bf16.mxu0 0
        %1020 = vmatpush1.bf16.msra.mxu0 0
        %1021 = vmatprep.subr.bf16.mxu0 0
        %1022 = vmatpush1.bf16.msra.mxu0 0
        %1023 = vmatprep.subr.bf16.mxu0 0
        %1024 = vmatpush1.bf16.msra.mxu0 0
        %1025 = vmatprep.subr.bf16.mxu0 0
        %1026 = vmatpush1.bf16.msra.mxu0 0
        %1027 = vmatprep.subr.bf16.mxu0 0
        %1028 = vmatpush1.bf16.msra.mxu0 0
        %1029 = vmatprep.subr.bf16.mxu0 0
        %1030 = vmatpush1.bf16.msra.mxu0 0
        %1031 = vmatprep.subr.bf16.mxu0 0
        %1032 = vmatpush1.bf16.msra.mxu0 0
        %1033 = vmatprep.subr.bf16.mxu0 0
        %1034 = vmatpush1.bf16.msra.mxu0 0
        %1035 = vmatprep.subr.bf16.mxu0 0
        %1036 = vmatpush1.bf16.msra.mxu0 0
        %1037 = vmatprep.subr.bf16.mxu0 0
        %1038 = vmatpush1.bf16.msra.mxu0 0
        %1039 = vmatprep.subr.bf16.mxu0 0
        %1040 = vmatpush1.bf16.msra.mxu0 0
        %1041 = vmatprep.subr.bf16.mxu0 0
        %1042 = vmatpush1.bf16.msra.mxu0 0
        %1043 = vmatprep.subr.bf16.mxu0 0
        %1044 = vmatpush1.bf16.msra.mxu0 0
        %1045 = vmatprep.mubr.bf16.mxu0 0
        %1046 = vmatmul.mubr.bf16.gmra.mrb[0].mxu0 %v1008
        %v1047 = vpop.f32.mrb[0].mxu0
        %v1048 = vadd.f32 0.0, %v1047
        %v1049 = vpop.f32.mrb[0].mxu0
        %v1050 = vpop.f32.mrb[0].mxu0
        %v1051 = vpop.f32.mrb[0].mxu0
        %1052 = vdwg.mxu0
        %v1053 = vadd.f32 %v889, %v1048
        %1054 = vrot.lane.b32.xlu0 %v574, 104
        %v1055 = vpop.permute.xlu0 %1054
        %1056 = vrot.lane.b32.xlu0 %v574, 72
        %v1057 = vpop.permute.xlu0 %1056
        %v1059 = vsel %vm578, %v1055, 0
        %v1062 = vsel %vm578, %v1057, 0
        %1064 = vmatprep.subr.bf16.mxu0 0
        %1065 = vmatpush1.bf16.xpose.msra.mxu0 %v1062
        %1066 = vmatprep.subr.bf16.mxu0 0
        %1067 = vmatpush1.bf16.xpose.msra.mxu0 0
        %1068 = vmatprep.subr.bf16.mxu0 0
        %1069 = vmatpush1.bf16.xpose.msra.mxu0 0
        %1070 = vmatprep.subr.bf16.mxu0 0
        %1071 = vmatpush1.bf16.xpose.msra.mxu0 0
        %1072 = vmatprep.subr.bf16.mxu0 0
        %1073 = vmatpush1.bf16.xpose.msra.mxu0 0
        %1074 = vmatprep.subr.bf16.mxu0 0
        %1075 = vmatpush1.bf16.xpose.msra.mxu0 0
        %1076 = vmatprep.subr.bf16.mxu0 0
        %1077 = vmatpush1.bf16.xpose.msra.mxu0 0
        %1078 = vmatprep.subr.bf16.mxu0 0
        %1079 = vmatpush1.bf16.xpose.msra.mxu0 0
        %1080 = vmatprep.subr.bf16.mxu0 0
        %1081 = vmatpush1.bf16.xpose.msra.mxu0 0
        %1082 = vmatprep.subr.bf16.mxu0 0
        %1083 = vmatpush1.bf16.xpose.msra.mxu0 0
        %1084 = vmatprep.subr.bf16.mxu0 0
        %1085 = vmatpush1.bf16.xpose.msra.mxu0 0
        %1086 = vmatprep.subr.bf16.mxu0 0
        %1087 = vmatpush1.bf16.xpose.msra.mxu0 0
        %1088 = vmatprep.subr.bf16.mxu0 0
        %1089 = vmatpush1.bf16.xpose.msra.mxu0 0
        %1090 = vmatprep.subr.bf16.mxu0 0
        %1091 = vmatpush1.bf16.xpose.msra.mxu0 0
        %1092 = vmatprep.subr.bf16.mxu0 0
        %1093 = vmatpush1.bf16.xpose.msra.mxu0 0
        %1094 = vmatprep.subr.bf16.mxu0 0
        %1095 = vmatpush1.bf16.xpose.msra.mxu0 0
        %1096 = vmatprep.mubr.bf16.mxu0 0
        %1097 = vmatmul.mubr.bf16.gmra.mrb[0].mxu0 %v1059
        %v1098 = vpop.f32.mrb[0].mxu0
        %v1099 = vadd.f32 0.0, %v1098
        %v1100 = vpop.f32.mrb[0].mxu0
        %v1101 = vpop.f32.mrb[0].mxu0
        %v1102 = vpop.f32.mrb[0].mxu0
        %1103 = vdwg.mxu0
        %v1104 = vsel %vm578, %v1099, -inf
        %1105 = vmax.xlane.f32.xlu0 %v1104
        %v1106 = vpop.xlane.xlu0 %1105
        %v1107 = vsub.f32 %v1099, %v1106
        %v1108 = vmul.f32 %v1107, 1.442695
        %v1109 = vpow.pop %v1108
        %v1110 = vsel %vm578, %v1109, 0.0
        %1111 = vadd.xlane.f32.xlu0 %v1110
        %v1112 = vpop.xlane.xlu0 %1111
        %v1113 = vrcp.pop %v1112
        %v1114 = vmul.f32 %v1109, %v1113
        %v1115 = vadd.f32 %v955, %v1114
        %v1116 = vpack.c.bf16 %v1114, %v1114
        %1117 = vrot.lane.b32.xlu0 %v574, 40
        %v1118 = vpop.permute.xlu0 %1117
        %v1120 = vsel %vm578, %v1116, 0
        %v1123 = vsel %vm643, %v1118, 0
        %1125 = vmatprep.subr.bf16.mxu0 0
        %1126 = vmatpush1.bf16.msra.mxu0 %v1123
        %1127 = vmatprep.subr.bf16.mxu0 0
        %1128 = vmatpush1.bf16.msra.mxu0 0
        %1129 = vmatprep.subr.bf16.mxu0 0
        %1130 = vmatpush1.bf16.msra.mxu0 0
        %1131 = vmatprep.subr.bf16.mxu0 0
        %1132 = vmatpush1.bf16.msra.mxu0 0
        %1133 = vmatprep.subr.bf16.mxu0 0
        %1134 = vmatpush1.bf16.msra.mxu0 0
        %1135 = vmatprep.subr.bf16.mxu0 0
        %1136 = vmatpush1.bf16.msra.mxu0 0
        %1137 = vmatprep.subr.bf16.mxu0 0
        %1138 = vmatpush1.bf16.msra.mxu0 0
        %1139 = vmatprep.subr.bf16.mxu0 0
        %1140 = vmatpush1.bf16.msra.mxu0 0
        %1141 = vmatprep.subr.bf16.mxu0 0
        %1142 = vmatpush1.bf16.msra.mxu0 0
        %1143 = vmatprep.subr.bf16.mxu0 0
        %1144 = vmatpush1.bf16.msra.mxu0 0
        %1145 = vmatprep.subr.bf16.mxu0 0
        %1146 = vmatpush1.bf16.msra.mxu0 0
        %1147 = vmatprep.subr.bf16.mxu0 0
        %1148 = vmatpush1.bf16.msra.mxu0 0
        %1149 = vmatprep.subr.bf16.mxu0 0
        %1150 = vmatpush1.bf16.msra.mxu0 0
        %1151 = vmatprep.subr.bf16.mxu0 0
        %1152 = vmatpush1.bf16.msra.mxu0 0
        %1153 = vmatprep.subr.bf16.mxu0 0
        %1154 = vmatpush1.bf16.msra.mxu0 0
        %1155 = vmatprep.subr.bf16.mxu0 0
        %1156 = vmatpush1.bf16.msra.mxu0 0
        %1157 = vmatprep.mubr.bf16.mxu0 0
        %1158 = vmatmul.mubr.bf16.gmra.mrb[0].mxu0 %v1120
        %v1159 = vpop.f32.mrb[0].mxu0
        %v1160 = vadd.f32 0.0, %v1159
        %v1161 = vpop.f32.mrb[0].mxu0
        %v1162 = vpop.f32.mrb[0].mxu0
        %v1163 = vpop.f32.mrb[0].mxu0
        %1164 = vdwg.mxu0
        %v1165 = vpack.c.bf16 %v1160, %v1160
        %v1166 = vld [vmem:[%s5 + $0xc] sm:$0xf]
        %v1168 = vsel %vm578, %v1165, 0
        %v1171 = vsel %vm643, %v1166, 0
        %1173 = vmatprep.subr.bf16.mxu0 0
        %1174 = vmatpush1.bf16.msra.mxu0 %v1171
        %1175 = vmatprep.subr.bf16.mxu0 0
        %1176 = vmatpush1.bf16.msra.mxu0 0
        %1177 = vmatprep.subr.bf16.mxu0 0
        %1178 = vmatpush1.bf16.msra.mxu0 0
        %1179 = vmatprep.subr.bf16.mxu0 0
        %1180 = vmatpush1.bf16.msra.mxu0 0
        %1181 = vmatprep.subr.bf16.mxu0 0
        %1182 = vmatpush1.bf16.msra.mxu0 0
        %1183 = vmatprep.subr.bf16.mxu0 0
        %1184 = vmatpush1.bf16.msra.mxu0 0
        %1185 = vmatprep.subr.bf16.mxu0 0
        %1186 = vmatpush1.bf16.msra.mxu0 0
        %1187 = vmatprep.subr.bf16.mxu0 0
        %1188 = vmatpush1.bf16.msra.mxu0 0
        %1189 = vmatprep.subr.bf16.mxu0 0
        %1190 = vmatpush1.bf16.msra.mxu0 0
        %1191 = vmatprep.subr.bf16.mxu0 0
        %1192 = vmatpush1.bf16.msra.mxu0 0
        %1193 = vmatprep.subr.bf16.mxu0 0
        %1194 = vmatpush1.bf16.msra.mxu0 0
        %1195 = vmatprep.subr.bf16.mxu0 0
        %1196 = vmatpush1.bf16.msra.mxu0 0
        %1197 = vmatprep.subr.bf16.mxu0 0
        %1198 = vmatpush1.bf16.msra.mxu0 0
        %1199 = vmatprep.subr.bf16.mxu0 0
        %1200 = vmatpush1.bf16.msra.mxu0 0
        %1201 = vmatprep.subr.bf16.mxu0 0
        %1202 = vmatpush1.bf16.msra.mxu0 0
        %1203 = vmatprep.subr.bf16.mxu0 0
        %1204 = vmatpush1.bf16.msra.mxu0 0
        %1205 = vmatprep.mubr.bf16.mxu0 0
        %1206 = vmatmul.mubr.bf16.gmra.mrb[0].mxu0 %v1168
        %v1207 = vpop.f32.mrb[0].mxu0
        %v1208 = vadd.f32 0.0, %v1207
        %v1209 = vpop.f32.mrb[0].mxu0
        %v1210 = vpop.f32.mrb[0].mxu0
        %v1211 = vpop.f32.mrb[0].mxu0
        %1212 = vdwg.mxu0
        %v1213 = vadd.f32 %v1053, %v1208
        %v1214 = vmul.f32 %v1115, 0.25
        %1215 = vst.msk [vmem:[%s469] sm:$0xff] %vm578, %v1214
        %v1216 = vld [vmem:[%s6] sm:$0x1]
        %v1218 = vlaneseq
        %v1219 = vshrl.u32 %v1218, 7
        %v1220 = vsub.s32 0, %v1219
        %v1221 = vrot.slane %v1216, %v1220
        %v1223 = vadd.f32 %v1213, %v1221
        %v1224 = vadd.f32 %v475, %v1223
        %v1225 = vld [vmem:[%s7] sm:$0x1]
        %v1226 = vld [vmem:[%s8] sm:$0x1]
        %v1227 = vsel %vm478, %v1224, 0.0
        %1228 = vadd.xlane.f32.xlu0 %v1227
        %v1229 = vpop.xlane.xlu0 %1228
        %v1230 = vmul.f32 %v1229, %v482
        %v1231 = vsub.f32 %v1224, %v1230
        %v1232 = vmul.f32 %v1231, %v1231
        %v1233 = vsel %vm478, %v1232, 0.0
        %1234 = vadd.xlane.f32.xlu0 %v1233
        %v1235 = vpop.xlane.xlu0 %1234
        %v1236 = vmul.f32 %v1235, %v482
        %v1237 = vadd.f32 %v1236, 1e-05
        %v1238 = vrsqrt.pop %v1237
        %v1239 = vmul.f32 %v1231, %v1238
        %v1241 = vlaneseq
        %v1242 = vshrl.u32 %v1241, 7
        %v1243 = vsub.s32 0, %v1242
        %v1244 = vrot.slane %v1225, %v1243
        %v1246 = vmul.f32 %v1239, %v1244
        %v1248 = vlaneseq
        %v1249 = vshrl.u32 %v1248, 7
        %v1250 = vsub.s32 0, %v1249
        %v1251 = vrot.slane %v1226, %v1250
        %v1253 = vadd.f32 %v1246, %v1251
        %v1254 = vpack.c.bf16 %v1253, %v1253
        %v1255 = vld [vmem:[%s9] sm:$0xf]
        %v1256 = vld [vmem:[%s9 + $0x4] sm:$0xf]
        %v1257 = vld [vmem:[%s9 + $0x8] sm:$0xf]
        %v1258 = vld [vmem:[%s9 + $0xc] sm:$0xf]
        %v1259 = vld [vmem:[%s10] sm:$0x1]
        %v1261 = vlaneseq
        %v1262 = vshrl.u32 %v1261, 7
        %v1263 = vsub.s32 0, %v1262
        %v1264 = vrot.slane %v1259, %v1263
        %v1270 = vunpack.c.l.b16 %v1255
        %v1271 = vunpack.c.l.b16 %v1256
        %v1272 = vunpack.c.l.b16 %v1257
        %v1273 = vunpack.c.l.b16 %v1258
        %v1274 = vpack.c.b16 %v1271, %v1270
        %v1275 = vpack.c.b16 %v1273, %v1272
        %v1279 = vsel %vm478, %v1254, 0
        %1281 = vmatprep.subr.bf16.mxu0 0
        %1282 = vmatpush1.bf16.msra.mxu0 %v1274
        %1283 = vmatprep.subr.bf16.mxu0 0
        %1284 = vmatpush1.bf16.msra.mxu0 %v1275
        %1285 = vmatprep.subr.bf16.mxu0 0
        %1286 = vmatpush1.bf16.msra.mxu0 0
        %1287 = vmatprep.subr.bf16.mxu0 0
        %1288 = vmatpush1.bf16.msra.mxu0 0
        %1289 = vmatprep.subr.bf16.mxu0 0
        %1290 = vmatpush1.bf16.msra.mxu0 0
        %1291 = vmatprep.subr.bf16.mxu0 0
        %1292 = vmatpush1.bf16.msra.mxu0 0
        %1293 = vmatprep.subr.bf16.mxu0 0
        %1294 = vmatpush1.bf16.msra.mxu0 0
        %1295 = vmatprep.subr.bf16.mxu0 0
        %1296 = vmatpush1.bf16.msra.mxu0 0
        %1297 = vmatprep.subr.bf16.mxu0 0
        %1298 = vmatpush1.bf16.msra.mxu0 0
        %1299 = vmatprep.subr.bf16.mxu0 0
        %1300 = vmatpush1.bf16.msra.mxu0 0
        %1301 = vmatprep.subr.bf16.mxu0 0
        %1302 = vmatpush1.bf16.msra.mxu0 0
        %1303 = vmatprep.subr.bf16.mxu0 0
        %1304 = vmatpush1.bf16.msra.mxu0 0
        %1305 = vmatprep.subr.bf16.mxu0 0
        %1306 = vmatpush1.bf16.msra.mxu0 0
        %1307 = vmatprep.subr.bf16.mxu0 0
        %1308 = vmatpush1.bf16.msra.mxu0 0
        %1309 = vmatprep.subr.bf16.mxu0 0
        %1310 = vmatpush1.bf16.msra.mxu0 0
        %1311 = vmatprep.subr.bf16.mxu0 0
        %1312 = vmatpush1.bf16.msra.mxu0 0
        %1313 = vmatprep.mubr.bf16.mxu0 0
        %1314 = vmatmul.mubr.bf16.gmra.mrb[0].mxu0 %v1279
        %v1315 = vpop.f32.mrb[0].mxu0
        %v1316 = vadd.f32 %v1264, %v1315
        %v1317 = vpop.f32.mrb[0].mxu0
        %v1318 = vpop.f32.mrb[0].mxu0
        %v1319 = vpop.f32.mrb[0].mxu0
        %1320 = vdwg.mxu0
        %v1321 = vmul.f32 %v1316, 0.5
        %v1322 = vmul.f32 %v1316, 0.70710677
        %v1323 = vand.u32 2147483647, %v1322
        %v1324 = vmul.f32 %v1323, 0.3275911
        %v1325 = vadd.f32 %v1324, 1.0
        %v1326 = vrcp.pop %v1325
        %v1327 = vmul.f32 1.0, %v1326
        %v1328 = vmul.f32 %v1327, 1.0614054
        %v1329 = vadd.f32 %v1328, -1.4531521
        %v1330 = vmul.f32 %v1329, %v1327
        %v1331 = vadd.f32 %v1330, 1.4214138
        %v1332 = vmul.f32 %v1331, %v1327
        %v1333 = vadd.f32 %v1332, -0.28449672
        %v1334 = vmul.f32 %v1333, %v1327
        %v1335 = vadd.f32 %v1334, 0.2548296
        %v1336 = vmul.f32 %v1335, %v1327
        %v1337 = vsub.f32 0.0, %v1323
        %v1338 = vmul.f32 %v1337, %v1323
        %v1339 = vmul.f32 %v1338, 1.442695
        %v1340 = vpow.pop %v1339
        %v1341 = vmul.f32 %v1336, %v1340
        %v1342 = vsub.f32 1.0, %v1341
        %vm1343 = vcmp.lt.f32.partialorder %v1322, 0.0
        %v1344 = vsub.f32 0.0, %v1342
        %v1345 = vsel %vm1343, %v1344, %v1342
        %v1346 = vadd.f32 %v1345, 1.0
        %v1347 = vmul.f32 %v1321, %v1346
        %v1348 = vpack.c.bf16 %v1347, %v1347
        %v1349 = vld [vmem:[%s11] sm:$0xf]
        %v1350 = vld [vmem:[%s11 + $0x4] sm:$0xf]
        %v1351 = vld [vmem:[%s11 + $0x8] sm:$0xf]
        %v1352 = vld [vmem:[%s11 + $0xc] sm:$0xf]
        %v1353 = vld [vmem:[%s11 + $0x10] sm:$0xf]
        %v1354 = vld [vmem:[%s11 + $0x14] sm:$0xf]
        %v1355 = vld [vmem:[%s11 + $0x18] sm:$0xf]
        %v1356 = vld [vmem:[%s11 + $0x1c] sm:$0xf]
        %v1357 = vld [vmem:[%s11 + $0x20] sm:$0xf]
        %v1358 = vld [vmem:[%s11 + $0x24] sm:$0xf]
        %v1359 = vld [vmem:[%s11 + $0x28] sm:$0xf]
        %v1360 = vld [vmem:[%s11 + $0x2c] sm:$0xf]
        %v1361 = vld [vmem:[%s11 + $0x30] sm:$0xf]
        %v1362 = vld [vmem:[%s11 + $0x34] sm:$0xf]
        %v1363 = vld [vmem:[%s11 + $0x38] sm:$0xf]
        %v1364 = vld [vmem:[%s11 + $0x3c] sm:$0xf]
        %v1365 = vld [vmem:[%s12] sm:$0x1]
        %v1367 = vlaneseq
        %v1368 = vshrl.u32 %v1367, 7
        %v1369 = vsub.s32 0, %v1368
        %v1370 = vrot.slane %v1365, %v1369
        %v1388 = vunpack.c.l.b16 %v1349
        %v1389 = vunpack.c.l.b16 %v1350
        %v1390 = vunpack.c.l.b16 %v1351
        %v1391 = vunpack.c.l.b16 %v1352
        %v1392 = vunpack.c.l.b16 %v1353
        %v1393 = vunpack.c.l.b16 %v1354
        %v1394 = vunpack.c.l.b16 %v1355
        %v1395 = vunpack.c.l.b16 %v1356
        %v1396 = vunpack.c.l.b16 %v1357
        %v1397 = vunpack.c.l.b16 %v1358
        %v1398 = vunpack.c.l.b16 %v1359
        %v1399 = vunpack.c.l.b16 %v1360
        %v1400 = vunpack.c.l.b16 %v1361
        %v1401 = vunpack.c.l.b16 %v1362
        %v1402 = vunpack.c.l.b16 %v1363
        %v1403 = vunpack.c.l.b16 %v1364
        %v1404 = vpack.c.b16 %v1389, %v1388
        %v1405 = vpack.c.b16 %v1391, %v1390
        %v1406 = vpack.c.b16 %v1393, %v1392
        %v1407 = vpack.c.b16 %v1395, %v1394
        %v1408 = vpack.c.b16 %v1397, %v1396
        %v1409 = vpack.c.b16 %v1399, %v1398
        %v1410 = vpack.c.b16 %v1401, %v1400
        %v1411 = vpack.c.b16 %v1403, %v1402
        %1420 = vmatprep.subr.bf16.mxu0 0
        %1421 = vmatpush1.bf16.msra.mxu0 %v1404
        %1422 = vmatprep.subr.bf16.mxu0 0
        %1423 = vmatpush1.bf16.msra.mxu0 %v1405
        %1424 = vmatprep.subr.bf16.mxu0 0
        %1425 = vmatpush1.bf16.msra.mxu0 %v1406
        %1426 = vmatprep.subr.bf16.mxu0 0
        %1427 = vmatpush1.bf16.msra.mxu0 %v1407
        %1428 = vmatprep.subr.bf16.mxu0 0
        %1429 = vmatpush1.bf16.msra.mxu0 %v1408
        %1430 = vmatprep.subr.bf16.mxu0 0
        %1431 = vmatpush1.bf16.msra.mxu0 %v1409
        %1432 = vmatprep.subr.bf16.mxu0 0
        %1433 = vmatpush1.bf16.msra.mxu0 %v1410
        %1434 = vmatprep.subr.bf16.mxu0 0
        %1435 = vmatpush1.bf16.msra.mxu0 %v1411
        %1436 = vmatprep.subr.bf16.mxu0 0
        %1437 = vmatpush1.bf16.msra.mxu0 0
        %1438 = vmatprep.subr.bf16.mxu0 0
        %1439 = vmatpush1.bf16.msra.mxu0 0
        %1440 = vmatprep.subr.bf16.mxu0 0
        %1441 = vmatpush1.bf16.msra.mxu0 0
        %1442 = vmatprep.subr.bf16.mxu0 0
        %1443 = vmatpush1.bf16.msra.mxu0 0
        %1444 = vmatprep.subr.bf16.mxu0 0
        %1445 = vmatpush1.bf16.msra.mxu0 0
        %1446 = vmatprep.subr.bf16.mxu0 0
        %1447 = vmatpush1.bf16.msra.mxu0 0
        %1448 = vmatprep.subr.bf16.mxu0 0
        %1449 = vmatpush1.bf16.msra.mxu0 0
        %1450 = vmatprep.subr.bf16.mxu0 0
        %1451 = vmatpush1.bf16.msra.mxu0 0
        %1452 = vmatprep.mubr.bf16.mxu0 0
        %1453 = vmatmul.mubr.bf16.gmra.mrb[0].mxu0 %v1348
        %v1454 = vpop.f32.mrb[0].mxu0
        %v1455 = vadd.f32 %v1370, %v1454
        %v1456 = vpop.f32.mrb[0].mxu0
        %v1457 = vpop.f32.mrb[0].mxu0
        %v1458 = vpop.f32.mrb[0].mxu0
        %1459 = vdwg.mxu0
        %v1460 = vadd.f32 %v1224, %v1455
        %1461 = vst.msk [vmem:[%s462] sm:$0xff] %vm478, %v1460
        %s1462 = sand.u32 %s318, 1
        %s1463 = scalar_lea.sflag [#allocation3], %s1462
        %s1464 = sand.u32 %s318, 1
        %s1465 = smul.addr %s1464, 8
        %s1466 = scalar_lea.vmem [#allocation2], %s1465
        %s1467 = sand.u32 %s344, 1
        %s1468 = scalar_lea.sflag [#allocation5], %s1467
        %s1469 = sand.u32 %s344, 1
        %s1470 = smul.addr %s1469, 8
        %s1471 = scalar_lea.vmem [#allocation4], %s1470
        // Predicated region
        $region73: #{tpu_custom_call.1} parent=71 // pred_check
          %p1472 = pneg %p328
        $region74: #{tpu_custom_call.1} parent=71 // pred_check_branch
          %1474 = sbr.rel (%p1472) target = $region76
        $region75: #{tpu_custom_call.1} parent=71 // pred_region
          %s1476 = ssub.s32 128, 128
          %1477 = vsyncadd %s1463, %s1476
          %s1478 = smul.addr %s32, 128
          %s1479 = scalar_lea.hbm %s13, %s1478
          %s1481 = sshll.u32 %s1466, 4
          %s1482 = int_to_ptr.vmem [resolvable:$true] %s1481
          %1484 = dma.vmem_to_hbm [thread:$0]  %s1482, 128, %s1479, %s1463
        $region76: #{tpu_custom_call.1} parent=71 // pred_fallthru
          _
        // Predicated region
        $region77: #{tpu_custom_call.1} parent=71 // pred_check
          %p1485 = pneg %p354
        $region78: #{tpu_custom_call.1} parent=71 // pred_check_branch
          %1487 = sbr.rel (%p1485) target = $region80
        $region79: #{tpu_custom_call.1} parent=71 // pred_region
          %s1489 = ssub.s32 128, 128
          %1490 = vsyncadd %s1468, %s1489
          %s1491 = smul.addr %s32, 128
          %s1492 = scalar_lea.hbm %s14, %s1491
          %s1494 = sshll.u32 %s1471, 4
          %s1495 = int_to_ptr.vmem [resolvable:$true] %s1494
          %1497 = dma.vmem_to_hbm [thread:$0]  %s1495, 128, %s1492, %s1468
        $region80: #{tpu_custom_call.1} parent=71 // pred_fallthru
          _
      $region72: #{tpu_custom_call.1} parent=5 // pred_fallthru
        _
      %p1498 = scmp.le.s32.totalorder 2, %s27
      // Predicated region
      $region81: #{tpu_custom_call.1} parent=5 // pred_check
        %p1499 = pneg %p1498
      $region82: #{tpu_custom_call.1} parent=5 // pred_check_branch
        %1501 = sbr.rel (%p1499) target = $region84
      $region83: #{tpu_custom_call.1} parent=5 // pred_region
        %s1502 = ssub.s32 %s27, 2
        // Predicated region
        $region85: #{tpu_custom_call.1} parent=83 // pred_check
          %p1503 = pneg %p334
        $region86: #{tpu_custom_call.1} parent=83 // pred_check_branch
          %1505 = sbr.rel (%p1503) target = $region88
        $region87: #{tpu_custom_call.1} parent=83 // pred_region
          %s1506 = sand.u32 %s319, 1
          %s1507 = scalar_lea.sflag [#allocation3], %s1506
          %s1508 = sand.u32 %s319, 1
          %s1509 = smul.addr %s1508, 8
          %s1510 = scalar_lea.vmem [#allocation2], %s1509
          %1511 = dma.done %s1507, 128
        $region88: #{tpu_custom_call.1} parent=83 // pred_fallthru
          _
        // Predicated region
        $region89: #{tpu_custom_call.1} parent=83 // pred_check
          %p1512 = pneg %p360
        $region90: #{tpu_custom_call.1} parent=83 // pred_check_branch
          %1514 = sbr.rel (%p1512) target = $region92
        $region91: #{tpu_custom_call.1} parent=83 // pred_region
          %s1515 = sand.u32 %s345, 1
          %s1516 = scalar_lea.sflag [#allocation5], %s1515
          %s1517 = sand.u32 %s345, 1
          %s1518 = smul.addr %s1517, 8
          %s1519 = scalar_lea.vmem [#allocation4], %s1518
          %1520 = dma.done %s1516, 128
        $region92: #{tpu_custom_call.1} parent=83 // pred_fallthru
          _
      $region84: #{tpu_custom_call.1} parent=5 // pred_fallthru
        _
    $region6: #{tpu_custom_call.1} parent=1 // loop_footer
      %s31 = sadd.s32 1, %s27
    $region7: #{tpu_custom_call.1} parent=1 // loop_footer_branch
      %26 = sbr.rel target = $region3
    $region8: #{tpu_custom_call.1} parent=1 // loop_exit
      _
    %1521 = vsyncpa [#allocation3], 1
    %s1522 = scalar_lea.sflag [#allocation3], 1
    %1523 = vsyncpa %s1522, 1
    %1524 = vsyncpa [#allocation5], 1
    %s1525 = scalar_lea.sflag [#allocation5], 1
    %1526 = vsyncpa %s1525, 1

// kernel: tpu_custom_call.1
$region0: #{tpu_custom_call.1}
  #allocation0 [shape = 'u32[]', space=smem, size = 0x4, offset = 0x4, fixed_abs, tag = 'smem constant byte address 0x4 - core index']
  #allocation1 [shape = 'u32[144,128]{1,0:T(1,128)}', space=vmem, size = 0x12000, scoped, tag = 'internal scratch']
  %s0 = inlined_call_operand.vmem [shape: f32[2,8,32], index: 0, kind: input, shape index: {}]
  %s1 = inlined_call_operand.vmem [shape: f32[1,32], index: 1, kind: input, shape index: {}]
  %s2 = inlined_call_operand.vmem [shape: f32[1,32], index: 2, kind: input, shape index: {}]
  %s3 = inlined_call_operand.vmem [shape: bf16[32,96], index: 3, kind: input, shape index: {}]
  %s4 = inlined_call_operand.vmem [shape: f32[1,96], index: 4, kind: input, shape index: {}]
  %s5 = inlined_call_operand.vmem [shape: bf16[32,32], index: 5, kind: input, shape index: {}]
  %s6 = inlined_call_operand.vmem [shape: f32[1,32], index: 6, kind: input, shape index: {}]
  %s7 = inlined_call_operand.vmem [shape: f32[1,32], index: 7, kind: input, shape index: {}]
  %s8 = inlined_call_operand.vmem [shape: f32[1,32], index: 8, kind: input, shape index: {}]
  %s9 = inlined_call_operand.vmem [shape: bf16[32,128], index: 9, kind: input, shape index: {}]
  %s10 = inlined_call_operand.vmem [shape: f32[1,128], index: 10, kind: input, shape index: {}]
  %s11 = inlined_call_operand.vmem [shape: bf16[128,32], index: 11, kind: input, shape index: {}]
  %s12 = inlined_call_operand.vmem [shape: f32[1,32], index: 12, kind: input, shape index: {}]
  %s13 = inlined_call_operand.hbm [shape: f32[2,8,32], index: 13, kind: output, shape index: {0}]
  %s14 = inlined_call_operand.hbm [shape: f32[2,8,8], index: 14, kind: output, shape index: {1}]
  %15 = xla_tuple %s13, %s14
  %s16 = sld [smem:[#allocation0]]
  $region93: #{tpu_custom_call.1} parent=0
    _
  %s18 = ssub.s32 1, %s16
  %s19 = scalar_select 0, %s18, %s16
  $region1: #{tpu_custom_call.1} parent=0
    #allocation2 [shape = 'u8[8192]{0}', space=vmem, size = 0x2000, scoped, tag = 'output window, operand 0']
    #allocation3 [shape = 's32[2]{0}', space=sflag, size = 0x8, scoped, tag = 'scoped memory for tpu_custom_call.1']
    #allocation4 [shape = 'u8[8192]{0}', space=vmem, size = 0x2000, scoped, tag = 'output window, operand 1']
    #allocation5 [shape = 's32[2]{0}', space=sflag, size = 0x8, scoped, tag = 'scoped memory for tpu_custom_call.1']
    %20 = vsyncpa [#allocation3], 0
    %s21 = scalar_lea.sflag [#allocation3], 1
    %22 = vsyncpa %s21, 0
    %23 = vsyncpa [#allocation5], 0
    %s24 = scalar_lea.sflag [#allocation5], 1
    %25 = vsyncpa %s24, 0
    loop: start=0, step=1, limit=4
    $region2: #{tpu_custom_call.1} parent=1 // loop_pre_header
      _
    $region3: #{tpu_custom_call.1} parent=1 // loop_header
      %s27 = sphi 0, %s31
      %p28 = scmp.ge.s32.totalorder %s27, 4
      %s37 = sphi 0, %s39
      %s40 = sphi 0, %s37
      %s41 = sphi 0, %s40
      %s57 = sphi 0, %s41
      %s61 = sphi 0, %s61
      %s63 = sphi 0, %s61
      %s64 = sphi 0, %s63
      %s78 = sphi 0, %s64
      %s82 = sphi 0, %s82
      %s84 = sphi 0, %s82
      %s85 = sphi 0, %s84
      %s99 = sphi 0, %s85
      %s103 = sphi 0, %s103
      %s105 = sphi 0, %s103
      %s106 = sphi 0, %s105
      %s120 = sphi 0, %s106
      %s124 = sphi 0, %s124
      %s126 = sphi 0, %s124
      %s127 = sphi 0, %s126
      %s141 = sphi 0, %s127
      %s145 = sphi 0, %s145
      %s147 = sphi 0, %s145
      %s148 = sphi 0, %s147
      %s162 = sphi 0, %s148
      %s166 = sphi 0, %s166
      %s168 = sphi 0, %s166
      %s169 = sphi 0, %s168
      %s183 = sphi 0, %s169
      %s187 = sphi 0, %s187
      %s189 = sphi 0, %s187
      %s190 = sphi 0, %s189
      %s204 = sphi 0, %s190
      %s208 = sphi 0, %s208
      %s210 = sphi 0, %s208
      %s211 = sphi 0, %s210
      %s225 = sphi 0, %s211
      %s229 = sphi 0, %s229
      %s231 = sphi 0, %s229
      %s232 = sphi 0, %s231
      %s246 = sphi 0, %s232
      %s250 = sphi 0, %s250
      %s252 = sphi 0, %s250
      %s253 = sphi 0, %s252
      %s267 = sphi 0, %s253
      %s271 = sphi 0, %s271
      %s273 = sphi 0, %s271
      %s274 = sphi 0, %s273
      %s288 = sphi 0, %s274
      %s292 = sphi 0, %s292
      %s294 = sphi 0, %s292
      %s295 = sphi 0, %s294
      %s309 = sphi 0, %s295
      %s315 = sphi 0, %s317
      %s318 = sphi 0, %s315
      %s319 = sphi 0, %s318
      %s335 = sphi 0, %s319
      %s341 = sphi 0, %s343
      %s344 = sphi 0, %s341
      %s345 = sphi 0, %s344
      %s361 = sphi 0, %s345
    $region4: #{tpu_custom_call.1} parent=1 // loop_header_branch
      %30 = sbr.rel (%p28) target = $region8
    $region5: #{tpu_custom_call.1} parent=1 // loop_body
      %s32 = ssub.s32 %s27, 1
      %s33 = ssub.s32 %s27, 2
      %s34 = sadd.s32 %s27, 1
      %s35 = ssub.s32 %s27, %s34
      %p36 = scmp.eq.s32.totalorder %s35, 0
      %s38 = sadd.s32 %s37, 1
      %s39 = scalar_select %p36, %s37, %s38
      %p42 = pneg %p36
      %p43 = scmp.eq.s32.totalorder %s27, 1
      %p44 = por %p42, %p43
      %p45 = scmp.ne.s32.totalorder %s37, %s40
      %p46 = scmp.eq.s32.totalorder %s27, 0
      %p47 = por %p45, %p46
      %p48 = scmp.ne.s32.totalorder %s37, %s40
      %p49 = scmp.eq.s32.totalorder %s32, 1
      %p50 = por %p48, %p49
      %p51 = scmp.ne.s32.totalorder %s40, %s41
      %p52 = scmp.eq.s32.totalorder %s32, 0
      %p53 = por %p51, %p52
      %p54 = scmp.ne.s32.totalorder %s40, %s41
      %p55 = scmp.eq.s32.totalorder %s33, 1
      %p56 = por %p54, %p55
      %p58 = scmp.ne.s32.totalorder %s41, %s57
      %p59 = scmp.eq.s32.totalorder %s33, 0
      %p60 = por %p58, %p59
      %s62 = sadd.s32 %s61, 1
      %p65 = scmp.eq.s32.totalorder %s27, 1
      %p66 = scmp.ne.s32.totalorder %s61, %s63
      %p67 = scmp.eq.s32.totalorder %s27, 0
      %p68 = por %p66, %p67
      %p69 = scmp.ne.s32.totalorder %s61, %s63
      %p70 = scmp.eq.s32.totalorder %s32, 1
      %p71 = por %p69, %p70
      %p72 = scmp.ne.s32.totalorder %s63, %s64
      %p73 = scmp.eq.s32.totalorder %s32, 0
      %p74 = por %p72, %p73
      %p75 = scmp.ne.s32.totalorder %s63, %s64
      %p76 = scmp.eq.s32.totalorder %s33, 1
      %p77 = por %p75, %p76
      %p79 = scmp.ne.s32.totalorder %s64, %s78
      %p80 = scmp.eq.s32.totalorder %s33, 0
      %p81 = por %p79, %p80
      %s83 = sadd.s32 %s82, 1
      %p86 = scmp.eq.s32.totalorder %s27, 1
      %p87 = scmp.ne.s32.totalorder %s82, %s84
      %p88 = scmp.eq.s32.totalorder %s27, 0
      %p89 = por %p87, %p88
      %p90 = scmp.ne.s32.totalorder %s82, %s84
      %p91 = scmp.eq.s32.totalorder %s32, 1
      %p92 = por %p90, %p91
      %p93 = scmp.ne.s32.totalorder %s84, %s85
      %p94 = scmp.eq.s32.totalorder %s32, 0
      %p95 = por %p93, %p94
      %p96 = scmp.ne.s32.totalorder %s84, %s85
      %p97 = scmp.eq.s32.totalorder %s33, 1
      %p98 = por %p96, %p97
      %p100 = scmp.ne.s32.totalorder %s85, %s99
      %p101 = scmp.eq.s32.totalorder %s33, 0
      %p102 = por %p100, %p101
      %s104 = sadd.s32 %s103, 1
      %p107 = scmp.eq.s32.totalorder %s27, 1
      %p108 = scmp.ne.s32.totalorder %s103, %s105
      %p109 = scmp.eq.s32.totalorder %s27, 0
      %p110 = por %p108, %p109
      %p111 = scmp.ne.s32.totalorder %s103, %s105
      %p112 = scmp.eq.s32.totalorder %s32, 1
      %p113 = por %p111, %p112
      %p114 = scmp.ne.s32.totalorder %s105, %s106
      %p115 = scmp.eq.s32.totalorder %s32, 0
      %p116 = por %p114, %p115
      %p117 = scmp.ne.s32.totalorder %s105, %s106
      %p118 = scmp.eq.s32.totalorder %s33, 1
      %p119 = por %p117, %p118
      %p121 = scmp.ne.s32.totalorder %s106, %s120
      %p122 = scmp.eq.s32.totalorder %s33, 0
      %p123 = por %p121, %p122
      %s125 = sadd.s32 %s124, 1
      %p128 = scmp.eq.s32.totalorder %s27, 1
      %p129 = scmp.ne.s32.totalorder %s124, %s126
      %p130 = scmp.eq.s32.totalorder %s27, 0
      %p131 = por %p129, %p130
      %p132 = scmp.ne.s32.totalorder %s124, %s126
      %p133 = scmp.eq.s32.totalorder %s32, 1
      %p134 = por %p132, %p133
      %p135 = scmp.ne.s32.totalorder %s126, %s127
      %p136 = scmp.eq.s32.totalorder %s32, 0
      %p137 = por %p135, %p136
      %p138 = scmp.ne.s32.totalorder %s126, %s127
      %p139 = scmp.eq.s32.totalorder %s33, 1
      %p140 = por %p138, %p139
      %p142 = scmp.ne.s32.totalorder %s127, %s141
      %p143 = scmp.eq.s32.totalorder %s33, 0
      %p144 = por %p142, %p143
      %s146 = sadd.s32 %s145, 1
      %p149 = scmp.eq.s32.totalorder %s27, 1
      %p150 = scmp.ne.s32.totalorder %s145, %s147
      %p151 = scmp.eq.s32.totalorder %s27, 0
      %p152 = por %p150, %p151
      %p153 = scmp.ne.s32.totalorder %s145, %s147
      %p154 = scmp.eq.s32.totalorder %s32, 1
      %p155 = por %p153, %p154
      %p156 = scmp.ne.s32.totalorder %s147, %s148
      %p157 = scmp.eq.s32.totalorder %s32, 0
      %p158 = por %p156, %p157
      %p159 = scmp.ne.s32.totalorder %s147, %s148
      %p160 = scmp.eq.s32.totalorder %s33, 1
      %p161 = por %p159, %p160
      %p163 = scmp.ne.s32.totalorder %s148, %s162
      %p164 = scmp.eq.s32.totalorder %s33, 0
      %p165 = por %p163, %p164
      %s167 = sadd.s32 %s166, 1
      %p170 = scmp.eq.s32.totalorder %s27, 1
      %p171 = scmp.ne.s32.totalorder %s166, %s168
      %p172 = scmp.eq.s32.totalorder %s27, 0
      %p173 = por %p171, %p172
      %p174 = scmp.ne.s32.totalorder %s166, %s168
      %p175 = scmp.eq.s32.totalorder %s32, 1
      %p176 = por %p174, %p175
      %p177 = scmp.ne.s32.totalorder %s168, %s169
      %p178 = scmp.eq.s32.totalorder %s32, 0
      %p179 = por %p177, %p178
      %p180 = scmp.ne.s32.totalorder %s168, %s169
      %p181 = scmp.eq.s32.totalorder %s33, 1
      %p182 = por %p180, %p181
      %p184 = scmp.ne.s32.totalorder %s169, %s183
      %p185 = scmp.eq.s32.totalorder %s33, 0
      %p186 = por %p184, %p185
      %s188 = sadd.s32 %s187, 1
      %p191 = scmp.eq.s32.totalorder %s27, 1
      %p192 = scmp.ne.s32.totalorder %s187, %s189
      %p193 = scmp.eq.s32.totalorder %s27, 0
      %p194 = por %p192, %p193
      %p195 = scmp.ne.s32.totalorder %s187, %s189
      %p196 = scmp.eq.s32.totalorder %s32, 1
      %p197 = por %p195, %p196
      %p198 = scmp.ne.s32.totalorder %s189, %s190
      %p199 = scmp.eq.s32.totalorder %s32, 0
      %p200 = por %p198, %p199
      %p201 = scmp.ne.s32.totalorder %s189, %s190
      %p202 = scmp.eq.s32.totalorder %s33, 1
      %p203 = por %p201, %p202
      %p205 = scmp.ne.s32.totalorder %s190, %s204
      %p206 = scmp.eq.s32.totalorder %s33, 0
      %p207 = por %p205, %p206
      %s209 = sadd.s32 %s208, 1
      %p212 = scmp.eq.s32.totalorder %s27, 1
      %p213 = scmp.ne.s32.totalorder %s208, %s210
      %p214 = scmp.eq.s32.totalorder %s27, 0
      %p215 = por %p213, %p214
      %p216 = scmp.ne.s32.totalorder %s208, %s210
      %p217 = scmp.eq.s32.totalorder %s32, 1
      %p218 = por %p216, %p217
      %p219 = scmp.ne.s32.totalorder %s210, %s211
      %p220 = scmp.eq.s32.totalorder %s32, 0
      %p221 = por %p219, %p220
      %p222 = scmp.ne.s32.totalorder %s210, %s211
      %p223 = scmp.eq.s32.totalorder %s33, 1
      %p224 = por %p222, %p223
      %p226 = scmp.ne.s32.totalorder %s211, %s225
      %p227 = scmp.eq.s32.totalorder %s33, 0
      %p228 = por %p226, %p227
      %s230 = sadd.s32 %s229, 1
      %p233 = scmp.eq.s32.totalorder %s27, 1
      %p234 = scmp.ne.s32.totalorder %s229, %s231
      %p235 = scmp.eq.s32.totalorder %s27, 0
      %p236 = por %p234, %p235
      %p237 = scmp.ne.s32.totalorder %s229, %s231
      %p238 = scmp.eq.s32.totalorder %s32, 1
      %p239 = por %p237, %p238
      %p240 = scmp.ne.s32.totalorder %s231, %s232
      %p241 = scmp.eq.s32.totalorder %s32, 0
      %p242 = por %p240, %p241
      %p243 = scmp.ne.s32.totalorder %s231, %s232
      %p244 = scmp.eq.s32.totalorder %s33, 1
      %p245 = por %p243, %p244
      %p247 = scmp.ne.s32.totalorder %s232, %s246
      %p248 = scmp.eq.s32.totalorder %s33, 0
      %p249 = por %p247, %p248
      %s251 = sadd.s32 %s250, 1
      %p254 = scmp.eq.s32.totalorder %s27, 1
      %p255 = scmp.ne.s32.totalorder %s250, %s252
      %p256 = scmp.eq.s32.totalorder %s27, 0
      %p257 = por %p255, %p256
      %p258 = scmp.ne.s32.totalorder %s250, %s252
      %p259 = scmp.eq.s32.totalorder %s32, 1
      %p260 = por %p258, %p259
      %p261 = scmp.ne.s32.totalorder %s252, %s253
      %p262 = scmp.eq.s32.totalorder %s32, 0
      %p263 = por %p261, %p262
      %p264 = scmp.ne.s32.totalorder %s252, %s253
      %p265 = scmp.eq.s32.totalorder %s33, 1
      %p266 = por %p264, %p265
      %p268 = scmp.ne.s32.totalorder %s253, %s267
      %p269 = scmp.eq.s32.totalorder %s33, 0
      %p270 = por %p268, %p269
      %s272 = sadd.s32 %s271, 1
      %p275 = scmp.eq.s32.totalorder %s27, 1
      %p276 = scmp.ne.s32.totalorder %s271, %s273
      %p277 = scmp.eq.s32.totalorder %s27, 0
      %p278 = por %p276, %p277
      %p279 = scmp.ne.s32.totalorder %s271, %s273
      %p280 = scmp.eq.s32.totalorder %s32, 1
      %p281 = por %p279, %p280
      %p282 = scmp.ne.s32.totalorder %s273, %s274
      %p283 = scmp.eq.s32.totalorder %s32, 0
      %p284 = por %p282, %p283
      %p285 = scmp.ne.s32.totalorder %s273, %s274
      %p286 = scmp.eq.s32.totalorder %s33, 1
      %p287 = por %p285, %p286
      %p289 = scmp.ne.s32.totalorder %s274, %s288
      %p290 = scmp.eq.s32.totalorder %s33, 0
      %p291 = por %p289, %p290
      %s293 = sadd.s32 %s292, 1
      %p296 = scmp.eq.s32.totalorder %s27, 1
      %p297 = scmp.ne.s32.totalorder %s292, %s294
      %p298 = scmp.eq.s32.totalorder %s27, 0
      %p299 = por %p297, %p298
      %p300 = scmp.ne.s32.totalorder %s292, %s294
      %p301 = scmp.eq.s32.totalorder %s32, 1
      %p302 = por %p300, %p301
      %p303 = scmp.ne.s32.totalorder %s294, %s295
      %p304 = scmp.eq.s32.totalorder %s32, 0
      %p305 = por %p303, %p304
      %p306 = scmp.ne.s32.totalorder %s294, %s295
      %p307 = scmp.eq.s32.totalorder %s33, 1
      %p308 = por %p306, %p307
      %p310 = scmp.ne.s32.totalorder %s295, %s309
      %p311 = scmp.eq.s32.totalorder %s33, 0
      %p312 = por %p310, %p311
      %s313 = ssub.s32 %s27, %s34
      %p314 = scmp.eq.s32.totalorder %s313, 0
      %s316 = sadd.s32 %s315, 1
      %s317 = scalar_select %p314, %s315, %s316
      %p320 = pneg %p314
      %p321 = scmp.eq.s32.totalorder %s27, 1
      %p322 = por %p320, %p321
      %p323 = scmp.ne.s32.totalorder %s315, %s318
      %p324 = scmp.eq.s32.totalorder %s27, 0
      %p325 = por %p323, %p324
      %p326 = scmp.ne.s32.totalorder %s315, %s318
      %p327 = scmp.eq.s32.totalorder %s32, 1
      %p328 = por %p326, %p327
      %p329 = scmp.ne.s32.totalorder %s318, %s319
      %p330 = scmp.eq.s32.totalorder %s32, 0
      %p331 = por %p329, %p330
      %p332 = scmp.ne.s32.totalorder %s318, %s319
      %p333 = scmp.eq.s32.totalorder %s33, 1
      %p334 = por %p332, %p333
      %p336 = scmp.ne.s32.totalorder %s319, %s335
      %p337 = scmp.eq.s32.totalorder %s33, 0
      %p338 = por %p336, %p337
      %s339 = ssub.s32 %s27, %s34
      %p340 = scmp.eq.s32.totalorder %s339, 0
      %s342 = sadd.s32 %s341, 1
      %s343 = scalar_select %p340, %s341, %s342
      %p346 = pneg %p340
      %p347 = scmp.eq.s32.totalorder %s27, 1
      %p348 = por %p346, %p347
      %p349 = scmp.ne.s32.totalorder %s341, %s344
      %p350 = scmp.eq.s32.totalorder %s27, 0
      %p351 = por %p349, %p350
      %p352 = scmp.ne.s32.totalorder %s341, %s344
      %p353 = scmp.eq.s32.totalorder %s32, 1
      %p354 = por %p352, %p353
      %p355 = scmp.ne.s32.totalorder %s344, %s345
      %p356 = scmp.eq.s32.totalorder %s32, 0
      %p357 = por %p355, %p356
      %p358 = scmp.ne.s32.totalorder %s344, %s345
      %p359 = scmp.eq.s32.totalorder %s33, 1
      %p360 = por %p358, %p359
      %p362 = scmp.ne.s32.totalorder %s345, %s361
      %p363 = scmp.eq.s32.totalorder %s33, 0
      %p364 = por %p362, %p363
      %p365 = scmp.le.s32.totalorder 1, %s27
      %p366 = scmp.lt.s32.totalorder %s27, 3
      %p367 = pnand %p365, %p366
      %p368 = pneg %p367
      // Predicated region
      $region9: #{tpu_custom_call.1} parent=5 // pred_check
        _
      $region10: #{tpu_custom_call.1} parent=5 // pred_check_branch
        %370 = sbr.rel (%p367) target = $region12
      $region11: #{tpu_custom_call.1} parent=5 // pred_region
        %s371 = ssub.s32 %s27, 1
        // Predicated region
        $region13: #{tpu_custom_call.1} parent=11 // pred_check
          %p372 = pneg %p74
        $region14: #{tpu_custom_call.1} parent=11 // pred_check_branch
          %374 = sbr.rel (%p372) target = $region16
        $region15: #{tpu_custom_call.1} parent=11 // pred_region
          _
        $region16: #{tpu_custom_call.1} parent=11 // pred_fallthru
          _
        // Predicated region
        $region17: #{tpu_custom_call.1} parent=11 // pred_check
          %p375 = pneg %p95
        $region18: #{tpu_custom_call.1} parent=11 // pred_check_branch
          %377 = sbr.rel (%p375) target = $region20
        $region19: #{tpu_custom_call.1} parent=11 // pred_region
          _
        $region20: #{tpu_custom_call.1} parent=11 // pred_fallthru
          _
        // Predicated region
        $region21: #{tpu_custom_call.1} parent=11 // pred_check
          %p378 = pneg %p116
        $region22: #{tpu_custom_call.1} parent=11 // pred_check_branch
          %380 = sbr.rel (%p378) target = $region24
        $region23: #{tpu_custom_call.1} parent=11 // pred_region
          _
        $region24: #{tpu_custom_call.1} parent=11 // pred_fallthru
          _
        // Predicated region
        $region25: #{tpu_custom_call.1} parent=11 // pred_check
          %p381 = pneg %p137
        $region26: #{tpu_custom_call.1} parent=11 // pred_check_branch
          %383 = sbr.rel (%p381) target = $region28
        $region27: #{tpu_custom_call.1} parent=11 // pred_region
          _
        $region28: #{tpu_custom_call.1} parent=11 // pred_fallthru
          _
        // Predicated region
        $region29: #{tpu_custom_call.1} parent=11 // pred_check
          %p384 = pneg %p158
        $region30: #{tpu_custom_call.1} parent=11 // pred_check_branch
          %386 = sbr.rel (%p384) target = $region32
        $region31: #{tpu_custom_call.1} parent=11 // pred_region
          _
        $region32: #{tpu_custom_call.1} parent=11 // pred_fallthru
          _
        // Predicated region
        $region33: #{tpu_custom_call.1} parent=11 // pred_check
          %p387 = pneg %p179
        $region34: #{tpu_custom_call.1} parent=11 // pred_check_branch
          %389 = sbr.rel (%p387) target = $region36
        $region35: #{tpu_custom_call.1} parent=11 // pred_region
          _
        $region36: #{tpu_custom_call.1} parent=11 // pred_fallthru
          _
        // Predicated region
        $region37: #{tpu_custom_call.1} parent=11 // pred_check
          %p390 = pneg %p200
        $region38: #{tpu_custom_call.1} parent=11 // pred_check_branch
          %392 = sbr.rel (%p390) target = $region40
        $region39: #{tpu_custom_call.1} parent=11 // pred_region
          _
        $region40: #{tpu_custom_call.1} parent=11 // pred_fallthru
          _
        // Predicated region
        $region41: #{tpu_custom_call.1} parent=11 // pred_check
          %p393 = pneg %p221
        $region42: #{tpu_custom_call.1} parent=11 // pred_check_branch
          %395 = sbr.rel (%p393) target = $region44
        $region43: #{tpu_custom_call.1} parent=11 // pred_region
          _
        $region44: #{tpu_custom_call.1} parent=11 // pred_fallthru
          _
        // Predicated region
        $region45: #{tpu_custom_call.1} parent=11 // pred_check
          %p396 = pneg %p242
        $region46: #{tpu_custom_call.1} parent=11 // pred_check_branch
          %398 = sbr.rel (%p396) target = $region48
        $region47: #{tpu_custom_call.1} parent=11 // pred_region
          _
        $region48: #{tpu_custom_call.1} parent=11 // pred_fallthru
          _
        // Predicated region
        $region49: #{tpu_custom_call.1} parent=11 // pred_check
          %p399 = pneg %p263
        $region50: #{tpu_custom_call.1} parent=11 // pred_check_branch
          %401 = sbr.rel (%p399) target = $region52
        $region51: #{tpu_custom_call.1} parent=11 // pred_region
          _
        $region52: #{tpu_custom_call.1} parent=11 // pred_fallthru
          _
        // Predicated region
        $region53: #{tpu_custom_call.1} parent=11 // pred_check
          %p402 = pneg %p284
        $region54: #{tpu_custom_call.1} parent=11 // pred_check_branch
          %404 = sbr.rel (%p402) target = $region56
        $region55: #{tpu_custom_call.1} parent=11 // pred_region
          _
        $region56: #{tpu_custom_call.1} parent=11 // pred_fallthru
          _
        // Predicated region
        $region57: #{tpu_custom_call.1} parent=11 // pred_check
          %p405 = pneg %p305
        $region58: #{tpu_custom_call.1} parent=11 // pred_check_branch
          %407 = sbr.rel (%p405) target = $region60
        $region59: #{tpu_custom_call.1} parent=11 // pred_region
          _
        $region60: #{tpu_custom_call.1} parent=11 // pred_fallthru
          _
      $region12: #{tpu_custom_call.1} parent=5 // pred_fallthru
        _
      %p408 = scmp.lt.s32.totalorder %s27, 2
      // Predicated region
      $region61: #{tpu_custom_call.1} parent=5 // pred_check
        %p409 = pneg %p408
      $region62: #{tpu_custom_call.1} parent=5 // pred_check_branch
        %411 = sbr.rel (%p409) target = $region64
      $region63: #{tpu_custom_call.1} parent=5 // pred_region
        // Predicated region
        $region65: #{tpu_custom_call.1} parent=63 // pred_check
          %p412 = pneg %p47
        $region66: #{tpu_custom_call.1} parent=63 // pred_check_branch
          %414 = sbr.rel (%p412) target = $region68
        $region67: #{tpu_custom_call.1} parent=63 // pred_region
          %p415 = scmp.lt.s32.totalorder %s27, 1
          %s416 = scalar_select %p415, %s27, 1
          %s417 = smul.addr %s416, 8
          %s418 = scalar_lea.vmem %s0, %s417
        $region68: #{tpu_custom_call.1} parent=63 // pred_fallthru
          _
      $region64: #{tpu_custom_call.1} parent=5 // pred_fallthru
        _
      %p419 = scmp.le.s32.totalorder 1, %s27
      %p420 = scmp.lt.s32.totalorder %s27, 3
      %p421 = pnand %p419, %p420
      %p422 = pneg %p421
      // Predicated region
      $region69: #{tpu_custom_call.1} parent=5 // pred_check
        _
      $region70: #{tpu_custom_call.1} parent=5 // pred_check_branch
        %424 = sbr.rel (%p421) target = $region72
      $region71: #{tpu_custom_call.1} parent=5 // pred_region
        %s425 = ssub.s32 %s27, 1
        %p426 = scmp.lt.s32.totalorder %s32, 1
        %s427 = scalar_select %p426, %s32, 1
        %s428 = smul.addr %s427, 8
        %s429 = scalar_lea.vmem %s0, %s428
        %p430 = pneg %p53
        %p431 = pneg %p50
        %p432 = pneg %p74
        %p433 = pneg %p71
        %p434 = pneg %p95
        %p435 = pneg %p92
        %p436 = pneg %p116
        %p437 = pneg %p113
        %p438 = pneg %p137
        %p439 = pneg %p134
        %p440 = pneg %p158
        %p441 = pneg %p155
        %p442 = pneg %p179
        %p443 = pneg %p176
        %p444 = pneg %p200
        %p445 = pneg %p197
        %p446 = pneg %p221
        %p447 = pneg %p218
        %p448 = pneg %p242
        %p449 = pneg %p239
        %p450 = pneg %p263
        %p451 = pneg %p260
        %p452 = pneg %p284
        %p453 = pneg %p281
        %p454 = pneg %p305
        %p455 = pneg %p302
        %p456 = pneg %p331
        %p457 = pneg %p328
        %s458 = sand.u32 %s318, 1
        %s459 = scalar_lea.sflag [#allocation3], %s458
        %s460 = sand.u32 %s318, 1
        %s461 = smul.addr %s460, 8
        %s462 = scalar_lea.vmem [#allocation2], %s461
        %p463 = pneg %p357
        %p464 = pneg %p354
        %s465 = sand.u32 %s344, 1
        %s466 = scalar_lea.sflag [#allocation5], %s465
        %s467 = sand.u32 %s344, 1
        %s468 = smul.addr %s467, 8
        %s469 = scalar_lea.vmem [#allocation4], %s468
        %p470 = scmp.lt.s32.totalorder %s32, 1
        %s471 = scalar_select %p470, %s32, 1
        %s472 = smul.addr %s471, 8
        %s473 = scalar_lea.vmem %s0, %s472
        %v475 = vld [vmem:[%s473] sm:$0xff]
        %v476 = vld [vmem:[%s1] sm:$0x1]
        %v477 = vld [vmem:[%s2] sm:$0x1]
        %vm478 = vcmask 261120
        %v479 = vsel %vm478, %v475, 0.0
        %480 = vadd.xlane.f32.xlu0 %v479
        %v481 = vpop.xlane.xlu0 %480
        %v482 = vrcp.pop 32.0
        %v483 = vmul.f32 %v481, %v482
        %v484 = vsub.f32 %v475, %v483
        %v485 = vmul.f32 %v484, %v484
        %v486 = vsel %vm478, %v485, 0.0
        %487 = vadd.xlane.f32.xlu0 %v486
        %v488 = vpop.xlane.xlu0 %487
        %v489 = vmul.f32 %v488, %v482
        %v490 = vadd.f32 %v489, 1e-05
        %v491 = vrsqrt.pop %v490
        %v492 = vmul.f32 %v484, %v491
        %v494 = vlaneseq
        %v495 = vshrl.u32 %v494, 7
        %v496 = vsub.s32 0, %v495
        %v497 = vrot.slane %v476, %v496
        %v499 = vmul.f32 %v492, %v497
        %v501 = vlaneseq
        %v502 = vshrl.u32 %v501, 7
        %v503 = vsub.s32 0, %v502
        %v504 = vrot.slane %v477, %v503
        %v506 = vadd.f32 %v499, %v504
        %v507 = vpack.c.bf16 %v506, %v506
        %v508 = vld [vmem:[%s3] sm:$0xf]
        %v509 = vld [vmem:[%s3 + $0x4] sm:$0xf]
        %v510 = vld [vmem:[%s3 + $0x8] sm:$0xf]
        %v511 = vld [vmem:[%s3 + $0xc] sm:$0xf]
        %v512 = vld [vmem:[%s4] sm:$0x1]
        %v514 = vlaneseq
        %v515 = vshrl.u32 %v514, 7
        %v516 = vsub.s32 0, %v515
        %v517 = vrot.slane %v512, %v516
        %v523 = vunpack.c.l.b16 %v508
        %v524 = vunpack.c.l.b16 %v509
        %v525 = vunpack.c.l.b16 %v510
        %v526 = vunpack.c.l.b16 %v511
        %v527 = vpack.c.b16 %v524, %v523
        %v528 = vpack.c.b16 %v526, %v525
        %v532 = vsel %vm478, %v507, 0
        %534 = vmatprep.subr.bf16.mxu0 0
        %535 = vmatpush1.bf16.msra.mxu0 %v527
        %536 = vmatprep.subr.bf16.mxu0 0
        %537 = vmatpush1.bf16.msra.mxu0 %v528
        %538 = vmatprep.subr.bf16.mxu0 0
        %539 = vmatpush1.bf16.msra.mxu0 0
        %540 = vmatprep.subr.bf16.mxu0 0
        %541 = vmatpush1.bf16.msra.mxu0 0
        %542 = vmatprep.subr.bf16.mxu0 0
        %543 = vmatpush1.bf16.msra.mxu0 0
        %544 = vmatprep.subr.bf16.mxu0 0
        %545 = vmatpush1.bf16.msra.mxu0 0
        %546 = vmatprep.subr.bf16.mxu0 0
        %547 = vmatpush1.bf16.msra.mxu0 0
        %548 = vmatprep.subr.bf16.mxu0 0
        %549 = vmatpush1.bf16.msra.mxu0 0
        %550 = vmatprep.subr.bf16.mxu0 0
        %551 = vmatpush1.bf16.msra.mxu0 0
        %552 = vmatprep.subr.bf16.mxu0 0
        %553 = vmatpush1.bf16.msra.mxu0 0
        %554 = vmatprep.subr.bf16.mxu0 0
        %555 = vmatpush1.bf16.msra.mxu0 0
        %556 = vmatprep.subr.bf16.mxu0 0
        %557 = vmatpush1.bf16.msra.mxu0 0
        %558 = vmatprep.subr.bf16.mxu0 0
        %559 = vmatpush1.bf16.msra.mxu0 0
        %560 = vmatprep.subr.bf16.mxu0 0
        %561 = vmatpush1.bf16.msra.mxu0 0
        %562 = vmatprep.subr.bf16.mxu0 0
        %563 = vmatpush1.bf16.msra.mxu0 0
        %564 = vmatprep.subr.bf16.mxu0 0
        %565 = vmatpush1.bf16.msra.mxu0 0
        %566 = vmatprep.mubr.bf16.mxu0 0
        %567 = vmatmul.mubr.bf16.gmra.mrb[0].mxu0 %v532
        %v568 = vpop.f32.mrb[0].mxu0
        %v569 = vadd.f32 %v517, %v568
        %v570 = vpop.f32.mrb[0].mxu0
        %v571 = vpop.f32.mrb[0].mxu0
        %v572 = vpop.f32.mrb[0].mxu0
        %573 = vdwg.mxu0
        %v574 = vpack.c.bf16 %v569, %v569
        %576 = vrot.lane.b32.xlu0 %v574, 96
        %v577 = vpop.permute.xlu0 %576
        %vm578 = vcmask 64512
        %v580 = vsel %vm578, %v574, 0
        %v583 = vsel %vm578, %v577, 0
        %585 = vmatprep.subr.bf16.mxu0 0
        %586 = vmatpush1.bf16.xpose.msra.mxu0 %v583
        %587 = vmatprep.subr.bf16.mxu0 0
        %588 = vmatpush1.bf16.xpose.msra.mxu0 0
        %589 = vmatprep.subr.bf16.mxu0 0
        %590 = vmatpush1.bf16.xpose.msra.mxu0 0
        %591 = vmatprep.subr.bf16.mxu0 0
        %592 = vmatpush1.bf16.xpose.msra.mxu0 0
        %593 = vmatprep.subr.bf16.mxu0 0
        %594 = vmatpush1.bf16.xpose.msra.mxu0 0
        %595 = vmatprep.subr.bf16.mxu0 0
        %596 = vmatpush1.bf16.xpose.msra.mxu0 0
        %597 = vmatprep.subr.bf16.mxu0 0
        %598 = vmatpush1.bf16.xpose.msra.mxu0 0
        %599 = vmatprep.subr.bf16.mxu0 0
        %600 = vmatpush1.bf16.xpose.msra.mxu0 0
        %601 = vmatprep.subr.bf16.mxu0 0
        %602 = vmatpush1.bf16.xpose.msra.mxu0 0
        %603 = vmatprep.subr.bf16.mxu0 0
        %604 = vmatpush1.bf16.xpose.msra.mxu0 0
        %605 = vmatprep.subr.bf16.mxu0 0
        %606 = vmatpush1.bf16.xpose.msra.mxu0 0
        %607 = vmatprep.subr.bf16.mxu0 0
        %608 = vmatpush1.bf16.xpose.msra.mxu0 0
        %609 = vmatprep.subr.bf16.mxu0 0
        %610 = vmatpush1.bf16.xpose.msra.mxu0 0
        %611 = vmatprep.subr.bf16.mxu0 0
        %612 = vmatpush1.bf16.xpose.msra.mxu0 0
        %613 = vmatprep.subr.bf16.mxu0 0
        %614 = vmatpush1.bf16.xpose.msra.mxu0 0
        %615 = vmatprep.subr.bf16.mxu0 0
        %616 = vmatpush1.bf16.xpose.msra.mxu0 0
        %617 = vmatprep.mubr.bf16.mxu0 0
        %618 = vmatmul.mubr.bf16.gmra.mrb[0].mxu0 %v580
        %v619 = vpop.f32.mrb[0].mxu0
        %v620 = vadd.f32 0.0, %v619
        %v621 = vpop.f32.mrb[0].mxu0
        %v622 = vpop.f32.mrb[0].mxu0
        %v623 = vpop.f32.mrb[0].mxu0
        %624 = vdwg.mxu0
        %v625 = vsel %vm578, %v620, -inf
        %626 = vmax.xlane.f32.xlu0 %v625
        %v627 = vpop.xlane.xlu0 %626
        %v628 = vsub.f32 %v620, %v627
        %v629 = vmul.f32 %v628, 1.442695
        %v630 = vpow.pop %v629
        %v631 = vsel %vm578, %v630, 0.0
        %632 = vadd.xlane.f32.xlu0 %v631
        %v633 = vpop.xlane.xlu0 %632
        %v634 = vrcp.pop %v633
        %v635 = vmul.f32 %v630, %v634
        %v636 = vadd.f32 %v635, 0.0
        %v637 = vpack.c.bf16 %v635, %v635
        %638 = vrot.lane.b32.xlu0 %v574, 64
        %v639 = vpop.permute.xlu0 %638
        %v641 = vsel %vm578, %v637, 0
        %vm643 = vcmask 1043456
        %v645 = vsel %vm643, %v639, 0
        %647 = vmatprep.subr.bf16.mxu0 0
        %648 = vmatpush1.bf16.msra.mxu0 %v645
        %649 = vmatprep.subr.bf16.mxu0 0
        %650 = vmatpush1.bf16.msra.mxu0 0
        %651 = vmatprep.subr.bf16.mxu0 0
        %652 = vmatpush1.bf16.msra.mxu0 0
        %653 = vmatprep.subr.bf16.mxu0 0
        %654 = vmatpush1.bf16.msra.mxu0 0
        %655 = vmatprep.subr.bf16.mxu0 0
        %656 = vmatpush1.bf16.msra.mxu0 0
        %657 = vmatprep.subr.bf16.mxu0 0
        %658 = vmatpush1.bf16.msra.mxu0 0
        %659 = vmatprep.subr.bf16.mxu0 0
        %660 = vmatpush1.bf16.msra.mxu0 0
        %661 = vmatprep.subr.bf16.mxu0 0
        %662 = vmatpush1.bf16.msra.mxu0 0
        %663 = vmatprep.subr.bf16.mxu0 0
        %664 = vmatpush1.bf16.msra.mxu0 0
        %665 = vmatprep.subr.bf16.mxu0 0
        %666 = vmatpush1.bf16.msra.mxu0 0
        %667 = vmatprep.subr.bf16.mxu0 0
        %668 = vmatpush1.bf16.msra.mxu0 0
        %669 = vmatprep.subr.bf16.mxu0 0
        %670 = vmatpush1.bf16.msra.mxu0 0
        %671 = vmatprep.subr.bf16.mxu0 0
        %672 = vmatpush1.bf16.msra.mxu0 0
        %673 = vmatprep.subr.bf16.mxu0 0
        %674 = vmatpush1.bf16.msra.mxu0 0
        %675 = vmatprep.subr.bf16.mxu0 0
        %676 = vmatpush1.bf16.msra.mxu0 0
        %677 = vmatprep.subr.bf16.mxu0 0
        %678 = vmatpush1.bf16.msra.mxu0 0
        %679 = vmatprep.mubr.bf16.mxu0 0
        %680 = vmatmul.mubr.bf16.gmra.mrb[0].mxu0 %v641
        %v681 = vpop.f32.mrb[0].mxu0
        %v682 = vadd.f32 0.0, %v681
        %v683 = vpop.f32.mrb[0].mxu0
        %v684 = vpop.f32.mrb[0].mxu0
        %v685 = vpop.f32.mrb[0].mxu0
        %686 = vdwg.mxu0
        %v687 = vpack.c.bf16 %v682, %v682
        %v688 = vld [vmem:[%s5] sm:$0xf]
        %689 = vrot.lane.b32.xlu0 %v574, 120
        %v690 = vpop.permute.xlu0 %689
        %691 = vrot.lane.b32.xlu0 %v574, 88
        %v692 = vpop.permute.xlu0 %691
        %v694 = vsel %vm578, %v690, 0
        %v697 = vsel %vm578, %v692, 0
        %699 = vmatprep.subr.bf16.mxu0 0
        %700 = vmatpush1.bf16.xpose.msra.mxu0 %v697
        %701 = vmatprep.subr.bf16.mxu0 0
        %702 = vmatpush1.bf16.xpose.msra.mxu0 0
        %703 = vmatprep.subr.bf16.mxu0 0
        %704 = vmatpush1.bf16.xpose.msra.mxu0 0
        %705 = vmatprep.subr.bf16.mxu0 0
        %706 = vmatpush1.bf16.xpose.msra.mxu0 0
        %707 = vmatprep.subr.bf16.mxu0 0
        %708 = vmatpush1.bf16.xpose.msra.mxu0 0
        %709 = vmatprep.subr.bf16.mxu0 0
        %710 = vmatpush1.bf16.xpose.msra.mxu0 0
        %711 = vmatprep.subr.bf16.mxu0 0
        %712 = vmatpush1.bf16.xpose.msra.mxu0 0
        %713 = vmatprep.subr.bf16.mxu0 0
        %714 = vmatpush1.bf16.xpose.msra.mxu0 0
        %715 = vmatprep.subr.bf16.mxu0 0
        %716 = vmatpush1.bf16.xpose.msra.mxu0 0
        %717 = vmatprep.subr.bf16.mxu0 0
        %718 = vmatpush1.bf16.xpose.msra.mxu0 0
        %719 = vmatprep.subr.bf16.mxu0 0
        %720 = vmatpush1.bf16.xpose.msra.mxu0 0
        %721 = vmatprep.subr.bf16.mxu0 0
        %722 = vmatpush1.bf16.xpose.msra.mxu0 0
        %723 = vmatprep.subr.bf16.mxu0 0
        %724 = vmatpush1.bf16.xpose.msra.mxu0 0
        %725 = vmatprep.subr.bf16.mxu0 0
        %726 = vmatpush1.bf16.xpose.msra.mxu0 0
        %727 = vmatprep.subr.bf16.mxu0 0
        %728 = vmatpush1.bf16.xpose.msra.mxu0 0
        %729 = vmatprep.subr.bf16.mxu0 0
        %730 = vmatpush1.bf16.xpose.msra.mxu0 0
        %731 = vmatprep.mubr.bf16.mxu0 0
        %732 = vmatmul.mubr.bf16.gmra.mrb[0].mxu0 %v694
        %v733 = vpop.f32.mrb[0].mxu0
        %v734 = vadd.f32 0.0, %v733
        %v735 = vpop.f32.mrb[0].mxu0
        %v736 = vpop.f32.mrb[0].mxu0
        %v737 = vpop.f32.mrb[0].mxu0
        %738 = vdwg.mxu0
        %v739 = vsel %vm578, %v734, -inf
        %740 = vmax.xlane.f32.xlu0 %v739
        %v741 = vpop.xlane.xlu0 %740
        %v742 = vsub.f32 %v734, %v741
        %v743 = vmul.f32 %v742, 1.442695
        %v744 = vpow.pop %v743
        %v745 = vsel %vm578, %v744, 0.0
        %746 = vadd.xlane.f32.xlu0 %v745
        %v747 = vpop.xlane.xlu0 %746
        %v748 = vrcp.pop %v747
        %v749 = vmul.f32 %v744, %v748
        %v750 = vadd.f32 %v636, %v749
        %v751 = vpack.c.bf16 %v749, %v749
        %752 = vrot.lane.b32.xlu0 %v574, 56
        %v753 = vpop.permute.xlu0 %752
        %v755 = vsel %vm578, %v751, 0
        %v758 = vsel %vm643, %v753, 0
        %760 = vmatprep.subr.bf16.mxu0 0
        %761 = vmatpush1.bf16.msra.mxu0 %v758
        %762 = vmatprep.subr.bf16.mxu0 0
        %763 = vmatpush1.bf16.msra.mxu0 0
        %764 = vmatprep.subr.bf16.mxu0 0
        %765 = vmatpush1.bf16.msra.mxu0 0
        %766 = vmatprep.subr.bf16.mxu0 0
        %767 = vmatpush1.bf16.msra.mxu0 0
        %768 = vmatprep.subr.bf16.mxu0 0
        %769 = vmatpush1.bf16.msra.mxu0 0
        %770 = vmatprep.subr.bf16.mxu0 0
        %771 = vmatpush1.bf16.msra.mxu0 0
        %772 = vmatprep.subr.bf16.mxu0 0
        %773 = vmatpush1.bf16.msra.mxu0 0
        %774 = vmatprep.subr.bf16.mxu0 0
        %775 = vmatpush1.bf16.msra.mxu0 0
        %776 = vmatprep.subr.bf16.mxu0 0
        %777 = vmatpush1.bf16.msra.mxu0 0
        %778 = vmatprep.subr.bf16.mxu0 0
        %779 = vmatpush1.bf16.msra.mxu0 0
        %780 = vmatprep.subr.bf16.mxu0 0
        %781 = vmatpush1.bf16.msra.mxu0 0
        %782 = vmatprep.subr.bf16.mxu0 0
        %783 = vmatpush1.bf16.msra.mxu0 0
        %784 = vmatprep.subr.bf16.mxu0 0
        %785 = vmatpush1.bf16.msra.mxu0 0
        %786 = vmatprep.subr.bf16.mxu0 0
        %787 = vmatpush1.bf16.msra.mxu0 0
        %788 = vmatprep.subr.bf16.mxu0 0
        %789 = vmatpush1.bf16.msra.mxu0 0
        %790 = vmatprep.subr.bf16.mxu0 0
        %791 = vmatpush1.bf16.msra.mxu0 0
        %792 = vmatprep.mubr.bf16.mxu0 0
        %793 = vmatmul.mubr.bf16.gmra.mrb[0].mxu0 %v755
        %v794 = vpop.f32.mrb[0].mxu0
        %v795 = vadd.f32 0.0, %v794
        %v796 = vpop.f32.mrb[0].mxu0
        %v797 = vpop.f32.mrb[0].mxu0
        %v798 = vpop.f32.mrb[0].mxu0
        %799 = vdwg.mxu0
        %v800 = vpack.c.bf16 %v795, %v795
        %v801 = vld [vmem:[%s5 + $0x4] sm:$0xf]
        %v803 = vsel %vm578, %v800, 0
        %v806 = vsel %vm643, %v801, 0
        %808 = vmatprep.subr.bf16.mxu0 0
        %809 = vmatpush1.bf16.msra.mxu0 %v806
        %810 = vmatprep.subr.bf16.mxu0 0
        %811 = vmatpush1.bf16.msra.mxu0 0
        %812 = vmatprep.subr.bf16.mxu0 0
        %813 = vmatpush1.bf16.msra.mxu0 0
        %814 = vmatprep.subr.bf16.mxu0 0
        %815 = vmatpush1.bf16.msra.mxu0 0
        %816 = vmatprep.subr.bf16.mxu0 0
        %817 = vmatpush1.bf16.msra.mxu0 0
        %818 = vmatprep.subr.bf16.mxu0 0
        %819 = vmatpush1.bf16.msra.mxu0 0
        %820 = vmatprep.subr.bf16.mxu0 0
        %821 = vmatpush1.bf16.msra.mxu0 0
        %822 = vmatprep.subr.bf16.mxu0 0
        %823 = vmatpush1.bf16.msra.mxu0 0
        %824 = vmatprep.subr.bf16.mxu0 0
        %825 = vmatpush1.bf16.msra.mxu0 0
        %826 = vmatprep.subr.bf16.mxu0 0
        %827 = vmatpush1.bf16.msra.mxu0 0
        %828 = vmatprep.subr.bf16.mxu0 0
        %829 = vmatpush1.bf16.msra.mxu0 0
        %830 = vmatprep.subr.bf16.mxu0 0
        %831 = vmatpush1.bf16.msra.mxu0 0
        %832 = vmatprep.subr.bf16.mxu0 0
        %833 = vmatpush1.bf16.msra.mxu0 0
        %834 = vmatprep.subr.bf16.mxu0 0
        %835 = vmatpush1.bf16.msra.mxu0 0
        %836 = vmatprep.subr.bf16.mxu0 0
        %837 = vmatpush1.bf16.msra.mxu0 0
        %838 = vmatprep.subr.bf16.mxu0 0
        %839 = vmatpush1.bf16.msra.mxu0 0
        %840 = vmatprep.mubr.bf16.mxu0 0
        %841 = vmatmul.mubr.bf16.gmra.mrb[0].mxu0 %v803
        %v842 = vpop.f32.mrb[0].mxu0
        %v843 = vadd.f32 0.0, %v842
        %v844 = vpop.f32.mrb[0].mxu0
        %v845 = vpop.f32.mrb[0].mxu0
        %v846 = vpop.f32.mrb[0].mxu0
        %847 = vdwg.mxu0
        %v849 = vsel %vm578, %v687, 0
        %v852 = vsel %vm643, %v688, 0
        %854 = vmatprep.subr.bf16.mxu0 0
        %855 = vmatpush1.bf16.msra.mxu0 %v852
        %856 = vmatprep.subr.bf16.mxu0 0
        %857 = vmatpush1.bf16.msra.mxu0 0
        %858 = vmatprep.subr.bf16.mxu0 0
        %859 = vmatpush1.bf16.msra.mxu0 0
        %860 = vmatprep.subr.bf16.mxu0 0
        %861 = vmatpush1.bf16.msra.mxu0 0
        %862 = vmatprep.subr.bf16.mxu0 0
        %863 = vmatpush1.bf16.msra.mxu0 0
        %864 = vmatprep.subr.bf16.mxu0 0
        %865 = vmatpush1.bf16.msra.mxu0 0
        %866 = vmatprep.subr.bf16.mxu0 0
        %867 = vmatpush1.bf16.msra.mxu0 0
        %868 = vmatprep.subr.bf16.mxu0 0
        %869 = vmatpush1.bf16.msra.mxu0 0
        %870 = vmatprep.subr.bf16.mxu0 0
        %871 = vmatpush1.bf16.msra.mxu0 0
        %872 = vmatprep.subr.bf16.mxu0 0
        %873 = vmatpush1.bf16.msra.mxu0 0
        %874 = vmatprep.subr.bf16.mxu0 0
        %875 = vmatpush1.bf16.msra.mxu0 0
        %876 = vmatprep.subr.bf16.mxu0 0
        %877 = vmatpush1.bf16.msra.mxu0 0
        %878 = vmatprep.subr.bf16.mxu0 0
        %879 = vmatpush1.bf16.msra.mxu0 0
        %880 = vmatprep.subr.bf16.mxu0 0
        %881 = vmatpush1.bf16.msra.mxu0 0
        %882 = vmatprep.subr.bf16.mxu0 0
        %883 = vmatpush1.bf16.msra.mxu0 0
        %884 = vmatprep.subr.bf16.mxu0 0
        %885 = vmatpush1.bf16.msra.mxu0 0
        %886 = vmatprep.mubr.bf16.mxu0 0
        %887 = vmatmul.mubr.bf16.gmra.mrb[0].mxu0 %v849
        %v888 = vpop.f32.mrb[0].mxu0
        %v889 = vadd.f32 %v843, %v888
        %v890 = vpop.f32.mrb[0].mxu0
        %v891 = vpop.f32.mrb[0].mxu0
        %v892 = vpop.f32.mrb[0].mxu0
        %893 = vdwg.mxu0
        %894 = vrot.lane.b32.xlu0 %v574, 112
        %v895 = vpop.permute.xlu0 %894
        %896 = vrot.lane.b32.xlu0 %v574, 80
        %v897 = vpop.permute.xlu0 %896
        %v899 = vsel %vm578, %v895, 0
        %v902 = vsel %vm578, %v897, 0
        %904 = vmatprep.subr.bf16.mxu0 0
        %905 = vmatpush1.bf16.xpose.msra.mxu0 %v902
        %906 = vmatprep.subr.bf16.mxu0 0
        %907 = vmatpush1.bf16.xpose.msra.mxu0 0
        %908 = vmatprep.subr.bf16.mxu0 0
        %909 = vmatpush1.bf16.xpose.msra.mxu0 0
        %910 = vmatprep.subr.bf16.mxu0 0
        %911 = vmatpush1.bf16.xpose.msra.mxu0 0
        %912 = vmatprep.subr.bf16.mxu0 0
        %913 = vmatpush1.bf16.xpose.msra.mxu0 0
        %914 = vmatprep.subr.bf16.mxu0 0
        %915 = vmatpush1.bf16.xpose.msra.mxu0 0
        %916 = vmatprep.subr.bf16.mxu0 0
        %917 = vmatpush1.bf16.xpose.msra.mxu0 0
        %918 = vmatprep.subr.bf16.mxu0 0
        %919 = vmatpush1.bf16.xpose.msra.mxu0 0
        %920 = vmatprep.subr.bf16.mxu0 0
        %921 = vmatpush1.bf16.xpose.msra.mxu0 0
        %922 = vmatprep.subr.bf16.mxu0 0
        %923 = vmatpush1.bf16.xpose.msra.mxu0 0
        %924 = vmatprep.subr.bf16.mxu0 0
        %925 = vmatpush1.bf16.xpose.msra.mxu0 0
        %926 = vmatprep.subr.bf16.mxu0 0
        %927 = vmatpush1.bf16.xpose.msra.mxu0 0
        %928 = vmatprep.subr.bf16.mxu0 0
        %929 = vmatpush1.bf16.xpose.msra.mxu0 0
        %930 = vmatprep.subr.bf16.mxu0 0
        %931 = vmatpush1.bf16.xpose.msra.mxu0 0
        %932 = vmatprep.subr.bf16.mxu0 0
        %933 = vmatpush1.bf16.xpose.msra.mxu0 0
        %934 = vmatprep.subr.bf16.mxu0 0
        %935 = vmatpush1.bf16.xpose.msra.mxu0 0
        %936 = vmatprep.mubr.bf16.mxu0 0
        %937 = vmatmul.mubr.bf16.gmra.mrb[0].mxu0 %v899
        %v938 = vpop.f32.mrb[0].mxu0
        %v939 = vadd.f32 0.0, %v938
        %v940 = vpop.f32.mrb[0].mxu0
        %v941 = vpop.f32.mrb[0].mxu0
        %v942 = vpop.f32.mrb[0].mxu0
        %943 = vdwg.mxu0
        %v944 = vsel %vm578, %v939, -inf
        %945 = vmax.xlane.f32.xlu0 %v944
        %v946 = vpop.xlane.xlu0 %945
        %v947 = vsub.f32 %v939, %v946
        %v948 = vmul.f32 %v947, 1.442695
        %v949 = vpow.pop %v948
        %v950 = vsel %vm578, %v949, 0.0
        %951 = vadd.xlane.f32.xlu0 %v950
        %v952 = vpop.xlane.xlu0 %951
        %v953 = vrcp.pop %v952
        %v954 = vmul.f32 %v949, %v953
        %v955 = vadd.f32 %v750, %v954
        %v956 = vpack.c.bf16 %v954, %v954
        %957 = vrot.lane.b32.xlu0 %v574, 48
        %v958 = vpop.permute.xlu0 %957
        %v960 = vsel %vm578, %v956, 0
        %v963 = vsel %vm643, %v958, 0
        %965 = vmatprep.subr.bf16.mxu0 0
        %966 = vmatpush1.bf16.msra.mxu0 %v963
        %967 = vmatprep.subr.bf16.mxu0 0
        %968 = vmatpush1.bf16.msra.mxu0 0
        %969 = vmatprep.subr.bf16.mxu0 0
        %970 = vmatpush1.bf16.msra.mxu0 0
        %971 = vmatprep.subr.bf16.mxu0 0
        %972 = vmatpush1.bf16.msra.mxu0 0
        %973 = vmatprep.subr.bf16.mxu0 0
        %974 = vmatpush1.bf16.msra.mxu0 0
        %975 = vmatprep.subr.bf16.mxu0 0
        %976 = vmatpush1.bf16.msra.mxu0 0
        %977 = vmatprep.subr.bf16.mxu0 0
        %978 = vmatpush1.bf16.msra.mxu0 0
        %979 = vmatprep.subr.bf16.mxu0 0
        %980 = vmatpush1.bf16.msra.mxu0 0
        %981 = vmatprep.subr.bf16.mxu0 0
        %982 = vmatpush1.bf16.msra.mxu0 0
        %983 = vmatprep.subr.bf16.mxu0 0
        %984 = vmatpush1.bf16.msra.mxu0 0
        %985 = vmatprep.subr.bf16.mxu0 0
        %986 = vmatpush1.bf16.msra.mxu0 0
        %987 = vmatprep.subr.bf16.mxu0 0
        %988 = vmatpush1.bf16.msra.mxu0 0
        %989 = vmatprep.subr.bf16.mxu0 0
        %990 = vmatpush1.bf16.msra.mxu0 0
        %991 = vmatprep.subr.bf16.mxu0 0
        %992 = vmatpush1.bf16.msra.mxu0 0
        %993 = vmatprep.subr.bf16.mxu0 0
        %994 = vmatpush1.bf16.msra.mxu0 0
        %995 = vmatprep.subr.bf16.mxu0 0
        %996 = vmatpush1.bf16.msra.mxu0 0
        %997 = vmatprep.mubr.bf16.mxu0 0
        %998 = vmatmul.mubr.bf16.gmra.mrb[0].mxu0 %v960
        %v999 = vpop.f32.mrb[0].mxu0
        %v1000 = vadd.f32 0.0, %v999
        %v1001 = vpop.f32.mrb[0].mxu0
        %v1002 = vpop.f32.mrb[0].mxu0
        %v1003 = vpop.f32.mrb[0].mxu0
        %1004 = vdwg.mxu0
        %v1005 = vpack.c.bf16 %v1000, %v1000
        %v1006 = vld [vmem:[%s5 + $0x8] sm:$0xf]
        %v1008 = vsel %vm578, %v1005, 0
        %v1011 = vsel %vm643, %v1006, 0
        %1013 = vmatprep.subr.bf16.mxu0 0
        %1014 = vmatpush1.bf16.msra.mxu0 %v1011
        %1015 = vmatprep.subr.bf16.mxu0 0
        %1016 = vmatpush1.bf16.msra.mxu0 0
        %1017 = vmatprep.subr.bf16.mxu0 0
        %1018 = vmatpush1.bf16.msra.mxu0 0
        %1019 = vmatprep.subr.bf16.mxu0 0
        %1020 = vmatpush1.bf16.msra.mxu0 0
        %1021 = vmatprep.subr.bf16.mxu0 0
        %1022 = vmatpush1.bf16.msra.mxu0 0
        %1023 = vmatprep.subr.bf16.mxu0 0
        %1024 = vmatpush1.bf16.msra.mxu0 0
        %1025 = vmatprep.subr.bf16.mxu0 0
        %1026 = vmatpush1.bf16.msra.mxu0 0
        %1027 = vmatprep.subr.bf16.mxu0 0
        %1028 = vmatpush1.bf16.msra.mxu0 0
        %1029 = vmatprep.subr.bf16.mxu0 0
        %1030 = vmatpush1.bf16.msra.mxu0 0
        %1031 = vmatprep.subr.bf16.mxu0 0
        %1032 = vmatpush1.bf16.msra.mxu0 0
        %1033 = vmatprep.subr.bf16.mxu0 0
        %1034 = vmatpush1.bf16.msra.mxu0 0
        %1035 = vmatprep.subr.bf16.mxu0 0
        %1036 = vmatpush1.bf16.msra.mxu0 0
        %1037 = vmatprep.subr.bf16.mxu0 0
        %1038 = vmatpush1.bf16.msra.mxu0 0
        %1039 = vmatprep.subr.bf16.mxu0 0
        %1040 = vmatpush1.bf16.msra.mxu0 0
        %1041 = vmatprep.subr.bf16.mxu0 0
        %1042 = vmatpush1.bf16.msra.mxu0 0
        %1043 = vmatprep.subr.bf16.mxu0 0
        %1044 = vmatpush1.bf16.msra.mxu0 0
        %1045 = vmatprep.mubr.bf16.mxu0 0
        %1046 = vmatmul.mubr.bf16.gmra.mrb[0].mxu0 %v1008
        %v1047 = vpop.f32.mrb[0].mxu0
        %v1048 = vadd.f32 0.0, %v1047
        %v1049 = vpop.f32.mrb[0].mxu0
        %v1050 = vpop.f32.mrb[0].mxu0
        %v1051 = vpop.f32.mrb[0].mxu0
        %1052 = vdwg.mxu0
        %v1053 = vadd.f32 %v889, %v1048
        %1054 = vrot.lane.b32.xlu0 %v574, 104
        %v1055 = vpop.permute.xlu0 %1054
        %1056 = vrot.lane.b32.xlu0 %v574, 72
        %v1057 = vpop.permute.xlu0 %1056
        %v1059 = vsel %vm578, %v1055, 0
        %v1062 = vsel %vm578, %v1057, 0
        %1064 = vmatprep.subr.bf16.mxu0 0
        %1065 = vmatpush1.bf16.xpose.msra.mxu0 %v1062
        %1066 = vmatprep.subr.bf16.mxu0 0
        %1067 = vmatpush1.bf16.xpose.msra.mxu0 0
        %1068 = vmatprep.subr.bf16.mxu0 0
        %1069 = vmatpush1.bf16.xpose.msra.mxu0 0
        %1070 = vmatprep.subr.bf16.mxu0 0
        %1071 = vmatpush1.bf16.xpose.msra.mxu0 0
        %1072 = vmatprep.subr.bf16.mxu0 0
        %1073 = vmatpush1.bf16.xpose.msra.mxu0 0
        %1074 = vmatprep.subr.bf16.mxu0 0
        %1075 = vmatpush1.bf16.xpose.msra.mxu0 0
        %1076 = vmatprep.subr.bf16.mxu0 0
        %1077 = vmatpush1.bf16.xpose.msra.mxu0 0
        %1078 = vmatprep.subr.bf16.mxu0 0
        %1079 = vmatpush1.bf16.xpose.msra.mxu0 0
        %1080 = vmatprep.subr.bf16.mxu0 0
        %1081 = vmatpush1.bf16.xpose.msra.mxu0 0
        %1082 = vmatprep.subr.bf16.mxu0 0
        %1083 = vmatpush1.bf16.xpose.msra.mxu0 0
        %1084 = vmatprep.subr.bf16.mxu0 0
        %1085 = vmatpush1.bf16.xpose.msra.mxu0 0
        %1086 = vmatprep.subr.bf16.mxu0 0
        %1087 = vmatpush1.bf16.xpose.msra.mxu0 0
        %1088 = vmatprep.subr.bf16.mxu0 0
        %1089 = vmatpush1.bf16.xpose.msra.mxu0 0
        %1090 = vmatprep.subr.bf16.mxu0 0
        %1091 = vmatpush1.bf16.xpose.msra.mxu0 0
        %1092 = vmatprep.subr.bf16.mxu0 0
        %1093 = vmatpush1.bf16.xpose.msra.mxu0 0
        %1094 = vmatprep.subr.bf16.mxu0 0
        %1095 = vmatpush1.bf16.xpose.msra.mxu0 0
        %1096 = vmatprep.mubr.bf16.mxu0 0
        %1097 = vmatmul.mubr.bf16.gmra.mrb[0].mxu0 %v1059
        %v1098 = vpop.f32.mrb[0].mxu0
        %v1099 = vadd.f32 0.0, %v1098
        %v1100 = vpop.f32.mrb[0].mxu0
        %v1101 = vpop.f32.mrb[0].mxu0
        %v1102 = vpop.f32.mrb[0].mxu0
        %1103 = vdwg.mxu0
        %v1104 = vsel %vm578, %v1099, -inf
        %1105 = vmax.xlane.f32.xlu0 %v1104
        %v1106 = vpop.xlane.xlu0 %1105
        %v1107 = vsub.f32 %v1099, %v1106
        %v1108 = vmul.f32 %v1107, 1.442695
        %v1109 = vpow.pop %v1108
        %v1110 = vsel %vm578, %v1109, 0.0
        %1111 = vadd.xlane.f32.xlu0 %v1110
        %v1112 = vpop.xlane.xlu0 %1111
        %v1113 = vrcp.pop %v1112
        %v1114 = vmul.f32 %v1109, %v1113
        %v1115 = vadd.f32 %v955, %v1114
        %v1116 = vpack.c.bf16 %v1114, %v1114
        %1117 = vrot.lane.b32.xlu0 %v574, 40
        %v1118 = vpop.permute.xlu0 %1117
        %v1120 = vsel %vm578, %v1116, 0
        %v1123 = vsel %vm643, %v1118, 0
        %1125 = vmatprep.subr.bf16.mxu0 0
        %1126 = vmatpush1.bf16.msra.mxu0 %v1123
        %1127 = vmatprep.subr.bf16.mxu0 0
        %1128 = vmatpush1.bf16.msra.mxu0 0
        %1129 = vmatprep.subr.bf16.mxu0 0
        %1130 = vmatpush1.bf16.msra.mxu0 0
        %1131 = vmatprep.subr.bf16.mxu0 0
        %1132 = vmatpush1.bf16.msra.mxu0 0
        %1133 = vmatprep.subr.bf16.mxu0 0
        %1134 = vmatpush1.bf16.msra.mxu0 0
        %1135 = vmatprep.subr.bf16.mxu0 0
        %1136 = vmatpush1.bf16.msra.mxu0 0
        %1137 = vmatprep.subr.bf16.mxu0 0
        %1138 = vmatpush1.bf16.msra.mxu0 0
        %1139 = vmatprep.subr.bf16.mxu0 0
        %1140 = vmatpush1.bf16.msra.mxu0 0
        %1141 = vmatprep.subr.bf16.mxu0 0
        %1142 = vmatpush1.bf16.msra.mxu0 0
        %1143 = vmatprep.subr.bf16.mxu0 0
        %1144 = vmatpush1.bf16.msra.mxu0 0
        %1145 = vmatprep.subr.bf16.mxu0 0
        %1146 = vmatpush1.bf16.msra.mxu0 0
        %1147 = vmatprep.subr.bf16.mxu0 0
        %1148 = vmatpush1.bf16.msra.mxu0 0
        %1149 = vmatprep.subr.bf16.mxu0 0
        %1150 = vmatpush1.bf16.msra.mxu0 0
        %1151 = vmatprep.subr.bf16.mxu0 0
        %1152 = vmatpush1.bf16.msra.mxu0 0
        %1153 = vmatprep.subr.bf16.mxu0 0
        %1154 = vmatpush1.bf16.msra.mxu0 0
        %1155 = vmatprep.subr.bf16.mxu0 0
        %1156 = vmatpush1.bf16.msra.mxu0 0
        %1157 = vmatprep.mubr.bf16.mxu0 0
        %1158 = vmatmul.mubr.bf16.gmra.mrb[0].mxu0 %v1120
        %v1159 = vpop.f32.mrb[0].mxu0
        %v1160 = vadd.f32 0.0, %v1159
        %v1161 = vpop.f32.mrb[0].mxu0
        %v1162 = vpop.f32.mrb[0].mxu0
        %v1163 = vpop.f32.mrb[0].mxu0
        %1164 = vdwg.mxu0
        %v1165 = vpack.c.bf16 %v1160, %v1160
        %v1166 = vld [vmem:[%s5 + $0xc] sm:$0xf]
        %v1168 = vsel %vm578, %v1165, 0
        %v1171 = vsel %vm643, %v1166, 0
        %1173 = vmatprep.subr.bf16.mxu0 0
        %1174 = vmatpush1.bf16.msra.mxu0 %v1171
        %1175 = vmatprep.subr.bf16.mxu0 0
        %1176 = vmatpush1.bf16.msra.mxu0 0
        %1177 = vmatprep.subr.bf16.mxu0 0
        %1178 = vmatpush1.bf16.msra.mxu0 0
        %1179 = vmatprep.subr.bf16.mxu0 0
        %1180 = vmatpush1.bf16.msra.mxu0 0
        %1181 = vmatprep.subr.bf16.mxu0 0
        %1182 = vmatpush1.bf16.msra.mxu0 0
        %1183 = vmatprep.subr.bf16.mxu0 0
        %1184 = vmatpush1.bf16.msra.mxu0 0
        %1185 = vmatprep.subr.bf16.mxu0 0
        %1186 = vmatpush1.bf16.msra.mxu0 0
        %1187 = vmatprep.subr.bf16.mxu0 0
        %1188 = vmatpush1.bf16.msra.mxu0 0
        %1189 = vmatprep.subr.bf16.mxu0 0
        %1190 = vmatpush1.bf16.msra.mxu0 0
        %1191 = vmatprep.subr.bf16.mxu0 0
        %1192 = vmatpush1.bf16.msra.mxu0 0
        %1193 = vmatprep.subr.bf16.mxu0 0
        %1194 = vmatpush1.bf16.msra.mxu0 0
        %1195 = vmatprep.subr.bf16.mxu0 0
        %1196 = vmatpush1.bf16.msra.mxu0 0
        %1197 = vmatprep.subr.bf16.mxu0 0
        %1198 = vmatpush1.bf16.msra.mxu0 0
        %1199 = vmatprep.subr.bf16.mxu0 0
        %1200 = vmatpush1.bf16.msra.mxu0 0
        %1201 = vmatprep.subr.bf16.mxu0 0
        %1202 = vmatpush1.bf16.msra.mxu0 0
        %1203 = vmatprep.subr.bf16.mxu0 0
        %1204 = vmatpush1.bf16.msra.mxu0 0
        %1205 = vmatprep.mubr.bf16.mxu0 0
        %1206 = vmatmul.mubr.bf16.gmra.mrb[0].mxu0 %v1168
        %v1207 = vpop.f32.mrb[0].mxu0
        %v1208 = vadd.f32 0.0, %v1207
        %v1209 = vpop.f32.mrb[0].mxu0
        %v1210 = vpop.f32.mrb[0].mxu0
        %v1211 = vpop.f32.mrb[0].mxu0
        %1212 = vdwg.mxu0
        %v1213 = vadd.f32 %v1053, %v1208
        %v1214 = vmul.f32 %v1115, 0.25
        %1215 = vst.msk [vmem:[%s469] sm:$0xff] %vm578, %v1214
        %v1216 = vld [vmem:[%s6] sm:$0x1]
        %v1218 = vlaneseq
        %v1219 = vshrl.u32 %v1218, 7
        %v1220 = vsub.s32 0, %v1219
        %v1221 = vrot.slane %v1216, %v1220
        %v1223 = vadd.f32 %v1213, %v1221
        %v1224 = vadd.f32 %v475, %v1223
        %v1225 = vld [vmem:[%s7] sm:$0x1]
        %v1226 = vld [vmem:[%s8] sm:$0x1]
        %v1227 = vsel %vm478, %v1224, 0.0
        %1228 = vadd.xlane.f32.xlu0 %v1227
        %v1229 = vpop.xlane.xlu0 %1228
        %v1230 = vmul.f32 %v1229, %v482
        %v1231 = vsub.f32 %v1224, %v1230
        %v1232 = vmul.f32 %v1231, %v1231
        %v1233 = vsel %vm478, %v1232, 0.0
        %1234 = vadd.xlane.f32.xlu0 %v1233
        %v1235 = vpop.xlane.xlu0 %1234
        %v1236 = vmul.f32 %v1235, %v482
        %v1237 = vadd.f32 %v1236, 1e-05
        %v1238 = vrsqrt.pop %v1237
        %v1239 = vmul.f32 %v1231, %v1238
        %v1241 = vlaneseq
        %v1242 = vshrl.u32 %v1241, 7
        %v1243 = vsub.s32 0, %v1242
        %v1244 = vrot.slane %v1225, %v1243
        %v1246 = vmul.f32 %v1239, %v1244
        %v1248 = vlaneseq
        %v1249 = vshrl.u32 %v1248, 7
        %v1250 = vsub.s32 0, %v1249
        %v1251 = vrot.slane %v1226, %v1250
        %v1253 = vadd.f32 %v1246, %v1251
        %v1254 = vpack.c.bf16 %v1253, %v1253
        %v1255 = vld [vmem:[%s9] sm:$0xf]
        %v1256 = vld [vmem:[%s9 + $0x4] sm:$0xf]
        %v1257 = vld [vmem:[%s9 + $0x8] sm:$0xf]
        %v1258 = vld [vmem:[%s9 + $0xc] sm:$0xf]
        %v1259 = vld [vmem:[%s10] sm:$0x1]
        %v1261 = vlaneseq
        %v1262 = vshrl.u32 %v1261, 7
        %v1263 = vsub.s32 0, %v1262
        %v1264 = vrot.slane %v1259, %v1263
        %v1270 = vunpack.c.l.b16 %v1255
        %v1271 = vunpack.c.l.b16 %v1256
        %v1272 = vunpack.c.l.b16 %v1257
        %v1273 = vunpack.c.l.b16 %v1258
        %v1274 = vpack.c.b16 %v1271, %v1270
        %v1275 = vpack.c.b16 %v1273, %v1272
        %v1279 = vsel %vm478, %v1254, 0
        %1281 = vmatprep.subr.bf16.mxu0 0
        %1282 = vmatpush1.bf16.msra.mxu0 %v1274
        %1283 = vmatprep.subr.bf16.mxu0 0
        %1284 = vmatpush1.bf16.msra.mxu0 %v1275
        %1285 = vmatprep.subr.bf16.mxu0 0
        %1286 = vmatpush1.bf16.msra.mxu0 0
        %1287 = vmatprep.subr.bf16.mxu0 0
        %1288 = vmatpush1.bf16.msra.mxu0 0
        %1289 = vmatprep.subr.bf16.mxu0 0
        %1290 = vmatpush1.bf16.msra.mxu0 0
        %1291 = vmatprep.subr.bf16.mxu0 0
        %1292 = vmatpush1.bf16.msra.mxu0 0
        %1293 = vmatprep.subr.bf16.mxu0 0
        %1294 = vmatpush1.bf16.msra.mxu0 0
        %1295 = vmatprep.subr.bf16.mxu0 0
        %1296 = vmatpush1.bf16.msra.mxu0 0
        %1297 = vmatprep.subr.bf16.mxu0 0
        %1298 = vmatpush1.bf16.msra.mxu0 0
        %1299 = vmatprep.subr.bf16.mxu0 0
        %1300 = vmatpush1.bf16.msra.mxu0 0
        %1301 = vmatprep.subr.bf16.mxu0 0
        %1302 = vmatpush1.bf16.msra.mxu0 0
        %1303 = vmatprep.subr.bf16.mxu0 0
        %1304 = vmatpush1.bf16.msra.mxu0 0
        %1305 = vmatprep.subr.bf16.mxu0 0
        %1306 = vmatpush1.bf16.msra.mxu0 0
        %1307 = vmatprep.subr.bf16.mxu0 0
        %1308 = vmatpush1.bf16.msra.mxu0 0
        %1309 = vmatprep.subr.bf16.mxu0 0
        %1310 = vmatpush1.bf16.msra.mxu0 0
        %1311 = vmatprep.subr.bf16.mxu0 0
        %1312 = vmatpush1.bf16.msra.mxu0 0
        %1313 = vmatprep.mubr.bf16.mxu0 0
        %1314 = vmatmul.mubr.bf16.gmra.mrb[0].mxu0 %v1279
        %v1315 = vpop.f32.mrb[0].mxu0
        %v1316 = vadd.f32 %v1264, %v1315
        %v1317 = vpop.f32.mrb[0].mxu0
        %v1318 = vpop.f32.mrb[0].mxu0
        %v1319 = vpop.f32.mrb[0].mxu0
        %1320 = vdwg.mxu0
        %v1321 = vmul.f32 %v1316, 0.5
        %v1322 = vmul.f32 %v1316, 0.70710677
        %v1323 = vand.u32 2147483647, %v1322
        %v1324 = vmul.f32 %v1323, 0.3275911
        %v1325 = vadd.f32 %v1324, 1.0
        %v1326 = vrcp.pop %v1325
        %v1327 = vmul.f32 1.0, %v1326
        %v1328 = vmul.f32 %v1327, 1.0614054
        %v1329 = vadd.f32 %v1328, -1.4531521
        %v1330 = vmul.f32 %v1329, %v1327
        %v1331 = vadd.f32 %v1330, 1.4214138
        %v1332 = vmul.f32 %v1331, %v1327
        %v1333 = vadd.f32 %v1332, -0.28449672
        %v1334 = vmul.f32 %v1333, %v1327
        %v1335 = vadd.f32 %v1334, 0.2548296
        %v1336 = vmul.f32 %v1335, %v1327
        %v1337 = vsub.f32 0.0, %v1323
        %v1338 = vmul.f32 %v1337, %v1323
        %v1339 = vmul.f32 %v1338, 1.442695
        %v1340 = vpow.pop %v1339
        %v1341 = vmul.f32 %v1336, %v1340
        %v1342 = vsub.f32 1.0, %v1341
        %vm1343 = vcmp.lt.f32.partialorder %v1322, 0.0
        %v1344 = vsub.f32 0.0, %v1342
        %v1345 = vsel %vm1343, %v1344, %v1342
        %v1346 = vadd.f32 %v1345, 1.0
        %v1347 = vmul.f32 %v1321, %v1346
        %v1348 = vpack.c.bf16 %v1347, %v1347
        %v1349 = vld [vmem:[%s11] sm:$0xf]
        %v1350 = vld [vmem:[%s11 + $0x4] sm:$0xf]
        %v1351 = vld [vmem:[%s11 + $0x8] sm:$0xf]
        %v1352 = vld [vmem:[%s11 + $0xc] sm:$0xf]
        %v1353 = vld [vmem:[%s11 + $0x10] sm:$0xf]
        %v1354 = vld [vmem:[%s11 + $0x14] sm:$0xf]
        %v1355 = vld [vmem:[%s11 + $0x18] sm:$0xf]
        %v1356 = vld [vmem:[%s11 + $0x1c] sm:$0xf]
        %v1357 = vld [vmem:[%s11 + $0x20] sm:$0xf]
        %v1358 = vld [vmem:[%s11 + $0x24] sm:$0xf]
        %v1359 = vld [vmem:[%s11 + $0x28] sm:$0xf]
        %v1360 = vld [vmem:[%s11 + $0x2c] sm:$0xf]
        %v1361 = vld [vmem:[%s11 + $0x30] sm:$0xf]
        %v1362 = vld [vmem:[%s11 + $0x34] sm:$0xf]
        %v1363 = vld [vmem:[%s11 + $0x38] sm:$0xf]
        %v1364 = vld [vmem:[%s11 + $0x3c] sm:$0xf]
        %v1365 = vld [vmem:[%s12] sm:$0x1]
        %v1367 = vlaneseq
        %v1368 = vshrl.u32 %v1367, 7
        %v1369 = vsub.s32 0, %v1368
        %v1370 = vrot.slane %v1365, %v1369
        %v1388 = vunpack.c.l.b16 %v1349
        %v1389 = vunpack.c.l.b16 %v1350
        %v1390 = vunpack.c.l.b16 %v1351
        %v1391 = vunpack.c.l.b16 %v1352
        %v1392 = vunpack.c.l.b16 %v1353
        %v1393 = vunpack.c.l.b16 %v1354
        %v1394 = vunpack.c.l.b16 %v1355
        %v1395 = vunpack.c.l.b16 %v1356
        %v1396 = vunpack.c.l.b16 %v1357
        %v1397 = vunpack.c.l.b16 %v1358
        %v1398 = vunpack.c.l.b16 %v1359
        %v1399 = vunpack.c.l.b16 %v1360
        %v1400 = vunpack.c.l.b16 %v1361
        %v1401 = vunpack.c.l.b16 %v1362
        %v1402 = vunpack.c.l.b16 %v1363
        %v1403 = vunpack.c.l.b16 %v1364
        %v1404 = vpack.c.b16 %v1389, %v1388
        %v1405 = vpack.c.b16 %v1391, %v1390
        %v1406 = vpack.c.b16 %v1393, %v1392
        %v1407 = vpack.c.b16 %v1395, %v1394
        %v1408 = vpack.c.b16 %v1397, %v1396
        %v1409 = vpack.c.b16 %v1399, %v1398
        %v1410 = vpack.c.b16 %v1401, %v1400
        %v1411 = vpack.c.b16 %v1403, %v1402
        %1420 = vmatprep.subr.bf16.mxu0 0
        %1421 = vmatpush1.bf16.msra.mxu0 %v1404
        %1422 = vmatprep.subr.bf16.mxu0 0
        %1423 = vmatpush1.bf16.msra.mxu0 %v1405
        %1424 = vmatprep.subr.bf16.mxu0 0
        %1425 = vmatpush1.bf16.msra.mxu0 %v1406
        %1426 = vmatprep.subr.bf16.mxu0 0
        %1427 = vmatpush1.bf16.msra.mxu0 %v1407
        %1428 = vmatprep.subr.bf16.mxu0 0
        %1429 = vmatpush1.bf16.msra.mxu0 %v1408
        %1430 = vmatprep.subr.bf16.mxu0 0
        %1431 = vmatpush1.bf16.msra.mxu0 %v1409
        %1432 = vmatprep.subr.bf16.mxu0 0
        %1433 = vmatpush1.bf16.msra.mxu0 %v1410
        %1434 = vmatprep.subr.bf16.mxu0 0
        %1435 = vmatpush1.bf16.msra.mxu0 %v1411
        %1436 = vmatprep.subr.bf16.mxu0 0
        %1437 = vmatpush1.bf16.msra.mxu0 0
        %1438 = vmatprep.subr.bf16.mxu0 0
        %1439 = vmatpush1.bf16.msra.mxu0 0
        %1440 = vmatprep.subr.bf16.mxu0 0
        %1441 = vmatpush1.bf16.msra.mxu0 0
        %1442 = vmatprep.subr.bf16.mxu0 0
        %1443 = vmatpush1.bf16.msra.mxu0 0
        %1444 = vmatprep.subr.bf16.mxu0 0
        %1445 = vmatpush1.bf16.msra.mxu0 0
        %1446 = vmatprep.subr.bf16.mxu0 0
        %1447 = vmatpush1.bf16.msra.mxu0 0
        %1448 = vmatprep.subr.bf16.mxu0 0
        %1449 = vmatpush1.bf16.msra.mxu0 0
        %1450 = vmatprep.subr.bf16.mxu0 0
        %1451 = vmatpush1.bf16.msra.mxu0 0
        %1452 = vmatprep.mubr.bf16.mxu0 0
        %1453 = vmatmul.mubr.bf16.gmra.mrb[0].mxu0 %v1348
        %v1454 = vpop.f32.mrb[0].mxu0
        %v1455 = vadd.f32 %v1370, %v1454
        %v1456 = vpop.f32.mrb[0].mxu0
        %v1457 = vpop.f32.mrb[0].mxu0
        %v1458 = vpop.f32.mrb[0].mxu0
        %1459 = vdwg.mxu0
        %v1460 = vadd.f32 %v1224, %v1455
        %1461 = vst.msk [vmem:[%s462] sm:$0xff] %vm478, %v1460
        %s1462 = sand.u32 %s318, 1
        %s1463 = scalar_lea.sflag [#allocation3], %s1462
        %s1464 = sand.u32 %s318, 1
        %s1465 = smul.addr %s1464, 8
        %s1466 = scalar_lea.vmem [#allocation2], %s1465
        %s1467 = sand.u32 %s344, 1
        %s1468 = scalar_lea.sflag [#allocation5], %s1467
        %s1469 = sand.u32 %s344, 1
        %s1470 = smul.addr %s1469, 8
        %s1471 = scalar_lea.vmem [#allocation4], %s1470
        // Predicated region
        $region73: #{tpu_custom_call.1} parent=71 // pred_check
          %p1472 = pneg %p328
        $region74: #{tpu_custom_call.1} parent=71 // pred_check_branch
          %1474 = sbr.rel (%p1472) target = $region76
        $region75: #{tpu_custom_call.1} parent=71 // pred_region
          %s1476 = ssub.s32 128, 128
          %1477 = vsyncadd %s1463, %s1476
          %s1478 = smul.addr %s32, 128
          %s1479 = scalar_lea.hbm %s13, %s1478
          %s1481 = sshll.u32 %s1466, 4
          %s1482 = int_to_ptr.vmem [resolvable:$true] %s1481
          %1484 = dma.vmem_to_hbm [thread:$0]  %s1482, 128, %s1479, %s1463
        $region76: #{tpu_custom_call.1} parent=71 // pred_fallthru
          _
        // Predicated region
        $region77: #{tpu_custom_call.1} parent=71 // pred_check
          %p1485 = pneg %p354
        $region78: #{tpu_custom_call.1} parent=71 // pred_check_branch
          %1487 = sbr.rel (%p1485) target = $region80
        $region79: #{tpu_custom_call.1} parent=71 // pred_region
          %s1489 = ssub.s32 128, 128
          %1490 = vsyncadd %s1468, %s1489
          %s1491 = smul.addr %s32, 128
          %s1492 = scalar_lea.hbm %s14, %s1491
          %s1494 = sshll.u32 %s1471, 4
          %s1495 = int_to_ptr.vmem [resolvable:$true] %s1494
          %1497 = dma.vmem_to_hbm [thread:$0]  %s1495, 128, %s1492, %s1468
        $region80: #{tpu_custom_call.1} parent=71 // pred_fallthru
          _
      $region72: #{tpu_custom_call.1} parent=5 // pred_fallthru
        _
      %p1498 = scmp.le.s32.totalorder 2, %s27
      // Predicated region
      $region81: #{tpu_custom_call.1} parent=5 // pred_check
        %p1499 = pneg %p1498
      $region82: #{tpu_custom_call.1} parent=5 // pred_check_branch
        %1501 = sbr.rel (%p1499) target = $region84
      $region83: #{tpu_custom_call.1} parent=5 // pred_region
        %s1502 = ssub.s32 %s27, 2
        // Predicated region
        $region85: #{tpu_custom_call.1} parent=83 // pred_check
          %p1503 = pneg %p334
        $region86: #{tpu_custom_call.1} parent=83 // pred_check_branch
          %1505 = sbr.rel (%p1503) target = $region88
        $region87: #{tpu_custom_call.1} parent=83 // pred_region
          %s1506 = sand.u32 %s319, 1
          %s1507 = scalar_lea.sflag [#allocation3], %s1506
          %s1508 = sand.u32 %s319, 1
          %s1509 = smul.addr %s1508, 8
          %s1510 = scalar_lea.vmem [#allocation2], %s1509
          %1511 = dma.done %s1507, 128
        $region88: #{tpu_custom_call.1} parent=83 // pred_fallthru
          _
        // Predicated region
        $region89: #{tpu_custom_call.1} parent=83 // pred_check
          %p1512 = pneg %p360
        $region90: #{tpu_custom_call.1} parent=83 // pred_check_branch
          %1514 = sbr.rel (%p1512) target = $region92
        $region91: #{tpu_custom_call.1} parent=83 // pred_region
          %s1515 = sand.u32 %s345, 1
          %s1516 = scalar_lea.sflag [#allocation5], %s1515
          %s1517 = sand.u32 %s345, 1
          %s1518 = smul.addr %s1517, 8
          %s1519 = scalar_lea.vmem [#allocation4], %s1518
          %1520 = dma.done %s1516, 128
        $region92: #{tpu_custom_call.1} parent=83 // pred_fallthru
          _
      $region84: #{tpu_custom_call.1} parent=5 // pred_fallthru
        _
    $region6: #{tpu_custom_call.1} parent=1 // loop_footer
      %s31 = sadd.s32 1, %s27
    $region7: #{tpu_custom_call.1} parent=1 // loop_footer_branch
      %26 = sbr.rel target = $region3
    $region8: #{tpu_custom_call.1} parent=1 // loop_exit
      _
    %1521 = vsyncpa [#allocation3], 1
    %s1522 = scalar_lea.sflag [#allocation3], 1
    %1523 = vsyncpa %s1522, 1
    %1524 = vsyncpa [#allocation5], 1
    %s1525 = scalar_lea.sflag [#allocation5], 1
    %1526 = vsyncpa %s1525, 1

</llo_original>
